<compile_context>
chip_gen: v7x
topology: tpu7x:2x2x1
jax: 0.10.0
libtpu: 0.0.40
codegen_flags: <defaults>
</compile_context>

<pallas_src>
import functools

import jax
import jax.numpy as jnp
import numpy as np
from jax.experimental import pallas as pl
from jax.experimental.pallas import tpu as pltpu


def _round_up(x, m):
    return ((x + m - 1) // m) * m


def _bottleneck_kernel(x_ref, w1_ref, b1_ref, w2_ref, b2_ref, wf_ref, bf_ref,
                       out_ref, *scratch,
                       H, W, Wp, P, Cin, Cout, stride, has_downsample):
    pad_ref = scratch[0]                       # ((H+4)*Wp, P) bf16 padded conv1 out
    s = stride
    Ho = H // s
    Wo = W // s
    Wps = Wp // s
    HWp = H * Wp
    f32 = jnp.float32
    bf16 = jnp.bfloat16

    # ---------------- conv1 (1x1) + folded bn1 + relu (one GEMM) --------------
    xv = x_ref[...]                            # (H, Wp, Cin) bf16, cols >= W are 0
    x2d = xv.reshape(HWp, Cin)
    h1 = jnp.dot(x2d, w1_ref[...], preferred_element_type=f32)     # (HWp, P)
    h1 = jnp.maximum(h1 + b1_ref[...], 0.0)
    # Zero the padded columns (they must act as the 3x3 conv's zero padding).
    col = jax.lax.broadcasted_iota(jnp.int32, (H, Wp, 1), 1)
    h1 = jnp.where(col < W, h1.reshape(H, Wp, P), 0.0)

    # Padded buffer layout (flat, row period Wp):
    #   rows [0, 2*Wp) and [(H+2)*Wp, (H+4)*Wp) : zeros (vertical padding)
    #   rows [2*Wp, (H+2)*Wp)                   : conv1 output (cols >= W zero)
    pad_ref[0:2 * Wp, :] = jnp.zeros((2 * Wp, P), bf16)
    pad_ref[(H + 2) * Wp:(H + 4) * Wp, :] = jnp.zeros((2 * Wp, P), bf16)
    pad_ref[2 * Wp:(H + 2) * Wp, :] = h1.reshape(HWp, P).astype(bf16)

    # ------------- conv2 (3x3, pad 1) as a single im2col GEMM -----------------
    # Output pixel (h, w) lives at flat row q = h*Wp + w; tap (ky, kx) reads the
    # buffer at flat offset (ky+1)*Wp + (kx-1) from q (zero columns / rows of the
    # buffer supply the conv padding).
    taps = []
    for ky in range(3):
        for kx in range(3):
            d = (ky + 1) * Wp + (kx - 1)
            taps.append(pad_ref[d:d + HWp, :])
    im2col = jnp.concatenate(taps, axis=1)                         # (HWp, 9P) bf16
    y2 = jnp.dot(im2col, w2_ref[...], preferred_element_type=f32)  # (HWp, P)
    y2 = jnp.maximum(y2 + b2_ref[...], 0.0)

    # ------------- avgpool (VPU) + fused conv3/downsample GEMM ---------------
    if s > 1:
        rp_ref = scratch[1]                                        # (Ho*Wp, P+Cin) f32
        xi = x2d.astype(f32)                                       # identity branch input
        cat = jnp.concatenate([y2, xi], axis=1)                    # (HWp, P+Cin)
        Cc = P + Cin
        # row pool: sum s adjacent image rows (leading-dim reshape + sum)
        rows = cat.reshape(Ho, s, Wp, Cc).sum(axis=1)              # (Ho, Wp, Cc)
        rp_ref[...] = rows.reshape(Ho * Wp, Cc)
        # column pool: strided reads (1/s^2 is folded into the weights)
        act = rp_ref[pl.ds(0, Ho * Wps, stride=s), :]
        for dx in range(1, s):
            act = act + rp_ref[pl.ds(dx, Ho * Wps, stride=s), :]   # (Ho*Wps, Cc)
        wtile = Wps
    elif has_downsample:
        act = jnp.concatenate([y2, x2d.astype(f32)], axis=1)       # (HWp, P+Cin)
        wtile = Wp
    else:
        act = y2                                                   # (HWp, P)
        wtile = Wp

    # conv3+bn3 (and downsample conv+bn) fused into one GEMM + bias.
    res = jnp.dot(act.astype(bf16), wf_ref[...], preferred_element_type=f32)
    res = res + bf_ref[...]
    if s == 1 and not has_downsample:
        res = res + x2d.astype(f32)                                # identity (Cin == Cout)
    res = jnp.maximum(res, 0.0)

    out_ref[...] = res.reshape(Ho, wtile, Cout)[:, :Wo, :]


def _fold_bn(gamma, beta, mean, var, eps=1e-5):
    s = gamma / jnp.sqrt(var + eps)
    b = beta - mean * s
    return s.reshape(1, -1).astype(jnp.float32), b.reshape(1, -1).astype(jnp.float32)


def bottleneck_forward(x_nchw, params, *, stride):
    """Runs the Bottleneck forward pass. Input NCHW, returns NHWC float32."""
    N, Cin, H, W = x_nchw.shape
    P = params['conv1_w'].shape[0]            # planes
    Cout = params['conv3_w'].shape[0]         # planes * 4
    assert H % stride == 0 and W % stride == 0
    Ho, Wo = H // stride, W // stride
    has_downsample = (stride > 1) or (Cin != Cout)

    # Working width: multiple of 8*stride and >= W+1 (keeps reshapes layout
    # preserving; the extra zero columns act as horizontal conv padding).
    Wp = _round_up(W + 1, 8 * stride)

    # ---- glue: layout + parameter folding (plain JAX, outside the kernel) ----
    x_nhwc = jnp.transpose(x_nchw, (0, 2, 3, 1)).astype(jnp.float32)
    x_pad = jnp.pad(x_nhwc, ((0, 0), (0, 0), (0, Wp - W), (0, 0))).astype(jnp.bfloat16)

    inv_area = 1.0 / float(stride * stride)
    s1, b1 = _fold_bn(*params['bn1'])
    s2, b2 = _fold_bn(*params['bn2'])
    s3, b3 = _fold_bn(*params['bn3'])

    w1s = (params['conv1_w'][:, :, 0, 0].T.astype(jnp.float32) * s1).astype(jnp.bfloat16)
    w2 = jnp.transpose(params['conv2_w'], (2, 3, 1, 0)).astype(jnp.float32).reshape(9 * P, P)
    w2s = (w2 * s2).astype(jnp.bfloat16)
    w3s = params['conv3_w'][:, :, 0, 0].T.astype(jnp.float32) * (s3 * inv_area)
    if has_downsample:
        sd, bd = _fold_bn(*params['bnd'])
        wds = params['down_w'][:, :, 0, 0].T.astype(jnp.float32) * (sd * inv_area)
        wf = jnp.concatenate([w3s, wds], axis=0).astype(jnp.bfloat16)   # (P+Cin, Cout)
        bf = (b3 + bd).astype(jnp.float32)
    else:
        wf = w3s.astype(jnp.bfloat16)                                   # (P, Cout)
        bf = b3.astype(jnp.float32)
    Cf = wf.shape[0]

    kernel = functools.partial(
        _bottleneck_kernel,
        H=H, W=W, Wp=Wp, P=P, Cin=Cin, Cout=Cout,
        stride=stride, has_downsample=has_downsample)

    in_specs = [
        pl.BlockSpec((None, H, Wp, Cin), lambda n: (n, 0, 0, 0)),   # x (one image)
        pl.BlockSpec((Cin, P), lambda n: (0, 0)),                   # w1 * s1
        pl.BlockSpec((1, P), lambda n: (0, 0)),                     # b1
        pl.BlockSpec((9 * P, P), lambda n: (0, 0)),                 # w2 * s2 (im2col)
        pl.BlockSpec((1, P), lambda n: (0, 0)),                     # b2
        pl.BlockSpec((Cf, Cout), lambda n: (0, 0)),                 # [w3*s3 ; wd*sd]/s^2
        pl.BlockSpec((1, Cout), lambda n: (0, 0)),                  # b3 (+ bd)
    ]
    scratch_shapes = [pltpu.VMEM(((H + 4) * Wp, P), jnp.bfloat16)]
    if stride > 1:
        scratch_shapes.append(pltpu.VMEM((Ho * Wp, P + Cin), jnp.float32))

    out = pl.pallas_call(
        kernel,
        out_shape=jax.ShapeDtypeStruct((N, Ho, Wo, Cout), jnp.float32),
        grid=(N,),
        in_specs=in_specs,
        out_specs=pl.BlockSpec((None, Ho, Wo, Cout), lambda n: (n, 0, 0, 0)),
        scratch_shapes=scratch_shapes,
        compiler_params=pltpu.CompilerParams(
            dimension_semantics=("parallel",)),
    )(x_pad, w1s, b1, w2s, b2, wf, bf)
    return out


# --------------------------- pure-JAX reference -------------------------------
def _ref_forward_nhwc(x, p, stride, eps=1e-5):
    hp = jax.lax.Precision.HIGHEST

    def bn(y, stats):
        g, b, m, v = stats
        return (y - m) / jnp.sqrt(v + eps) * g + b

    def conv1x1(y, w):
        return jnp.einsum('nhwc,oc->nhwo', y, w[:, :, 0, 0], precision=hp)

    def conv3x3(y, w):
        return jax.lax.conv_general_dilated(
            y, jnp.transpose(w, (2, 3, 1, 0)),
            window_strides=(1, 1), padding=((1, 1), (1, 1)),
            dimension_numbers=('NHWC', 'HWIO', 'NHWC'), precision=hp)

    def avgpool(y, s):
        if s == 1:
            return y
        n, h, w, c = y.shape
        return y.reshape(n, h // s, s, w // s, s, c).mean(axis=(2, 4))

    out = jax.nn.relu(bn(conv1x1(x, p['conv1_w']), p['bn1']))
    out = jax.nn.relu(bn(conv3x3(out, p['conv2_w']), p['bn2']))
    out = avgpool(out, stride)
    out = bn(conv1x1(out, p['conv3_w']), p['bn3'])
    cin, cout = x.shape[-1], p['conv3_w'].shape[0]
    if stride > 1 or cin != cout:
        identity = bn(conv1x1(avgpool(x, stride), p['down_w']), p['bnd'])
    else:
        identity = x
    return jax.nn.relu(out + identity)


def _run_case(key, *, N, inplanes, planes, H, W, stride):
    Cout = planes * 4
    keys = jax.random.split(key, 10)

    def normal(k, shape, scale=0.1):
        return jax.random.normal(k, shape, jnp.float32) * scale

    def bn_params(k, c):
        k1, k2, k3, k4 = jax.random.split(k, 4)
        gamma = jax.random.uniform(k1, (c,), jnp.float32, 0.5, 1.5)
        beta = normal(k2, (c,))
        mean = normal(k3, (c,))
        var = jax.random.uniform(k4, (c,), jnp.float32, 0.5, 1.5)
        return gamma, beta, mean, var

    params = {
        'conv1_w': normal(keys[0], (planes, inplanes, 1, 1)),
        'bn1': bn_params(keys[1], planes),
        'conv2_w': normal(keys[2], (planes, planes, 3, 3)),
        'bn2': bn_params(keys[3], planes),
        'conv3_w': normal(keys[4], (Cout, planes, 1, 1)),
        'bn3': bn_params(keys[5], Cout),
    }
    if stride > 1 or inplanes != Cout:
        params['down_w'] = normal(keys[6], (Cout, inplanes, 1, 1))
        params['bnd'] = bn_params(keys[7], Cout)

    x_nchw = jax.random.normal(keys[8], (N, inplanes, H, W), jnp.float32)

    out = bottleneck_forward(x_nchw, params, stride=stride)
    out = jax.block_until_ready(out)

    x_nhwc = jnp.transpose(x_nchw, (0, 2, 3, 1))
    ref = _ref_forward_nhwc(x_nhwc, params, stride)
    # bf16 MXU inputs (f32 accumulate / epilogue) -> slightly looser tolerance.
    np.testing.assert_allclose(np.asarray(out), np.asarray(ref), rtol=2e-2, atol=2e-2)


if __name__ == "__main__":
    key = jax.random.PRNGKey(0)
    k1, k2 = jax.random.split(key)

    # Case 1: stride-2 block (avgpool + downsample branch), Cin != Cout.
    _run_case(k1, N=2, inplanes=16, planes=8, H=16, W=16, stride=2)
    # Case 2: stride-1 block with pure identity residual (Cin == Cout).
    _run_case(k2, N=2, inplanes=32, planes=8, H=16, W=16, stride=1)

    print("KERNEL_OK")
</pallas_src>

<mosaic_0001>
module attributes {stable_mosaic.version = 11 : i64} {
  func.func @_bottleneck_kernel(%arg0: i32, %arg1: memref<1x16x32x16xbf16, #tpu.memory_space<vmem>>, %arg2: memref<16x8xbf16, #tpu.memory_space<vmem>>, %arg3: memref<1x8xf32, #tpu.memory_space<vmem>>, %arg4: memref<72x8xbf16, #tpu.memory_space<vmem>>, %arg5: memref<1x8xf32, #tpu.memory_space<vmem>>, %arg6: memref<24x32xbf16, #tpu.memory_space<vmem>>, %arg7: memref<1x32xf32, #tpu.memory_space<vmem>>, %arg8: memref<1x8x8x32xf32, #tpu.memory_space<vmem>>, %arg9: memref<640x8xbf16, #tpu.memory_space<vmem>>, %arg10: memref<256x24xf32, #tpu.memory_space<vmem>>) attributes {dimension_semantics = [#tpu.dimension_semantics<parallel>], iteration_bounds = array<i64: 2>, scalar_prefetch = 0 : i64, scratch_operands = 2 : i64, tpu.core_type = #tpu.core_type<tc>, window_params = [{transform_indices = @transform_0, window_bounds = array<i64: 1, 16, 32, 16>}, {pipeline_mode = #tpu.pipeline_mode<synchronous>, transform_indices = @transform_1, window_bounds = array<i64: 16, 8>}, {pipeline_mode = #tpu.pipeline_mode<synchronous>, transform_indices = @transform_2, window_bounds = array<i64: 1, 8>}, {pipeline_mode = #tpu.pipeline_mode<synchronous>, transform_indices = @transform_3, window_bounds = array<i64: 72, 8>}, {pipeline_mode = #tpu.pipeline_mode<synchronous>, transform_indices = @transform_4, window_bounds = array<i64: 1, 8>}, {pipeline_mode = #tpu.pipeline_mode<synchronous>, transform_indices = @transform_5, window_bounds = array<i64: 24, 32>}, {pipeline_mode = #tpu.pipeline_mode<synchronous>, transform_indices = @transform_6, window_bounds = array<i64: 1, 32>}, {transform_indices = @transform_7, window_bounds = array<i64: 1, 8, 8, 32>}]} {
    %c0 = arith.constant 0 : index
    %c0_0 = arith.constant 0 : index
    %c0_1 = arith.constant 0 : index
    %c0_2 = arith.constant 0 : index
    %0 = vector.load %arg1[%c0, %c0_0, %c0_1, %c0_2] : memref<1x16x32x16xbf16, #tpu.memory_space<vmem>>, vector<1x16x32x16xbf16>
    %1 = vector.shape_cast %0 : vector<1x16x32x16xbf16> to vector<16x32x16xbf16>
    %2 = vector.shape_cast %1 : vector<16x32x16xbf16> to vector<512x16xbf16>
    %c0_3 = arith.constant 0 : index
    %c0_4 = arith.constant 0 : index
    %3 = vector.load %arg2[%c0_3, %c0_4] : memref<16x8xbf16, #tpu.memory_space<vmem>>, vector<16x8xbf16>
    %cst = arith.constant dense<0.000000e+00> : vector<512x8xf32>
    %4 = tpu.matmul %2, %3, %cst {dimension_numbers = #tpu.dot_dimension_numbers<[1], [0], [0], [1], [0, 0, 1, 1], [], []>} : vector<512x16xbf16>, vector<16x8xbf16>, vector<512x8xf32> -> vector<512x8xf32>
    %c0_5 = arith.constant 0 : index
    %c0_6 = arith.constant 0 : index
    %5 = vector.load %arg3[%c0_5, %c0_6] : memref<1x8xf32, #tpu.memory_space<vmem>>, vector<1x8xf32>
    %6 = vector.broadcast %5 : vector<1x8xf32> to vector<512x8xf32>
    %7 = arith.addf %4, %6 : vector<512x8xf32>
    %cst_7 = arith.constant 0.000000e+00 : f32
    %8 = vector.broadcast %cst_7 : f32 to vector<512x8xf32>
    %9 = arith.maximumf %7, %8 : vector<512x8xf32>
    %10 = tpu.iota {dimensions = array<i32: 1>} : vector<16x32x1xi32>
    %c16_i32 = arith.constant 16 : i32
    %11 = vector.broadcast %c16_i32 : i32 to vector<16x32x1xi32>
    %12 = arith.cmpi slt, %10, %11 : vector<16x32x1xi32>
    %13 = vector.shape_cast %9 : vector<512x8xf32> to vector<16x32x8xf32>
    %cst_8 = arith.constant 0.000000e+00 : f32
    %14 = vector.shape_cast %12 : vector<16x32x1xi1> to vector<16x32x1xi1>
    %15 = vector.broadcast %14 : vector<16x32x1xi1> to vector<16x32x8xi1>
    %16 = vector.broadcast %cst_8 : f32 to vector<16x32x8xf32>
    %17 = arith.select %15, %13, %16 : vector<16x32x8xi1>, vector<16x32x8xf32>
    %cst_9 = arith.constant 0.000000e+00 : bf16
    %18 = vector.broadcast %cst_9 : bf16 to vector<64x8xbf16>
    %c0_10 = arith.constant 0 : index
    %c0_11 = arith.constant 0 : index
    %19 = vector.load %arg9[%c0_10, %c0_11] : memref<640x8xbf16, #tpu.memory_space<vmem>>, vector<64x8xbf16>
    tpu.vector_store %arg9[%c0_10, %c0_11], %18 {strides = array<i32>} : memref<640x8xbf16, #tpu.memory_space<vmem>>, vector<64x8xbf16>,
    %cst_12 = arith.constant 0.000000e+00 : bf16
    %20 = vector.broadcast %cst_12 : bf16 to vector<64x8xbf16>
    %c576 = arith.constant 576 : index
    %c0_13 = arith.constant 0 : index
    %21 = vector.load %arg9[%c576, %c0_13] : memref<640x8xbf16, #tpu.memory_space<vmem>>, vector<64x8xbf16>
    tpu.vector_store %arg9[%c576, %c0_13], %20 {strides = array<i32>} : memref<640x8xbf16, #tpu.memory_space<vmem>>, vector<64x8xbf16>,
    %22 = vector.shape_cast %17 : vector<16x32x8xf32> to vector<512x8xf32>
    %23 = arith.truncf %22 : vector<512x8xf32> to vector<512x8xbf16>
    %c64 = arith.constant 64 : index
    %c0_14 = arith.constant 0 : index
    %24 = vector.load %arg9[%c64, %c0_14] : memref<640x8xbf16, #tpu.memory_space<vmem>>, vector<512x8xbf16>
    tpu.vector_store %arg9[%c64, %c0_14], %23 {strides = array<i32>} : memref<640x8xbf16, #tpu.memory_space<vmem>>, vector<512x8xbf16>,
    %c31 = arith.constant 31 : index
    %c0_15 = arith.constant 0 : index
    %25 = vector.load %arg9[%c31, %c0_15] : memref<640x8xbf16, #tpu.memory_space<vmem>>, vector<512x8xbf16>
    %c32 = arith.constant 32 : index
    %c0_16 = arith.constant 0 : index
    %26 = vector.load %arg9[%c32, %c0_16] : memref<640x8xbf16, #tpu.memory_space<vmem>>, vector<512x8xbf16>
    %c33 = arith.constant 33 : index
    %c0_17 = arith.constant 0 : index
    %27 = vector.load %arg9[%c33, %c0_17] : memref<640x8xbf16, #tpu.memory_space<vmem>>, vector<512x8xbf16>
    %c63 = arith.constant 63 : index
    %c0_18 = arith.constant 0 : index
    %28 = vector.load %arg9[%c63, %c0_18] : memref<640x8xbf16, #tpu.memory_space<vmem>>, vector<512x8xbf16>
    %c64_19 = arith.constant 64 : index
    %c0_20 = arith.constant 0 : index
    %29 = vector.load %arg9[%c64_19, %c0_20] : memref<640x8xbf16, #tpu.memory_space<vmem>>, vector<512x8xbf16>
    %c65 = arith.constant 65 : index
    %c0_21 = arith.constant 0 : index
    %30 = vector.load %arg9[%c65, %c0_21] : memref<640x8xbf16, #tpu.memory_space<vmem>>, vector<512x8xbf16>
    %c95 = arith.constant 95 : index
    %c0_22 = arith.constant 0 : index
    %31 = vector.load %arg9[%c95, %c0_22] : memref<640x8xbf16, #tpu.memory_space<vmem>>, vector<512x8xbf16>
    %c96 = arith.constant 96 : index
    %c0_23 = arith.constant 0 : index
    %32 = vector.load %arg9[%c96, %c0_23] : memref<640x8xbf16, #tpu.memory_space<vmem>>, vector<512x8xbf16>
    %c97 = arith.constant 97 : index
    %c0_24 = arith.constant 0 : index
    %33 = vector.load %arg9[%c97, %c0_24] : memref<640x8xbf16, #tpu.memory_space<vmem>>, vector<512x8xbf16>
    %34 = tpu.concatenate %25, %26, %27, %28, %29, %30, %31, %32, %33 in 1 : vector<512x8xbf16>, vector<512x8xbf16>, vector<512x8xbf16>, vector<512x8xbf16>, vector<512x8xbf16>, vector<512x8xbf16>, vector<512x8xbf16>, vector<512x8xbf16>, vector<512x8xbf16> -> vector<512x72xbf16>
    %c0_25 = arith.constant 0 : index
    %c0_26 = arith.constant 0 : index
    %35 = vector.load %arg4[%c0_25, %c0_26] : memref<72x8xbf16, #tpu.memory_space<vmem>>, vector<72x8xbf16>
    %cst_27 = arith.constant dense<0.000000e+00> : vector<512x8xf32>
    %36 = tpu.matmul %34, %35, %cst_27 {dimension_numbers = #tpu.dot_dimension_numbers<[1], [0], [0], [1], [0, 0, 1, 1], [], []>} : vector<512x72xbf16>, vector<72x8xbf16>, vector<512x8xf32> -> vector<512x8xf32>
    %c0_28 = arith.constant 0 : index
    %c0_29 = arith.constant 0 : index
    %37 = vector.load %arg5[%c0_28, %c0_29] : memref<1x8xf32, #tpu.memory_space<vmem>>, vector<1x8xf32>
    %38 = vector.broadcast %37 : vector<1x8xf32> to vector<512x8xf32>
    %39 = arith.addf %36, %38 : vector<512x8xf32>
    %cst_30 = arith.constant 0.000000e+00 : f32
    %40 = vector.broadcast %cst_30 : f32 to vector<512x8xf32>
    %41 = arith.maximumf %39, %40 : vector<512x8xf32>
    %42 = arith.extf %2 : vector<512x16xbf16> to vector<512x16xf32>
    %43 = tpu.concatenate %41, %42 in 1 : vector<512x8xf32>, vector<512x16xf32> -> vector<512x24xf32>
    %44 = vector.shape_cast %43 : vector<512x24xf32> to vector<8x2x32x24xf32>
    %cst_31 = arith.constant dense<0.000000e+00> : vector<8x32x24xf32>
    %45 = vector.multi_reduction <add>, %44, %cst_31 [1] : vector<8x2x32x24xf32> to vector<8x32x24xf32>
    %46 = vector.shape_cast %45 : vector<8x32x24xf32> to vector<256x24xf32>
    %c0_32 = arith.constant 0 : index
    %c0_33 = arith.constant 0 : index
    %47 = vector.load %arg10[%c0_32, %c0_33] : memref<256x24xf32, #tpu.memory_space<vmem>>, vector<256x24xf32>
    tpu.vector_store %arg10[%c0_32, %c0_33], %46 {strides = array<i32>} : memref<256x24xf32, #tpu.memory_space<vmem>>, vector<256x24xf32>,
    %c0_34 = arith.constant 0 : index
    %c0_35 = arith.constant 0 : index
    %48 = tpu.strided_load %arg10[%c0_34, %c0_35] {strides = array<i32: 2, 1>} : memref<256x24xf32, #tpu.memory_space<vmem>>, vector<128x24xf32>
    %c1 = arith.constant 1 : index
    %c0_36 = arith.constant 0 : index
    %49 = tpu.strided_load %arg10[%c1, %c0_36] {strides = array<i32: 2, 1>} : memref<256x24xf32, #tpu.memory_space<vmem>>, vector<128x24xf32>
    %50 = arith.addf %48, %49 : vector<128x24xf32>
    %51 = arith.truncf %50 : vector<128x24xf32> to vector<128x24xbf16>
    %c0_37 = arith.constant 0 : index
    %c0_38 = arith.constant 0 : index
    %52 = vector.load %arg6[%c0_37, %c0_38] : memref<24x32xbf16, #tpu.memory_space<vmem>>, vector<24x32xbf16>
    %cst_39 = arith.constant dense<0.000000e+00> : vector<128x32xf32>
    %53 = tpu.matmul %51, %52, %cst_39 {dimension_numbers = #tpu.dot_dimension_numbers<[1], [0], [0], [1], [0, 0, 1, 1], [], []>} : vector<128x24xbf16>, vector<24x32xbf16>, vector<128x32xf32> -> vector<128x32xf32>
    %c0_40 = arith.constant 0 : index
    %c0_41 = arith.constant 0 : index
    %54 = vector.load %arg7[%c0_40, %c0_41] : memref<1x32xf32, #tpu.memory_space<vmem>>, vector<1x32xf32>
    %55 = vector.broadcast %54 : vector<1x32xf32> to vector<128x32xf32>
    %56 = arith.addf %53, %55 : vector<128x32xf32>
    %cst_42 = arith.constant 0.000000e+00 : f32
    %57 = vector.broadcast %cst_42 : f32 to vector<128x32xf32>
    %58 = arith.maximumf %56, %57 : vector<128x32xf32>
    %59 = vector.shape_cast %58 : vector<128x32xf32> to vector<8x16x32xf32>
    %60 = vector.extract_strided_slice %59 {offsets = [0, 0, 0], sizes = [8, 8, 32], strides = [1, 1, 1]} : vector<8x16x32xf32> to vector<8x8x32xf32>
    %c0_43 = arith.constant 0 : index
    %c0_44 = arith.constant 0 : index
    %c0_45 = arith.constant 0 : index
    %c0_46 = arith.constant 0 : index
    %61 = vector.load %arg8[%c0_43, %c0_44, %c0_45, %c0_46] : memref<1x8x8x32xf32, #tpu.memory_space<vmem>>, vector<1x8x8x32xf32>
    %62 = vector.shape_cast %61 : vector<1x8x8x32xf32> to vector<8x8x32xf32>
    %63 = vector.shape_cast %60 : vector<8x8x32xf32> to vector<1x8x8x32xf32>
    tpu.vector_store %arg8[%c0_43, %c0_44, %c0_45, %c0_46], %63 {strides = array<i32>} : memref<1x8x8x32xf32, #tpu.memory_space<vmem>>, vector<1x8x8x32xf32>,
    return
  }
  func.func @transform_0(%arg0: i32) -> (i32, i32, i32, i32) {
    %c0_i32 = arith.constant 0 : i32
    %c0_i32_0 = arith.constant 0 : i32
    %c0_i32_1 = arith.constant 0 : i32
    %c0_i32_2 = arith.constant 0 : i32
    return %arg0, %c0_i32, %c0_i32_0, %c0_i32_1 : i32, i32, i32, i32
  }
  func.func @transform_1(%arg0: i32) -> (i32, i32) {
    %c0_i32 = arith.constant 0 : i32
    %c0_i32_0 = arith.constant 0 : i32
    %c0_i32_1 = arith.constant 0 : i32
    return %c0_i32, %c0_i32_0 : i32, i32
  }
  func.func @transform_2(%arg0: i32) -> (i32, i32) {
    %c0_i32 = arith.constant 0 : i32
    %c0_i32_0 = arith.constant 0 : i32
    %c0_i32_1 = arith.constant 0 : i32
    return %c0_i32, %c0_i32_0 : i32, i32
  }
  func.func @transform_3(%arg0: i32) -> (i32, i32) {
    %c0_i32 = arith.constant 0 : i32
    %c0_i32_0 = arith.constant 0 : i32
    %c0_i32_1 = arith.constant 0 : i32
    return %c0_i32, %c0_i32_0 : i32, i32
  }
  func.func @transform_4(%arg0: i32) -> (i32, i32) {
    %c0_i32 = arith.constant 0 : i32
    %c0_i32_0 = arith.constant 0 : i32
    %c0_i32_1 = arith.constant 0 : i32
    return %c0_i32, %c0_i32_0 : i32, i32
  }
  func.func @transform_5(%arg0: i32) -> (i32, i32) {
    %c0_i32 = arith.constant 0 : i32
    %c0_i32_0 = arith.constant 0 : i32
    %c0_i32_1 = arith.constant 0 : i32
    return %c0_i32, %c0_i32_0 : i32, i32
  }
  func.func @transform_6(%arg0: i32) -> (i32, i32) {
    %c0_i32 = arith.constant 0 : i32
    %c0_i32_0 = arith.constant 0 : i32
    %c0_i32_1 = arith.constant 0 : i32
    return %c0_i32, %c0_i32_0 : i32, i32
  }
  func.func @transform_7(%arg0: i32) -> (i32, i32, i32, i32) {
    %c0_i32 = arith.constant 0 : i32
    %c0_i32_0 = arith.constant 0 : i32
    %c0_i32_1 = arith.constant 0 : i32
    %c0_i32_2 = arith.constant 0 : i32
    return %arg0, %c0_i32, %c0_i32_0, %c0_i32_1 : i32, i32, i32, i32
  }
}

</mosaic_0001>

<llo_original>
// kernel: tpu_custom_call.1
$region0: #{tpu_custom_call.1}
  #allocation0 [shape = 'u32[]', space=smem, size = 0x4, offset = 0x4, fixed_abs, tag = 'smem constant byte address 0x4 - core index']
  #allocation1 [shape = 'u32[144,128]{1,0:T(1,128)}', space=vmem, size = 0x12000, scoped, tag = 'internal scratch']
  #allocation2 [shape = 'bf16[640,8]{1,0:T(16,128)(2,1)}', space=vmem, size = 0x28000, scoped, tag = 'scratch operand']
  #allocation3 [shape = 'f32[256,24]{1,0:T(8,128)}', space=vmem, size = 0x20000, scoped, tag = 'scratch operand']
  %s0 = inlined_call_operand.vmem [shape: bf16[2,16,32,16], index: 0, kind: input, shape index: {}]
  %s1 = inlined_call_operand.vmem [shape: bf16[16,8], index: 1, kind: input, shape index: {}]
  %s2 = inlined_call_operand.vmem [shape: f32[1,8], index: 2, kind: input, shape index: {}]
  %s3 = inlined_call_operand.vmem [shape: bf16[72,8], index: 3, kind: input, shape index: {}]
  %s4 = inlined_call_operand.vmem [shape: f32[1,8], index: 4, kind: input, shape index: {}]
  %s5 = inlined_call_operand.vmem [shape: bf16[24,32], index: 5, kind: input, shape index: {}]
  %s6 = inlined_call_operand.vmem [shape: f32[1,32], index: 6, kind: input, shape index: {}]
  %s7 = inlined_call_operand.hbm [shape: f32[2,8,8,32], index: 7, kind: output, shape index: {}]
  %s8 = sld [smem:[#allocation0]]
  $region61: #{tpu_custom_call.1} parent=0
    _
  %s10 = ssub.s32 1, %s8
  %s11 = scalar_select 0, %s10, %s8
  $region1: #{tpu_custom_call.1} parent=0
    #allocation4 [shape = 'u8[65536]{0}', space=vmem, size = 0x10000, scoped, tag = 'output window, operand 0']
    #allocation5 [shape = 's32[2]{0}', space=sflag, size = 0x8, scoped, tag = 'scoped memory for tpu_custom_call.1']
    %12 = vsyncpa [#allocation5], 0
    %s13 = scalar_lea.sflag [#allocation5], 1
    %14 = vsyncpa %s13, 0
    loop: start=0, step=1, limit=4
    $region2: #{tpu_custom_call.1} parent=1 // loop_pre_header
      _
    $region3: #{tpu_custom_call.1} parent=1 // loop_header
      %s16 = sphi 0, %s20
      %p17 = scmp.ge.s32.totalorder %s16, 4
      %s26 = sphi 0, %s28
      %s29 = sphi 0, %s26
      %s30 = sphi 0, %s29
      %s46 = sphi 0, %s30
      %s50 = sphi 0, %s50
      %s52 = sphi 0, %s50
      %s53 = sphi 0, %s52
      %s67 = sphi 0, %s53
      %s71 = sphi 0, %s71
      %s73 = sphi 0, %s71
      %s74 = sphi 0, %s73
      %s88 = sphi 0, %s74
      %s92 = sphi 0, %s92
      %s94 = sphi 0, %s92
      %s95 = sphi 0, %s94
      %s109 = sphi 0, %s95
      %s113 = sphi 0, %s113
      %s115 = sphi 0, %s113
      %s116 = sphi 0, %s115
      %s130 = sphi 0, %s116
      %s134 = sphi 0, %s134
      %s136 = sphi 0, %s134
      %s137 = sphi 0, %s136
      %s151 = sphi 0, %s137
      %s155 = sphi 0, %s155
      %s157 = sphi 0, %s155
      %s158 = sphi 0, %s157
      %s172 = sphi 0, %s158
      %s178 = sphi 0, %s180
      %s181 = sphi 0, %s178
      %s182 = sphi 0, %s181
      %s198 = sphi 0, %s182
    $region4: #{tpu_custom_call.1} parent=1 // loop_header_branch
      %19 = sbr.rel (%p17) target = $region8
    $region5: #{tpu_custom_call.1} parent=1 // loop_body
      %s21 = ssub.s32 %s16, 1
      %s22 = ssub.s32 %s16, 2
      %s23 = sadd.s32 %s16, 1
      %s24 = ssub.s32 %s16, %s23
      %p25 = scmp.eq.s32.totalorder %s24, 0
      %s27 = sadd.s32 %s26, 1
      %s28 = scalar_select %p25, %s26, %s27
      %p31 = pneg %p25
      %p32 = scmp.eq.s32.totalorder %s16, 1
      %p33 = por %p31, %p32
      %p34 = scmp.ne.s32.totalorder %s26, %s29
      %p35 = scmp.eq.s32.totalorder %s16, 0
      %p36 = por %p34, %p35
      %p37 = scmp.ne.s32.totalorder %s26, %s29
      %p38 = scmp.eq.s32.totalorder %s21, 1
      %p39 = por %p37, %p38
      %p40 = scmp.ne.s32.totalorder %s29, %s30
      %p41 = scmp.eq.s32.totalorder %s21, 0
      %p42 = por %p40, %p41
      %p43 = scmp.ne.s32.totalorder %s29, %s30
      %p44 = scmp.eq.s32.totalorder %s22, 1
      %p45 = por %p43, %p44
      %p47 = scmp.ne.s32.totalorder %s30, %s46
      %p48 = scmp.eq.s32.totalorder %s22, 0
      %p49 = por %p47, %p48
      %s51 = sadd.s32 %s50, 1
      %p54 = scmp.eq.s32.totalorder %s16, 1
      %p55 = scmp.ne.s32.totalorder %s50, %s52
      %p56 = scmp.eq.s32.totalorder %s16, 0
      %p57 = por %p55, %p56
      %p58 = scmp.ne.s32.totalorder %s50, %s52
      %p59 = scmp.eq.s32.totalorder %s21, 1
      %p60 = por %p58, %p59
      %p61 = scmp.ne.s32.totalorder %s52, %s53
      %p62 = scmp.eq.s32.totalorder %s21, 0
      %p63 = por %p61, %p62
      %p64 = scmp.ne.s32.totalorder %s52, %s53
      %p65 = scmp.eq.s32.totalorder %s22, 1
      %p66 = por %p64, %p65
      %p68 = scmp.ne.s32.totalorder %s53, %s67
      %p69 = scmp.eq.s32.totalorder %s22, 0
      %p70 = por %p68, %p69
      %s72 = sadd.s32 %s71, 1
      %p75 = scmp.eq.s32.totalorder %s16, 1
      %p76 = scmp.ne.s32.totalorder %s71, %s73
      %p77 = scmp.eq.s32.totalorder %s16, 0
      %p78 = por %p76, %p77
      %p79 = scmp.ne.s32.totalorder %s71, %s73
      %p80 = scmp.eq.s32.totalorder %s21, 1
      %p81 = por %p79, %p80
      %p82 = scmp.ne.s32.totalorder %s73, %s74
      %p83 = scmp.eq.s32.totalorder %s21, 0
      %p84 = por %p82, %p83
      %p85 = scmp.ne.s32.totalorder %s73, %s74
      %p86 = scmp.eq.s32.totalorder %s22, 1
      %p87 = por %p85, %p86
      %p89 = scmp.ne.s32.totalorder %s74, %s88
      %p90 = scmp.eq.s32.totalorder %s22, 0
      %p91 = por %p89, %p90
      %s93 = sadd.s32 %s92, 1
      %p96 = scmp.eq.s32.totalorder %s16, 1
      %p97 = scmp.ne.s32.totalorder %s92, %s94
      %p98 = scmp.eq.s32.totalorder %s16, 0
      %p99 = por %p97, %p98
      %p100 = scmp.ne.s32.totalorder %s92, %s94
      %p101 = scmp.eq.s32.totalorder %s21, 1
      %p102 = por %p100, %p101
      %p103 = scmp.ne.s32.totalorder %s94, %s95
      %p104 = scmp.eq.s32.totalorder %s21, 0
      %p105 = por %p103, %p104
      %p106 = scmp.ne.s32.totalorder %s94, %s95
      %p107 = scmp.eq.s32.totalorder %s22, 1
      %p108 = por %p106, %p107
      %p110 = scmp.ne.s32.totalorder %s95, %s109
      %p111 = scmp.eq.s32.totalorder %s22, 0
      %p112 = por %p110, %p111
      %s114 = sadd.s32 %s113, 1
      %p117 = scmp.eq.s32.totalorder %s16, 1
      %p118 = scmp.ne.s32.totalorder %s113, %s115
      %p119 = scmp.eq.s32.totalorder %s16, 0
      %p120 = por %p118, %p119
      %p121 = scmp.ne.s32.totalorder %s113, %s115
      %p122 = scmp.eq.s32.totalorder %s21, 1
      %p123 = por %p121, %p122
      %p124 = scmp.ne.s32.totalorder %s115, %s116
      %p125 = scmp.eq.s32.totalorder %s21, 0
      %p126 = por %p124, %p125
      %p127 = scmp.ne.s32.totalorder %s115, %s116
      %p128 = scmp.eq.s32.totalorder %s22, 1
      %p129 = por %p127, %p128
      %p131 = scmp.ne.s32.totalorder %s116, %s130
      %p132 = scmp.eq.s32.totalorder %s22, 0
      %p133 = por %p131, %p132
      %s135 = sadd.s32 %s134, 1
      %p138 = scmp.eq.s32.totalorder %s16, 1
      %p139 = scmp.ne.s32.totalorder %s134, %s136
      %p140 = scmp.eq.s32.totalorder %s16, 0
      %p141 = por %p139, %p140
      %p142 = scmp.ne.s32.totalorder %s134, %s136
      %p143 = scmp.eq.s32.totalorder %s21, 1
      %p144 = por %p142, %p143
      %p145 = scmp.ne.s32.totalorder %s136, %s137
      %p146 = scmp.eq.s32.totalorder %s21, 0
      %p147 = por %p145, %p146
      %p148 = scmp.ne.s32.totalorder %s136, %s137
      %p149 = scmp.eq.s32.totalorder %s22, 1
      %p150 = por %p148, %p149
      %p152 = scmp.ne.s32.totalorder %s137, %s151
      %p153 = scmp.eq.s32.totalorder %s22, 0
      %p154 = por %p152, %p153
      %s156 = sadd.s32 %s155, 1
      %p159 = scmp.eq.s32.totalorder %s16, 1
      %p160 = scmp.ne.s32.totalorder %s155, %s157
      %p161 = scmp.eq.s32.totalorder %s16, 0
      %p162 = por %p160, %p161
      %p163 = scmp.ne.s32.totalorder %s155, %s157
      %p164 = scmp.eq.s32.totalorder %s21, 1
      %p165 = por %p163, %p164
      %p166 = scmp.ne.s32.totalorder %s157, %s158
      %p167 = scmp.eq.s32.totalorder %s21, 0
      %p168 = por %p166, %p167
      %p169 = scmp.ne.s32.totalorder %s157, %s158
      %p170 = scmp.eq.s32.totalorder %s22, 1
      %p171 = por %p169, %p170
      %p173 = scmp.ne.s32.totalorder %s158, %s172
      %p174 = scmp.eq.s32.totalorder %s22, 0
      %p175 = por %p173, %p174
      %s176 = ssub.s32 %s16, %s23
      %p177 = scmp.eq.s32.totalorder %s176, 0
      %s179 = sadd.s32 %s178, 1
      %s180 = scalar_select %p177, %s178, %s179
      %p183 = pneg %p177
      %p184 = scmp.eq.s32.totalorder %s16, 1
      %p185 = por %p183, %p184
      %p186 = scmp.ne.s32.totalorder %s178, %s181
      %p187 = scmp.eq.s32.totalorder %s16, 0
      %p188 = por %p186, %p187
      %p189 = scmp.ne.s32.totalorder %s178, %s181
      %p190 = scmp.eq.s32.totalorder %s21, 1
      %p191 = por %p189, %p190
      %p192 = scmp.ne.s32.totalorder %s181, %s182
      %p193 = scmp.eq.s32.totalorder %s21, 0
      %p194 = por %p192, %p193
      %p195 = scmp.ne.s32.totalorder %s181, %s182
      %p196 = scmp.eq.s32.totalorder %s22, 1
      %p197 = por %p195, %p196
      %p199 = scmp.ne.s32.totalorder %s182, %s198
      %p200 = scmp.eq.s32.totalorder %s22, 0
      %p201 = por %p199, %p200
      %p202 = scmp.le.s32.totalorder 1, %s16
      %p203 = scmp.lt.s32.totalorder %s16, 3
      %p204 = pnand %p202, %p203
      %p205 = pneg %p204
      // Predicated region
      $region9: #{tpu_custom_call.1} parent=5 // pred_check
        _
      $region10: #{tpu_custom_call.1} parent=5 // pred_check_branch
        %207 = sbr.rel (%p204) target = $region12
      $region11: #{tpu_custom_call.1} parent=5 // pred_region
        %s208 = ssub.s32 %s16, 1
        // Predicated region
        $region13: #{tpu_custom_call.1} parent=11 // pred_check
          %p209 = pneg %p63
        $region14: #{tpu_custom_call.1} parent=11 // pred_check_branch
          %211 = sbr.rel (%p209) target = $region16
        $region15: #{tpu_custom_call.1} parent=11 // pred_region
          _
        $region16: #{tpu_custom_call.1} parent=11 // pred_fallthru
          _
        // Predicated region
        $region17: #{tpu_custom_call.1} parent=11 // pred_check
          %p212 = pneg %p84
        $region18: #{tpu_custom_call.1} parent=11 // pred_check_branch
          %214 = sbr.rel (%p212) target = $region20
        $region19: #{tpu_custom_call.1} parent=11 // pred_region
          _
        $region20: #{tpu_custom_call.1} parent=11 // pred_fallthru
          _
        // Predicated region
        $region21: #{tpu_custom_call.1} parent=11 // pred_check
          %p215 = pneg %p105
        $region22: #{tpu_custom_call.1} parent=11 // pred_check_branch
          %217 = sbr.rel (%p215) target = $region24
        $region23: #{tpu_custom_call.1} parent=11 // pred_region
          _
        $region24: #{tpu_custom_call.1} parent=11 // pred_fallthru
          _
        // Predicated region
        $region25: #{tpu_custom_call.1} parent=11 // pred_check
          %p218 = pneg %p126
        $region26: #{tpu_custom_call.1} parent=11 // pred_check_branch
          %220 = sbr.rel (%p218) target = $region28
        $region27: #{tpu_custom_call.1} parent=11 // pred_region
          _
        $region28: #{tpu_custom_call.1} parent=11 // pred_fallthru
          _
        // Predicated region
        $region29: #{tpu_custom_call.1} parent=11 // pred_check
          %p221 = pneg %p147
        $region30: #{tpu_custom_call.1} parent=11 // pred_check_branch
          %223 = sbr.rel (%p221) target = $region32
        $region31: #{tpu_custom_call.1} parent=11 // pred_region
          _
        $region32: #{tpu_custom_call.1} parent=11 // pred_fallthru
          _
        // Predicated region
        $region33: #{tpu_custom_call.1} parent=11 // pred_check
          %p224 = pneg %p168
        $region34: #{tpu_custom_call.1} parent=11 // pred_check_branch
          %226 = sbr.rel (%p224) target = $region36
        $region35: #{tpu_custom_call.1} parent=11 // pred_region
          _
        $region36: #{tpu_custom_call.1} parent=11 // pred_fallthru
          _
      $region12: #{tpu_custom_call.1} parent=5 // pred_fallthru
        _
      %p227 = scmp.lt.s32.totalorder %s16, 2
      // Predicated region
      $region37: #{tpu_custom_call.1} parent=5 // pred_check
        %p228 = pneg %p227
      $region38: #{tpu_custom_call.1} parent=5 // pred_check_branch
        %230 = sbr.rel (%p228) target = $region40
      $region39: #{tpu_custom_call.1} parent=5 // pred_region
        // Predicated region
        $region41: #{tpu_custom_call.1} parent=39 // pred_check
          %p231 = pneg %p36
        $region42: #{tpu_custom_call.1} parent=39 // pred_check_branch
          %233 = sbr.rel (%p231) target = $region44
        $region43: #{tpu_custom_call.1} parent=39 // pred_region
          %p234 = scmp.lt.s32.totalorder %s16, 1
          %s235 = scalar_select %p234, %s16, 1
          %s236 = smul.addr %s235, 64
          %s237 = smul.addr %s236, 4
          %s238 = scalar_lea.vmem %s0, %s237
        $region44: #{tpu_custom_call.1} parent=39 // pred_fallthru
          _
      $region40: #{tpu_custom_call.1} parent=5 // pred_fallthru
        _
      %p239 = scmp.le.s32.totalorder 1, %s16
      %p240 = scmp.lt.s32.totalorder %s16, 3
      %p241 = pnand %p239, %p240
      %p242 = pneg %p241
      // Predicated region
      $region45: #{tpu_custom_call.1} parent=5 // pred_check
        _
      $region46: #{tpu_custom_call.1} parent=5 // pred_check_branch
        %244 = sbr.rel (%p241) target = $region48
      $region47: #{tpu_custom_call.1} parent=5 // pred_region
        %s245 = ssub.s32 %s16, 1
        %p246 = scmp.lt.s32.totalorder %s21, 1
        %s247 = scalar_select %p246, %s21, 1
        %s248 = smul.addr %s247, 64
        %s249 = smul.addr %s248, 4
        %s250 = scalar_lea.vmem %s0, %s249
        %p251 = pneg %p42
        %p252 = pneg %p39
        %p253 = pneg %p63
        %p254 = pneg %p60
        %p255 = pneg %p84
        %p256 = pneg %p81
        %p257 = pneg %p105
        %p258 = pneg %p102
        %p259 = pneg %p126
        %p260 = pneg %p123
        %p261 = pneg %p147
        %p262 = pneg %p144
        %p263 = pneg %p168
        %p264 = pneg %p165
        %p265 = pneg %p194
        %p266 = pneg %p191
        %s267 = sand.u32 %s181, 1
        %s268 = scalar_lea.sflag [#allocation5], %s267
        %s269 = sand.u32 %s181, 1
        %s270 = smul.addr %s269, 64
        %s271 = scalar_lea.vmem [#allocation4], %s270
        %p272 = scmp.lt.s32.totalorder %s21, 1
        %s273 = scalar_select %p272, %s21, 1
        %s274 = smul.addr %s273, 64
        %s275 = smul.addr %s274, 4
        %s276 = scalar_lea.vmem %s0, %s275
        %v278 = vld [vmem:[%s276] sm:$0xf]
        %v279 = vld [vmem:[%s276 + $0x4] sm:$0xf]
        %v280 = vld [vmem:[%s276 + $0x8] sm:$0xf]
        %v281 = vld [vmem:[%s276 + $0xc] sm:$0xf]
        %v282 = vld [vmem:[%s276 + $0x10] sm:$0xf]
        %v283 = vld [vmem:[%s276 + $0x14] sm:$0xf]
        %v284 = vld [vmem:[%s276 + $0x18] sm:$0xf]
        %v285 = vld [vmem:[%s276 + $0x1c] sm:$0xf]
        %v286 = vld [vmem:[%s276 + $0x20] sm:$0xf]
        %v287 = vld [vmem:[%s276 + $0x24] sm:$0xf]
        %v288 = vld [vmem:[%s276 + $0x28] sm:$0xf]
        %v289 = vld [vmem:[%s276 + $0x2c] sm:$0xf]
        %v290 = vld [vmem:[%s276 + $0x30] sm:$0xf]
        %v291 = vld [vmem:[%s276 + $0x34] sm:$0xf]
        %v292 = vld [vmem:[%s276 + $0x38] sm:$0xf]
        %v293 = vld [vmem:[%s276 + $0x3c] sm:$0xf]
        %v294 = vld [vmem:[%s276 + $0x40] sm:$0xf]
        %v295 = vld [vmem:[%s276 + $0x44] sm:$0xf]
        %v296 = vld [vmem:[%s276 + $0x48] sm:$0xf]
        %v297 = vld [vmem:[%s276 + $0x4c] sm:$0xf]
        %v298 = vld [vmem:[%s276 + $0x50] sm:$0xf]
        %v299 = vld [vmem:[%s276 + $0x54] sm:$0xf]
        %v300 = vld [vmem:[%s276 + $0x58] sm:$0xf]
        %v301 = vld [vmem:[%s276 + $0x5c] sm:$0xf]
        %v302 = vld [vmem:[%s276 + $0x60] sm:$0xf]
        %v303 = vld [vmem:[%s276 + $0x64] sm:$0xf]
        %v304 = vld [vmem:[%s276 + $0x68] sm:$0xf]
        %v305 = vld [vmem:[%s276 + $0x6c] sm:$0xf]
        %v306 = vld [vmem:[%s276 + $0x70] sm:$0xf]
        %v307 = vld [vmem:[%s276 + $0x74] sm:$0xf]
        %v308 = vld [vmem:[%s276 + $0x78] sm:$0xf]
        %v309 = vld [vmem:[%s276 + $0x7c] sm:$0xf]
        %v310 = vld [vmem:[%s276 + $0x80] sm:$0xf]
        %v311 = vld [vmem:[%s276 + $0x84] sm:$0xf]
        %v312 = vld [vmem:[%s276 + $0x88] sm:$0xf]
        %v313 = vld [vmem:[%s276 + $0x8c] sm:$0xf]
        %v314 = vld [vmem:[%s276 + $0x90] sm:$0xf]
        %v315 = vld [vmem:[%s276 + $0x94] sm:$0xf]
        %v316 = vld [vmem:[%s276 + $0x98] sm:$0xf]
        %v317 = vld [vmem:[%s276 + $0x9c] sm:$0xf]
        %v318 = vld [vmem:[%s276 + $0xa0] sm:$0xf]
        %v319 = vld [vmem:[%s276 + $0xa4] sm:$0xf]
        %v320 = vld [vmem:[%s276 + $0xa8] sm:$0xf]
        %v321 = vld [vmem:[%s276 + $0xac] sm:$0xf]
        %v322 = vld [vmem:[%s276 + $0xb0] sm:$0xf]
        %v323 = vld [vmem:[%s276 + $0xb4] sm:$0xf]
        %v324 = vld [vmem:[%s276 + $0xb8] sm:$0xf]
        %v325 = vld [vmem:[%s276 + $0xbc] sm:$0xf]
        %v326 = vld [vmem:[%s276 + $0xc0] sm:$0xf]
        %v327 = vld [vmem:[%s276 + $0xc4] sm:$0xf]
        %v328 = vld [vmem:[%s276 + $0xc8] sm:$0xf]
        %v329 = vld [vmem:[%s276 + $0xcc] sm:$0xf]
        %v330 = vld [vmem:[%s276 + $0xd0] sm:$0xf]
        %v331 = vld [vmem:[%s276 + $0xd4] sm:$0xf]
        %v332 = vld [vmem:[%s276 + $0xd8] sm:$0xf]
        %v333 = vld [vmem:[%s276 + $0xdc] sm:$0xf]
        %v334 = vld [vmem:[%s276 + $0xe0] sm:$0xf]
        %v335 = vld [vmem:[%s276 + $0xe4] sm:$0xf]
        %v336 = vld [vmem:[%s276 + $0xe8] sm:$0xf]
        %v337 = vld [vmem:[%s276 + $0xec] sm:$0xf]
        %v338 = vld [vmem:[%s276 + $0xf0] sm:$0xf]
        %v339 = vld [vmem:[%s276 + $0xf4] sm:$0xf]
        %v340 = vld [vmem:[%s276 + $0xf8] sm:$0xf]
        %v341 = vld [vmem:[%s276 + $0xfc] sm:$0xf]
        %v342 = vld [vmem:[%s1] sm:$0xf]
        %v343 = vld [vmem:[%s1 + $0x4] sm:$0xf]
        %v344 = vld [vmem:[%s2] sm:$0x1]
        %v346 = vlaneseq
        %v347 = vshrl.u32 %v346, 7
        %v348 = vsub.s32 0, %v347
        %v349 = vrot.slane %v344, %v348
        %v415 = vunpack.c.l.b16 %v278
        %v416 = vunpack.c.l.b16 %v279
        %v417 = vunpack.c.l.b16 %v280
        %v418 = vunpack.c.l.b16 %v281
        %v419 = vunpack.c.l.b16 %v282
        %v420 = vunpack.c.l.b16 %v283
        %v421 = vunpack.c.l.b16 %v284
        %v422 = vunpack.c.l.b16 %v285
        %v423 = vunpack.c.l.b16 %v286
        %v424 = vunpack.c.l.b16 %v287
        %v425 = vunpack.c.l.b16 %v288
        %v426 = vunpack.c.l.b16 %v289
        %v427 = vunpack.c.l.b16 %v290
        %v428 = vunpack.c.l.b16 %v291
        %v429 = vunpack.c.l.b16 %v292
        %v430 = vunpack.c.l.b16 %v293
        %v431 = vunpack.c.l.b16 %v294
        %v432 = vunpack.c.l.b16 %v295
        %v433 = vunpack.c.l.b16 %v296
        %v434 = vunpack.c.l.b16 %v297
        %v435 = vunpack.c.l.b16 %v298
        %v436 = vunpack.c.l.b16 %v299
        %v437 = vunpack.c.l.b16 %v300
        %v438 = vunpack.c.l.b16 %v301
        %v439 = vunpack.c.l.b16 %v302
        %v440 = vunpack.c.l.b16 %v303
        %v441 = vunpack.c.l.b16 %v304
        %v442 = vunpack.c.l.b16 %v305
        %v443 = vunpack.c.l.b16 %v306
        %v444 = vunpack.c.l.b16 %v307
        %v445 = vunpack.c.l.b16 %v308
        %v446 = vunpack.c.l.b16 %v309
        %v447 = vunpack.c.l.b16 %v310
        %v448 = vunpack.c.l.b16 %v311
        %v449 = vunpack.c.l.b16 %v312
        %v450 = vunpack.c.l.b16 %v313
        %v451 = vunpack.c.l.b16 %v314
        %v452 = vunpack.c.l.b16 %v315
        %v453 = vunpack.c.l.b16 %v316
        %v454 = vunpack.c.l.b16 %v317
        %v455 = vunpack.c.l.b16 %v318
        %v456 = vunpack.c.l.b16 %v319
        %v457 = vunpack.c.l.b16 %v320
        %v458 = vunpack.c.l.b16 %v321
        %v459 = vunpack.c.l.b16 %v322
        %v460 = vunpack.c.l.b16 %v323
        %v461 = vunpack.c.l.b16 %v324
        %v462 = vunpack.c.l.b16 %v325
        %v463 = vunpack.c.l.b16 %v326
        %v464 = vunpack.c.l.b16 %v327
        %v465 = vunpack.c.l.b16 %v328
        %v466 = vunpack.c.l.b16 %v329
        %v467 = vunpack.c.l.b16 %v330
        %v468 = vunpack.c.l.b16 %v331
        %v469 = vunpack.c.l.b16 %v332
        %v470 = vunpack.c.l.b16 %v333
        %v471 = vunpack.c.l.b16 %v334
        %v472 = vunpack.c.l.b16 %v335
        %v473 = vunpack.c.l.b16 %v336
        %v474 = vunpack.c.l.b16 %v337
        %v475 = vunpack.c.l.b16 %v338
        %v476 = vunpack.c.l.b16 %v339
        %v477 = vunpack.c.l.b16 %v340
        %v478 = vunpack.c.l.b16 %v341
        %v479 = vpack.c.b16 %v416, %v415
        %v480 = vpack.c.b16 %v418, %v417
        %v481 = vpack.c.b16 %v420, %v419
        %v482 = vpack.c.b16 %v422, %v421
        %v483 = vpack.c.b16 %v424, %v423
        %v484 = vpack.c.b16 %v426, %v425
        %v485 = vpack.c.b16 %v428, %v427
        %v486 = vpack.c.b16 %v430, %v429
        %v487 = vpack.c.b16 %v432, %v431
        %v488 = vpack.c.b16 %v434, %v433
        %v489 = vpack.c.b16 %v436, %v435
        %v490 = vpack.c.b16 %v438, %v437
        %v491 = vpack.c.b16 %v440, %v439
        %v492 = vpack.c.b16 %v442, %v441
        %v493 = vpack.c.b16 %v444, %v443
        %v494 = vpack.c.b16 %v446, %v445
        %v495 = vpack.c.b16 %v448, %v447
        %v496 = vpack.c.b16 %v450, %v449
        %v497 = vpack.c.b16 %v452, %v451
        %v498 = vpack.c.b16 %v454, %v453
        %v499 = vpack.c.b16 %v456, %v455
        %v500 = vpack.c.b16 %v458, %v457
        %v501 = vpack.c.b16 %v460, %v459
        %v502 = vpack.c.b16 %v462, %v461
        %v503 = vpack.c.b16 %v464, %v463
        %v504 = vpack.c.b16 %v466, %v465
        %v505 = vpack.c.b16 %v468, %v467
        %v506 = vpack.c.b16 %v470, %v469
        %v507 = vpack.c.b16 %v472, %v471
        %v508 = vpack.c.b16 %v474, %v473
        %v509 = vpack.c.b16 %v476, %v475
        %v510 = vpack.c.b16 %v478, %v477
        %v513 = vunpack.c.l.b16 %v342
        %v514 = vunpack.c.l.b16 %v343
        %v515 = vpack.c.b16 %v514, %v513
        %vm517 = vcmask 130048
        %v519 = vsel %vm517, %v479, 0
        %v522 = vsel %vm517, %v480, 0
        %v525 = vsel %vm517, %v481, 0
        %v528 = vsel %vm517, %v482, 0
        %v531 = vsel %vm517, %v483, 0
        %v534 = vsel %vm517, %v484, 0
        %v537 = vsel %vm517, %v485, 0
        %v540 = vsel %vm517, %v486, 0
        %v543 = vsel %vm517, %v487, 0
        %v546 = vsel %vm517, %v488, 0
        %v549 = vsel %vm517, %v489, 0
        %v552 = vsel %vm517, %v490, 0
        %v555 = vsel %vm517, %v491, 0
        %v558 = vsel %vm517, %v492, 0
        %v561 = vsel %vm517, %v493, 0
        %v564 = vsel %vm517, %v494, 0
        %v567 = vsel %vm517, %v495, 0
        %v570 = vsel %vm517, %v496, 0
        %v573 = vsel %vm517, %v497, 0
        %v576 = vsel %vm517, %v498, 0
        %v579 = vsel %vm517, %v499, 0
        %v582 = vsel %vm517, %v500, 0
        %v585 = vsel %vm517, %v501, 0
        %v588 = vsel %vm517, %v502, 0
        %v591 = vsel %vm517, %v503, 0
        %v594 = vsel %vm517, %v504, 0
        %v597 = vsel %vm517, %v505, 0
        %v600 = vsel %vm517, %v506, 0
        %v603 = vsel %vm517, %v507, 0
        %v606 = vsel %vm517, %v508, 0
        %v609 = vsel %vm517, %v509, 0
        %v612 = vsel %vm517, %v510, 0
        %614 = vmatprep.subr.bf16.mxu0 0
        %615 = vmatpush1.bf16.msra.mxu0 %v515
        %616 = vmatprep.subr.bf16.mxu0 0
        %617 = vmatpush1.bf16.msra.mxu0 0
        %618 = vmatprep.subr.bf16.mxu0 0
        %619 = vmatpush1.bf16.msra.mxu0 0
        %620 = vmatprep.subr.bf16.mxu0 0
        %621 = vmatpush1.bf16.msra.mxu0 0
        %622 = vmatprep.subr.bf16.mxu0 0
        %623 = vmatpush1.bf16.msra.mxu0 0
        %624 = vmatprep.subr.bf16.mxu0 0
        %625 = vmatpush1.bf16.msra.mxu0 0
        %626 = vmatprep.subr.bf16.mxu0 0
        %627 = vmatpush1.bf16.msra.mxu0 0
        %628 = vmatprep.subr.bf16.mxu0 0
        %629 = vmatpush1.bf16.msra.mxu0 0
        %630 = vmatprep.subr.bf16.mxu0 0
        %631 = vmatpush1.bf16.msra.mxu0 0
        %632 = vmatprep.subr.bf16.mxu0 0
        %633 = vmatpush1.bf16.msra.mxu0 0
        %634 = vmatprep.subr.bf16.mxu0 0
        %635 = vmatpush1.bf16.msra.mxu0 0
        %636 = vmatprep.subr.bf16.mxu0 0
        %637 = vmatpush1.bf16.msra.mxu0 0
        %638 = vmatprep.subr.bf16.mxu0 0
        %639 = vmatpush1.bf16.msra.mxu0 0
        %640 = vmatprep.subr.bf16.mxu0 0
        %641 = vmatpush1.bf16.msra.mxu0 0
        %642 = vmatprep.subr.bf16.mxu0 0
        %643 = vmatpush1.bf16.msra.mxu0 0
        %644 = vmatprep.subr.bf16.mxu0 0
        %645 = vmatpush1.bf16.msra.mxu0 0
        %646 = vmatprep.mubr.bf16.mxu0 0
        %647 = vmatmul.mubr.bf16.gmra.mrb[0].mxu0 %v519
        %v648 = vpop.f32.mrb[0].mxu0
        %v649 = vadd.f32 %v349, %v648
        %v650 = vpop.f32.mrb[0].mxu0
        %v651 = vpop.f32.mrb[0].mxu0
        %v652 = vadd.f32 %v349, %v651
        %v653 = vpop.f32.mrb[0].mxu0
        %654 = vmatprep.mubr.bf16.mxu0 0
        %655 = vmatmul.mubr.bf16.gmra.mrb[0].mxu0 %v522
        %v656 = vpop.f32.mrb[0].mxu0
        %v657 = vadd.f32 %v349, %v656
        %v658 = vpop.f32.mrb[0].mxu0
        %v659 = vpop.f32.mrb[0].mxu0
        %v660 = vadd.f32 %v349, %v659
        %v661 = vpop.f32.mrb[0].mxu0
        %662 = vmatprep.mubr.bf16.mxu0 0
        %663 = vmatmul.mubr.bf16.gmra.mrb[0].mxu0 %v525
        %v664 = vpop.f32.mrb[0].mxu0
        %v665 = vadd.f32 %v349, %v664
        %v666 = vpop.f32.mrb[0].mxu0
        %v667 = vpop.f32.mrb[0].mxu0
        %v668 = vadd.f32 %v349, %v667
        %v669 = vpop.f32.mrb[0].mxu0
        %670 = vmatprep.mubr.bf16.mxu0 0
        %671 = vmatmul.mubr.bf16.gmra.mrb[0].mxu0 %v528
        %v672 = vpop.f32.mrb[0].mxu0
        %v673 = vadd.f32 %v349, %v672
        %v674 = vpop.f32.mrb[0].mxu0
        %v675 = vpop.f32.mrb[0].mxu0
        %v676 = vadd.f32 %v349, %v675
        %v677 = vpop.f32.mrb[0].mxu0
        %678 = vmatprep.mubr.bf16.mxu0 0
        %679 = vmatmul.mubr.bf16.gmra.mrb[0].mxu0 %v531
        %v680 = vpop.f32.mrb[0].mxu0
        %v681 = vadd.f32 %v349, %v680
        %v682 = vpop.f32.mrb[0].mxu0
        %v683 = vpop.f32.mrb[0].mxu0
        %v684 = vadd.f32 %v349, %v683
        %v685 = vpop.f32.mrb[0].mxu0
        %686 = vmatprep.mubr.bf16.mxu0 0
        %687 = vmatmul.mubr.bf16.gmra.mrb[0].mxu0 %v534
        %v688 = vpop.f32.mrb[0].mxu0
        %v689 = vadd.f32 %v349, %v688
        %v690 = vpop.f32.mrb[0].mxu0
        %v691 = vpop.f32.mrb[0].mxu0
        %v692 = vadd.f32 %v349, %v691
        %v693 = vpop.f32.mrb[0].mxu0
        %694 = vmatprep.mubr.bf16.mxu0 0
        %695 = vmatmul.mubr.bf16.gmra.mrb[0].mxu0 %v537
        %v696 = vpop.f32.mrb[0].mxu0
        %v697 = vadd.f32 %v349, %v696
        %v698 = vpop.f32.mrb[0].mxu0
        %v699 = vpop.f32.mrb[0].mxu0
        %v700 = vadd.f32 %v349, %v699
        %v701 = vpop.f32.mrb[0].mxu0
        %702 = vmatprep.mubr.bf16.mxu0 0
        %703 = vmatmul.mubr.bf16.gmra.mrb[0].mxu0 %v540
        %v704 = vpop.f32.mrb[0].mxu0
        %v705 = vadd.f32 %v349, %v704
        %v706 = vpop.f32.mrb[0].mxu0
        %v707 = vpop.f32.mrb[0].mxu0
        %v708 = vadd.f32 %v349, %v707
        %v709 = vpop.f32.mrb[0].mxu0
        %710 = vmatprep.mubr.bf16.mxu0 0
        %711 = vmatmul.mubr.bf16.gmra.mrb[0].mxu0 %v543
        %v712 = vpop.f32.mrb[0].mxu0
        %v713 = vadd.f32 %v349, %v712
        %v714 = vpop.f32.mrb[0].mxu0
        %v715 = vpop.f32.mrb[0].mxu0
        %v716 = vadd.f32 %v349, %v715
        %v717 = vpop.f32.mrb[0].mxu0
        %718 = vmatprep.mubr.bf16.mxu0 0
        %719 = vmatmul.mubr.bf16.gmra.mrb[0].mxu0 %v546
        %v720 = vpop.f32.mrb[0].mxu0
        %v721 = vadd.f32 %v349, %v720
        %v722 = vpop.f32.mrb[0].mxu0
        %v723 = vpop.f32.mrb[0].mxu0
        %v724 = vadd.f32 %v349, %v723
        %v725 = vpop.f32.mrb[0].mxu0
        %726 = vmatprep.mubr.bf16.mxu0 0
        %727 = vmatmul.mubr.bf16.gmra.mrb[0].mxu0 %v549
        %v728 = vpop.f32.mrb[0].mxu0
        %v729 = vadd.f32 %v349, %v728
        %v730 = vpop.f32.mrb[0].mxu0
        %v731 = vpop.f32.mrb[0].mxu0
        %v732 = vadd.f32 %v349, %v731
        %v733 = vpop.f32.mrb[0].mxu0
        %734 = vmatprep.mubr.bf16.mxu0 0
        %735 = vmatmul.mubr.bf16.gmra.mrb[0].mxu0 %v552
        %v736 = vpop.f32.mrb[0].mxu0
        %v737 = vadd.f32 %v349, %v736
        %v738 = vpop.f32.mrb[0].mxu0
        %v739 = vpop.f32.mrb[0].mxu0
        %v740 = vadd.f32 %v349, %v739
        %v741 = vpop.f32.mrb[0].mxu0
        %742 = vmatprep.mubr.bf16.mxu0 0
        %743 = vmatmul.mubr.bf16.gmra.mrb[0].mxu0 %v555
        %v744 = vpop.f32.mrb[0].mxu0
        %v745 = vadd.f32 %v349, %v744
        %v746 = vpop.f32.mrb[0].mxu0
        %v747 = vpop.f32.mrb[0].mxu0
        %v748 = vadd.f32 %v349, %v747
        %v749 = vpop.f32.mrb[0].mxu0
        %750 = vmatprep.mubr.bf16.mxu0 0
        %751 = vmatmul.mubr.bf16.gmra.mrb[0].mxu0 %v558
        %v752 = vpop.f32.mrb[0].mxu0
        %v753 = vadd.f32 %v349, %v752
        %v754 = vpop.f32.mrb[0].mxu0
        %v755 = vpop.f32.mrb[0].mxu0
        %v756 = vadd.f32 %v349, %v755
        %v757 = vpop.f32.mrb[0].mxu0
        %758 = vmatprep.mubr.bf16.mxu0 0
        %759 = vmatmul.mubr.bf16.gmra.mrb[0].mxu0 %v561
        %v760 = vpop.f32.mrb[0].mxu0
        %v761 = vadd.f32 %v349, %v760
        %v762 = vpop.f32.mrb[0].mxu0
        %v763 = vpop.f32.mrb[0].mxu0
        %v764 = vadd.f32 %v349, %v763
        %v765 = vpop.f32.mrb[0].mxu0
        %766 = vmatprep.mubr.bf16.mxu0 0
        %767 = vmatmul.mubr.bf16.gmra.mrb[0].mxu0 %v564
        %v768 = vpop.f32.mrb[0].mxu0
        %v769 = vadd.f32 %v349, %v768
        %v770 = vpop.f32.mrb[0].mxu0
        %v771 = vpop.f32.mrb[0].mxu0
        %v772 = vadd.f32 %v349, %v771
        %v773 = vpop.f32.mrb[0].mxu0
        %774 = vmatprep.mubr.bf16.mxu0 0
        %775 = vmatmul.mubr.bf16.gmra.mrb[0].mxu0 %v567
        %v776 = vpop.f32.mrb[0].mxu0
        %v777 = vadd.f32 %v349, %v776
        %v778 = vpop.f32.mrb[0].mxu0
        %v779 = vpop.f32.mrb[0].mxu0
        %v780 = vadd.f32 %v349, %v779
        %v781 = vpop.f32.mrb[0].mxu0
        %782 = vmatprep.mubr.bf16.mxu0 0
        %783 = vmatmul.mubr.bf16.gmra.mrb[0].mxu0 %v570
        %v784 = vpop.f32.mrb[0].mxu0
        %v785 = vadd.f32 %v349, %v784
        %v786 = vpop.f32.mrb[0].mxu0
        %v787 = vpop.f32.mrb[0].mxu0
        %v788 = vadd.f32 %v349, %v787
        %v789 = vpop.f32.mrb[0].mxu0
        %790 = vmatprep.mubr.bf16.mxu0 0
        %791 = vmatmul.mubr.bf16.gmra.mrb[0].mxu0 %v573
        %v792 = vpop.f32.mrb[0].mxu0
        %v793 = vadd.f32 %v349, %v792
        %v794 = vpop.f32.mrb[0].mxu0
        %v795 = vpop.f32.mrb[0].mxu0
        %v796 = vadd.f32 %v349, %v795
        %v797 = vpop.f32.mrb[0].mxu0
        %798 = vmatprep.mubr.bf16.mxu0 0
        %799 = vmatmul.mubr.bf16.gmra.mrb[0].mxu0 %v576
        %v800 = vpop.f32.mrb[0].mxu0
        %v801 = vadd.f32 %v349, %v800
        %v802 = vpop.f32.mrb[0].mxu0
        %v803 = vpop.f32.mrb[0].mxu0
        %v804 = vadd.f32 %v349, %v803
        %v805 = vpop.f32.mrb[0].mxu0
        %806 = vmatprep.mubr.bf16.mxu0 0
        %807 = vmatmul.mubr.bf16.gmra.mrb[0].mxu0 %v579
        %v808 = vpop.f32.mrb[0].mxu0
        %v809 = vadd.f32 %v349, %v808
        %v810 = vpop.f32.mrb[0].mxu0
        %v811 = vpop.f32.mrb[0].mxu0
        %v812 = vadd.f32 %v349, %v811
        %v813 = vpop.f32.mrb[0].mxu0
        %814 = vmatprep.mubr.bf16.mxu0 0
        %815 = vmatmul.mubr.bf16.gmra.mrb[0].mxu0 %v582
        %v816 = vpop.f32.mrb[0].mxu0
        %v817 = vadd.f32 %v349, %v816
        %v818 = vpop.f32.mrb[0].mxu0
        %v819 = vpop.f32.mrb[0].mxu0
        %v820 = vadd.f32 %v349, %v819
        %v821 = vpop.f32.mrb[0].mxu0
        %822 = vmatprep.mubr.bf16.mxu0 0
        %823 = vmatmul.mubr.bf16.gmra.mrb[0].mxu0 %v585
        %v824 = vpop.f32.mrb[0].mxu0
        %v825 = vadd.f32 %v349, %v824
        %v826 = vpop.f32.mrb[0].mxu0
        %v827 = vpop.f32.mrb[0].mxu0
        %v828 = vadd.f32 %v349, %v827
        %v829 = vpop.f32.mrb[0].mxu0
        %830 = vmatprep.mubr.bf16.mxu0 0
        %831 = vmatmul.mubr.bf16.gmra.mrb[0].mxu0 %v588
        %v832 = vpop.f32.mrb[0].mxu0
        %v833 = vadd.f32 %v349, %v832
        %v834 = vpop.f32.mrb[0].mxu0
        %v835 = vpop.f32.mrb[0].mxu0
        %v836 = vadd.f32 %v349, %v835
        %v837 = vpop.f32.mrb[0].mxu0
        %838 = vmatprep.mubr.bf16.mxu0 0
        %839 = vmatmul.mubr.bf16.gmra.mrb[0].mxu0 %v591
        %v840 = vpop.f32.mrb[0].mxu0
        %v841 = vadd.f32 %v349, %v840
        %v842 = vpop.f32.mrb[0].mxu0
        %v843 = vpop.f32.mrb[0].mxu0
        %v844 = vadd.f32 %v349, %v843
        %v845 = vpop.f32.mrb[0].mxu0
        %846 = vmatprep.mubr.bf16.mxu0 0
        %847 = vmatmul.mubr.bf16.gmra.mrb[0].mxu0 %v594
        %v848 = vpop.f32.mrb[0].mxu0
        %v849 = vadd.f32 %v349, %v848
        %v850 = vpop.f32.mrb[0].mxu0
        %v851 = vpop.f32.mrb[0].mxu0
        %v852 = vadd.f32 %v349, %v851
        %v853 = vpop.f32.mrb[0].mxu0
        %854 = vmatprep.mubr.bf16.mxu0 0
        %855 = vmatmul.mubr.bf16.gmra.mrb[0].mxu0 %v597
        %v856 = vpop.f32.mrb[0].mxu0
        %v857 = vadd.f32 %v349, %v856
        %v858 = vpop.f32.mrb[0].mxu0
        %v859 = vpop.f32.mrb[0].mxu0
        %v860 = vadd.f32 %v349, %v859
        %v861 = vpop.f32.mrb[0].mxu0
        %862 = vmatprep.mubr.bf16.mxu0 0
        %863 = vmatmul.mubr.bf16.gmra.mrb[0].mxu0 %v600
        %v864 = vpop.f32.mrb[0].mxu0
        %v865 = vadd.f32 %v349, %v864
        %v866 = vpop.f32.mrb[0].mxu0
        %v867 = vpop.f32.mrb[0].mxu0
        %v868 = vadd.f32 %v349, %v867
        %v869 = vpop.f32.mrb[0].mxu0
        %870 = vmatprep.mubr.bf16.mxu0 0
        %871 = vmatmul.mubr.bf16.gmra.mrb[0].mxu0 %v603
        %v872 = vpop.f32.mrb[0].mxu0
        %v873 = vadd.f32 %v349, %v872
        %v874 = vpop.f32.mrb[0].mxu0
        %v875 = vpop.f32.mrb[0].mxu0
        %v876 = vadd.f32 %v349, %v875
        %v877 = vpop.f32.mrb[0].mxu0
        %878 = vmatprep.mubr.bf16.mxu0 0
        %879 = vmatmul.mubr.bf16.gmra.mrb[0].mxu0 %v606
        %v880 = vpop.f32.mrb[0].mxu0
        %v881 = vadd.f32 %v349, %v880
        %v882 = vpop.f32.mrb[0].mxu0
        %v883 = vpop.f32.mrb[0].mxu0
        %v884 = vadd.f32 %v349, %v883
        %v885 = vpop.f32.mrb[0].mxu0
        %886 = vmatprep.mubr.bf16.mxu0 0
        %887 = vmatmul.mubr.bf16.gmra.mrb[0].mxu0 %v609
        %v888 = vpop.f32.mrb[0].mxu0
        %v889 = vadd.f32 %v349, %v888
        %v890 = vpop.f32.mrb[0].mxu0
        %v891 = vpop.f32.mrb[0].mxu0
        %v892 = vadd.f32 %v349, %v891
        %v893 = vpop.f32.mrb[0].mxu0
        %894 = vmatprep.mubr.bf16.mxu0 0
        %895 = vmatmul.mubr.bf16.gmra.mrb[0].mxu0 %v612
        %v896 = vpop.f32.mrb[0].mxu0
        %v897 = vadd.f32 %v349, %v896
        %v898 = vpop.f32.mrb[0].mxu0
        %v899 = vpop.f32.mrb[0].mxu0
        %v900 = vadd.f32 %v349, %v899
        %v901 = vpop.f32.mrb[0].mxu0
        %902 = vdwg.mxu0
        %v903 = vmax.f32 %v649, 0.0
        %v904 = vmax.f32 %v652, 0.0
        %v905 = vmax.f32 %v657, 0.0
        %v906 = vmax.f32 %v660, 0.0
        %v907 = vmax.f32 %v665, 0.0
        %v908 = vmax.f32 %v668, 0.0
        %v909 = vmax.f32 %v673, 0.0
        %v910 = vmax.f32 %v676, 0.0
        %v911 = vmax.f32 %v681, 0.0
        %v912 = vmax.f32 %v684, 0.0
        %v913 = vmax.f32 %v689, 0.0
        %v914 = vmax.f32 %v692, 0.0
        %v915 = vmax.f32 %v697, 0.0
        %v916 = vmax.f32 %v700, 0.0
        %v917 = vmax.f32 %v705, 0.0
        %v918 = vmax.f32 %v708, 0.0
        %v919 = vmax.f32 %v713, 0.0
        %v920 = vmax.f32 %v716, 0.0
        %v921 = vmax.f32 %v721, 0.0
        %v922 = vmax.f32 %v724, 0.0
        %v923 = vmax.f32 %v729, 0.0
        %v924 = vmax.f32 %v732, 0.0
        %v925 = vmax.f32 %v737, 0.0
        %v926 = vmax.f32 %v740, 0.0
        %v927 = vmax.f32 %v745, 0.0
        %v928 = vmax.f32 %v748, 0.0
        %v929 = vmax.f32 %v753, 0.0
        %v930 = vmax.f32 %v756, 0.0
        %v931 = vmax.f32 %v761, 0.0
        %v932 = vmax.f32 %v764, 0.0
        %v933 = vmax.f32 %v769, 0.0
        %v934 = vmax.f32 %v772, 0.0
        %v935 = vmax.f32 %v777, 0.0
        %v936 = vmax.f32 %v780, 0.0
        %v937 = vmax.f32 %v785, 0.0
        %v938 = vmax.f32 %v788, 0.0
        %v939 = vmax.f32 %v793, 0.0
        %v940 = vmax.f32 %v796, 0.0
        %v941 = vmax.f32 %v801, 0.0
        %v942 = vmax.f32 %v804, 0.0
        %v943 = vmax.f32 %v809, 0.0
        %v944 = vmax.f32 %v812, 0.0
        %v945 = vmax.f32 %v817, 0.0
        %v946 = vmax.f32 %v820, 0.0
        %v947 = vmax.f32 %v825, 0.0
        %v948 = vmax.f32 %v828, 0.0
        %v949 = vmax.f32 %v833, 0.0
        %v950 = vmax.f32 %v836, 0.0
        %v951 = vmax.f32 %v841, 0.0
        %v952 = vmax.f32 %v844, 0.0
        %v953 = vmax.f32 %v849, 0.0
        %v954 = vmax.f32 %v852, 0.0
        %v955 = vmax.f32 %v857, 0.0
        %v956 = vmax.f32 %v860, 0.0
        %v957 = vmax.f32 %v865, 0.0
        %v958 = vmax.f32 %v868, 0.0
        %v959 = vmax.f32 %v873, 0.0
        %v960 = vmax.f32 %v876, 0.0
        %v961 = vmax.f32 %v881, 0.0
        %v962 = vmax.f32 %v884, 0.0
        %v963 = vmax.f32 %v889, 0.0
        %v964 = vmax.f32 %v892, 0.0
        %v965 = vmax.f32 %v897, 0.0
        %v966 = vmax.f32 %v900, 0.0
        %v967 = vlaneseq
        %v968 = vshrl.u32 %v967, 7
        %v969 = vadd.s32 %v968, 8
        %v970 = vadd.s32 %v968, 16
        %v971 = vadd.s32 %v968, 24
        %vm972 = vcmp.lt.s32.totalorder %v968, 16
        %vm973 = vcmp.lt.s32.totalorder %v969, 16
        %vm974 = vcmp.lt.s32.totalorder %v970, 16
        %vm975 = vcmp.lt.s32.totalorder %v971, 16
        %v976 = vsel %vm972, 1, 0
        %v977 = vsel %vm973, 1, 0
        %v978 = vsel %vm974, 1, 0
        %v979 = vsel %vm975, 1, 0
        %vm980 = vcmp.eq.s32.totalorder %v976, 1
        %vm981 = vcmp.eq.s32.totalorder %v977, 1
        %vm982 = vcmp.eq.s32.totalorder %v978, 1
        %vm983 = vcmp.eq.s32.totalorder %v979, 1
        %v984 = vsel %vm980, %v903, 0.0
        %v985 = vsel %vm981, %v904, 0.0
        %v986 = vsel %vm982, %v905, 0.0
        %v987 = vsel %vm983, %v906, 0.0
        %v988 = vsel %vm980, %v907, 0.0
        %v989 = vsel %vm981, %v908, 0.0
        %v990 = vsel %vm982, %v909, 0.0
        %v991 = vsel %vm983, %v910, 0.0
        %v992 = vsel %vm980, %v911, 0.0
        %v993 = vsel %vm981, %v912, 0.0
        %v994 = vsel %vm982, %v913, 0.0
        %v995 = vsel %vm983, %v914, 0.0
        %v996 = vsel %vm980, %v915, 0.0
        %v997 = vsel %vm981, %v916, 0.0
        %v998 = vsel %vm982, %v917, 0.0
        %v999 = vsel %vm983, %v918, 0.0
        %v1000 = vsel %vm980, %v919, 0.0
        %v1001 = vsel %vm981, %v920, 0.0
        %v1002 = vsel %vm982, %v921, 0.0
        %v1003 = vsel %vm983, %v922, 0.0
        %v1004 = vsel %vm980, %v923, 0.0
        %v1005 = vsel %vm981, %v924, 0.0
        %v1006 = vsel %vm982, %v925, 0.0
        %v1007 = vsel %vm983, %v926, 0.0
        %v1008 = vsel %vm980, %v927, 0.0
        %v1009 = vsel %vm981, %v928, 0.0
        %v1010 = vsel %vm982, %v929, 0.0
        %v1011 = vsel %vm983, %v930, 0.0
        %v1012 = vsel %vm980, %v931, 0.0
        %v1013 = vsel %vm981, %v932, 0.0
        %v1014 = vsel %vm982, %v933, 0.0
        %v1015 = vsel %vm983, %v934, 0.0
        %v1016 = vsel %vm980, %v935, 0.0
        %v1017 = vsel %vm981, %v936, 0.0
        %v1018 = vsel %vm982, %v937, 0.0
        %v1019 = vsel %vm983, %v938, 0.0
        %v1020 = vsel %vm980, %v939, 0.0
        %v1021 = vsel %vm981, %v940, 0.0
        %v1022 = vsel %vm982, %v941, 0.0
        %v1023 = vsel %vm983, %v942, 0.0
        %v1024 = vsel %vm980, %v943, 0.0
        %v1025 = vsel %vm981, %v944, 0.0
        %v1026 = vsel %vm982, %v945, 0.0
        %v1027 = vsel %vm983, %v946, 0.0
        %v1028 = vsel %vm980, %v947, 0.0
        %v1029 = vsel %vm981, %v948, 0.0
        %v1030 = vsel %vm982, %v949, 0.0
        %v1031 = vsel %vm983, %v950, 0.0
        %v1032 = vsel %vm980, %v951, 0.0
        %v1033 = vsel %vm981, %v952, 0.0
        %v1034 = vsel %vm982, %v953, 0.0
        %v1035 = vsel %vm983, %v954, 0.0
        %v1036 = vsel %vm980, %v955, 0.0
        %v1037 = vsel %vm981, %v956, 0.0
        %v1038 = vsel %vm982, %v957, 0.0
        %v1039 = vsel %vm983, %v958, 0.0
        %v1040 = vsel %vm980, %v959, 0.0
        %v1041 = vsel %vm981, %v960, 0.0
        %v1042 = vsel %vm982, %v961, 0.0
        %v1043 = vsel %vm983, %v962, 0.0
        %v1044 = vsel %vm980, %v963, 0.0
        %v1045 = vsel %vm981, %v964, 0.0
        %v1046 = vsel %vm982, %v965, 0.0
        %v1047 = vsel %vm983, %v966, 0.0
        %vm1048 = vcmask 64512
        %1049 = vst.msk [vmem:[#allocation2] sm:$0xff] %vm1048, 0
        %1050 = vst.msk [vmem:[#allocation2 + $0x8] sm:$0xff] %vm1048, 0
        %1051 = vst.msk [vmem:[#allocation2 + $0x10] sm:$0xff] %vm1048, 0
        %1052 = vst.msk [vmem:[#allocation2 + $0x18] sm:$0xff] %vm1048, 0
        %1053 = vst.msk [vmem:[#allocation2 + $0x120] sm:$0xff] %vm1048, 0
        %1054 = vst.msk [vmem:[#allocation2 + $0x128] sm:$0xff] %vm1048, 0
        %1055 = vst.msk [vmem:[#allocation2 + $0x130] sm:$0xff] %vm1048, 0
        %1056 = vst.msk [vmem:[#allocation2 + $0x138] sm:$0xff] %vm1048, 0
        %v1057 = vpack.c.bf16 %v985, %v984
        %v1058 = vpack.c.bf16 %v987, %v986
        %v1059 = vpack.c.bf16 %v989, %v988
        %v1060 = vpack.c.bf16 %v991, %v990
        %v1061 = vpack.c.bf16 %v993, %v992
        %v1062 = vpack.c.bf16 %v995, %v994
        %v1063 = vpack.c.bf16 %v997, %v996
        %v1064 = vpack.c.bf16 %v999, %v998
        %v1065 = vpack.c.bf16 %v1001, %v1000
        %v1066 = vpack.c.bf16 %v1003, %v1002
        %v1067 = vpack.c.bf16 %v1005, %v1004
        %v1068 = vpack.c.bf16 %v1007, %v1006
        %v1069 = vpack.c.bf16 %v1009, %v1008
        %v1070 = vpack.c.bf16 %v1011, %v1010
        %v1071 = vpack.c.bf16 %v1013, %v1012
        %v1072 = vpack.c.bf16 %v1015, %v1014
        %v1073 = vpack.c.bf16 %v1017, %v1016
        %v1074 = vpack.c.bf16 %v1019, %v1018
        %v1075 = vpack.c.bf16 %v1021, %v1020
        %v1076 = vpack.c.bf16 %v1023, %v1022
        %v1077 = vpack.c.bf16 %v1025, %v1024
        %v1078 = vpack.c.bf16 %v1027, %v1026
        %v1079 = vpack.c.bf16 %v1029, %v1028
        %v1080 = vpack.c.bf16 %v1031, %v1030
        %v1081 = vpack.c.bf16 %v1033, %v1032
        %v1082 = vpack.c.bf16 %v1035, %v1034
        %v1083 = vpack.c.bf16 %v1037, %v1036
        %v1084 = vpack.c.bf16 %v1039, %v1038
        %v1085 = vpack.c.bf16 %v1041, %v1040
        %v1086 = vpack.c.bf16 %v1043, %v1042
        %v1087 = vpack.c.bf16 %v1045, %v1044
        %v1088 = vpack.c.bf16 %v1047, %v1046
        %1089 = vst.msk [vmem:[#allocation2 + $0x20] sm:$0xff] %vm1048, %v1057
        %1090 = vst.msk [vmem:[#allocation2 + $0x28] sm:$0xff] %vm1048, %v1058
        %1091 = vst.msk [vmem:[#allocation2 + $0x30] sm:$0xff] %vm1048, %v1059
        %1092 = vst.msk [vmem:[#allocation2 + $0x38] sm:$0xff] %vm1048, %v1060
        %1093 = vst.msk [vmem:[#allocation2 + $0x40] sm:$0xff] %vm1048, %v1061
        %1094 = vst.msk [vmem:[#allocation2 + $0x48] sm:$0xff] %vm1048, %v1062
        %1095 = vst.msk [vmem:[#allocation2 + $0x50] sm:$0xff] %vm1048, %v1063
        %1096 = vst.msk [vmem:[#allocation2 + $0x58] sm:$0xff] %vm1048, %v1064
        %1097 = vst.msk [vmem:[#allocation2 + $0x60] sm:$0xff] %vm1048, %v1065
        %1098 = vst.msk [vmem:[#allocation2 + $0x68] sm:$0xff] %vm1048, %v1066
        %1099 = vst.msk [vmem:[#allocation2 + $0x70] sm:$0xff] %vm1048, %v1067
        %1100 = vst.msk [vmem:[#allocation2 + $0x78] sm:$0xff] %vm1048, %v1068
        %1101 = vst.msk [vmem:[#allocation2 + $0x80] sm:$0xff] %vm1048, %v1069
        %1102 = vst.msk [vmem:[#allocation2 + $0x88] sm:$0xff] %vm1048, %v1070
        %1103 = vst.msk [vmem:[#allocation2 + $0x90] sm:$0xff] %vm1048, %v1071
        %1104 = vst.msk [vmem:[#allocation2 + $0x98] sm:$0xff] %vm1048, %v1072
        %1105 = vst.msk [vmem:[#allocation2 + $0xa0] sm:$0xff] %vm1048, %v1073
        %1106 = vst.msk [vmem:[#allocation2 + $0xa8] sm:$0xff] %vm1048, %v1074
        %1107 = vst.msk [vmem:[#allocation2 + $0xb0] sm:$0xff] %vm1048, %v1075
        %1108 = vst.msk [vmem:[#allocation2 + $0xb8] sm:$0xff] %vm1048, %v1076
        %1109 = vst.msk [vmem:[#allocation2 + $0xc0] sm:$0xff] %vm1048, %v1077
        %1110 = vst.msk [vmem:[#allocation2 + $0xc8] sm:$0xff] %vm1048, %v1078
        %1111 = vst.msk [vmem:[#allocation2 + $0xd0] sm:$0xff] %vm1048, %v1079
        %1112 = vst.msk [vmem:[#allocation2 + $0xd8] sm:$0xff] %vm1048, %v1080
        %1113 = vst.msk [vmem:[#allocation2 + $0xe0] sm:$0xff] %vm1048, %v1081
        %1114 = vst.msk [vmem:[#allocation2 + $0xe8] sm:$0xff] %vm1048, %v1082
        %1115 = vst.msk [vmem:[#allocation2 + $0xf0] sm:$0xff] %vm1048, %v1083
        %1116 = vst.msk [vmem:[#allocation2 + $0xf8] sm:$0xff] %vm1048, %v1084
        %1117 = vst.msk [vmem:[#allocation2 + $0x100] sm:$0xff] %vm1048, %v1085
        %1118 = vst.msk [vmem:[#allocation2 + $0x108] sm:$0xff] %vm1048, %v1086
        %1119 = vst.msk [vmem:[#allocation2 + $0x110] sm:$0xff] %vm1048, %v1087
        %1120 = vst.msk [vmem:[#allocation2 + $0x118] sm:$0xff] %vm1048, %v1088
        %v1121 = vld [vmem:[#allocation2 + $0x8] sm:$0x80]
        %v1122 = vld [vmem:[#allocation2 + $0x10] sm:$0xff]
        %v1123 = vld [vmem:[#allocation2 + $0x18] sm:$0xff]
        %v1124 = vld [vmem:[#allocation2 + $0x20] sm:$0xff]
        %v1125 = vld [vmem:[#allocation2 + $0x28] sm:$0xff]
        %v1126 = vld [vmem:[#allocation2 + $0x30] sm:$0xff]
        %v1127 = vld [vmem:[#allocation2 + $0x38] sm:$0xff]
        %v1128 = vld [vmem:[#allocation2 + $0x40] sm:$0xff]
        %v1129 = vld [vmem:[#allocation2 + $0x48] sm:$0xff]
        %v1130 = vld [vmem:[#allocation2 + $0x50] sm:$0xff]
        %v1131 = vld [vmem:[#allocation2 + $0x58] sm:$0xff]
        %v1132 = vld [vmem:[#allocation2 + $0x60] sm:$0xff]
        %v1133 = vld [vmem:[#allocation2 + $0x68] sm:$0xff]
        %v1134 = vld [vmem:[#allocation2 + $0x70] sm:$0xff]
        %v1135 = vld [vmem:[#allocation2 + $0x78] sm:$0xff]
        %v1136 = vld [vmem:[#allocation2 + $0x80] sm:$0xff]
        %v1137 = vld [vmem:[#allocation2 + $0x88] sm:$0xff]
        %v1138 = vld [vmem:[#allocation2 + $0x90] sm:$0xff]
        %v1139 = vld [vmem:[#allocation2 + $0x98] sm:$0xff]
        %v1140 = vld [vmem:[#allocation2 + $0xa0] sm:$0xff]
        %v1141 = vld [vmem:[#allocation2 + $0xa8] sm:$0xff]
        %v1142 = vld [vmem:[#allocation2 + $0xb0] sm:$0xff]
        %v1143 = vld [vmem:[#allocation2 + $0xb8] sm:$0xff]
        %v1144 = vld [vmem:[#allocation2 + $0xc0] sm:$0xff]
        %v1145 = vld [vmem:[#allocation2 + $0xc8] sm:$0xff]
        %v1146 = vld [vmem:[#allocation2 + $0xd0] sm:$0xff]
        %v1147 = vld [vmem:[#allocation2 + $0xd8] sm:$0xff]
        %v1148 = vld [vmem:[#allocation2 + $0xe0] sm:$0xff]
        %v1149 = vld [vmem:[#allocation2 + $0xe8] sm:$0xff]
        %v1150 = vld [vmem:[#allocation2 + $0xf0] sm:$0xff]
        %v1151 = vld [vmem:[#allocation2 + $0xf8] sm:$0xff]
        %v1152 = vld [vmem:[#allocation2 + $0x100] sm:$0xff]
        %v1153 = vld [vmem:[#allocation2 + $0x108] sm:$0xff]
        %v1154 = vld [vmem:[#allocation2 + $0x110] sm:$0x1]
        %v1155 = vld [vmem:[#allocation2 + $0x18] sm:$0x80]
        %v1156 = vld [vmem:[#allocation2 + $0x110] sm:$0xff]
        %v1157 = vld [vmem:[#allocation2 + $0x118] sm:$0xff]
        %v1158 = vld [vmem:[#allocation2 + $0x120] sm:$0x1]
        %v1159 = vld [vmem:[#allocation2 + $0x28] sm:$0x80]
        %v1160 = vld [vmem:[#allocation2 + $0x120] sm:$0xff]
        %v1161 = vld [vmem:[#allocation2 + $0x128] sm:$0xff]
        %v1162 = vld [vmem:[#allocation2 + $0x130] sm:$0x1]
        %vm1163 = vsmask.f32 7424
        %v1165 = vshll.u32 %v1122, 16
        %v1167 = vrot.slane %v1165, 1
        %v1168 = vshrl.u32 %v1122, 16
        %v1170 = vor.u32 %v1168, %v1167
        %v1172 = vshll.u32 %v1123, 16
        %v1174 = vrot.slane %v1172, 1
        %v1175 = vsel %vm1163, %v1170, %v1174
        %v1176 = vshrl.u32 %v1123, 16
        %v1178 = vor.u32 %v1176, %v1174
        %v1180 = vshll.u32 %v1124, 16
        %v1182 = vrot.slane %v1180, 1
        %v1183 = vsel %vm1163, %v1178, %v1182
        %v1184 = vshrl.u32 %v1124, 16
        %v1186 = vor.u32 %v1184, %v1182
        %v1188 = vshll.u32 %v1125, 16
        %v1190 = vrot.slane %v1188, 1
        %v1191 = vsel %vm1163, %v1186, %v1190
        %v1192 = vshrl.u32 %v1125, 16
        %v1194 = vor.u32 %v1192, %v1190
        %v1196 = vshll.u32 %v1126, 16
        %v1198 = vrot.slane %v1196, 1
        %v1199 = vsel %vm1163, %v1194, %v1198
        %v1200 = vshrl.u32 %v1126, 16
        %v1202 = vor.u32 %v1200, %v1198
        %v1204 = vshll.u32 %v1127, 16
        %v1206 = vrot.slane %v1204, 1
        %v1207 = vsel %vm1163, %v1202, %v1206
        %v1208 = vshrl.u32 %v1127, 16
        %v1210 = vor.u32 %v1208, %v1206
        %v1212 = vshll.u32 %v1128, 16
        %v1214 = vrot.slane %v1212, 1
        %v1215 = vsel %vm1163, %v1210, %v1214
        %v1216 = vshrl.u32 %v1128, 16
        %v1218 = vor.u32 %v1216, %v1214
        %v1220 = vshll.u32 %v1129, 16
        %v1222 = vrot.slane %v1220, 1
        %v1223 = vsel %vm1163, %v1218, %v1222
        %v1224 = vshrl.u32 %v1129, 16
        %v1226 = vor.u32 %v1224, %v1222
        %v1228 = vshll.u32 %v1130, 16
        %v1230 = vrot.slane %v1228, 1
        %v1231 = vsel %vm1163, %v1226, %v1230
        %v1232 = vshrl.u32 %v1130, 16
        %v1234 = vor.u32 %v1232, %v1230
        %v1236 = vshll.u32 %v1131, 16
        %v1238 = vrot.slane %v1236, 1
        %v1239 = vsel %vm1163, %v1234, %v1238
        %v1240 = vshrl.u32 %v1131, 16
        %v1242 = vor.u32 %v1240, %v1238
        %v1244 = vshll.u32 %v1132, 16
        %v1246 = vrot.slane %v1244, 1
        %v1247 = vsel %vm1163, %v1242, %v1246
        %v1248 = vshrl.u32 %v1132, 16
        %v1250 = vor.u32 %v1248, %v1246
        %v1252 = vshll.u32 %v1133, 16
        %v1254 = vrot.slane %v1252, 1
        %v1255 = vsel %vm1163, %v1250, %v1254
        %v1256 = vshrl.u32 %v1133, 16
        %v1258 = vor.u32 %v1256, %v1254
        %v1260 = vshll.u32 %v1134, 16
        %v1262 = vrot.slane %v1260, 1
        %v1263 = vsel %vm1163, %v1258, %v1262
        %v1264 = vshrl.u32 %v1134, 16
        %v1266 = vor.u32 %v1264, %v1262
        %v1268 = vshll.u32 %v1135, 16
        %v1270 = vrot.slane %v1268, 1
        %v1271 = vsel %vm1163, %v1266, %v1270
        %v1272 = vshrl.u32 %v1135, 16
        %v1274 = vor.u32 %v1272, %v1270
        %v1276 = vshll.u32 %v1136, 16
        %v1278 = vrot.slane %v1276, 1
        %v1279 = vsel %vm1163, %v1274, %v1278
        %v1280 = vshrl.u32 %v1136, 16
        %v1282 = vor.u32 %v1280, %v1278
        %v1284 = vshll.u32 %v1137, 16
        %v1286 = vrot.slane %v1284, 1
        %v1287 = vsel %vm1163, %v1282, %v1286
        %v1288 = vshrl.u32 %v1137, 16
        %v1290 = vor.u32 %v1288, %v1286
        %v1292 = vshll.u32 %v1138, 16
        %v1294 = vrot.slane %v1292, 1
        %v1295 = vsel %vm1163, %v1290, %v1294
        %v1296 = vshrl.u32 %v1138, 16
        %v1298 = vor.u32 %v1296, %v1294
        %v1300 = vshll.u32 %v1139, 16
        %v1302 = vrot.slane %v1300, 1
        %v1303 = vsel %vm1163, %v1298, %v1302
        %v1304 = vshrl.u32 %v1139, 16
        %v1306 = vor.u32 %v1304, %v1302
        %v1308 = vshll.u32 %v1140, 16
        %v1310 = vrot.slane %v1308, 1
        %v1311 = vsel %vm1163, %v1306, %v1310
        %v1312 = vshrl.u32 %v1140, 16
        %v1314 = vor.u32 %v1312, %v1310
        %v1316 = vshll.u32 %v1141, 16
        %v1318 = vrot.slane %v1316, 1
        %v1319 = vsel %vm1163, %v1314, %v1318
        %v1320 = vshrl.u32 %v1141, 16
        %v1322 = vor.u32 %v1320, %v1318
        %v1324 = vshll.u32 %v1142, 16
        %v1326 = vrot.slane %v1324, 1
        %v1327 = vsel %vm1163, %v1322, %v1326
        %v1328 = vshrl.u32 %v1142, 16
        %v1330 = vor.u32 %v1328, %v1326
        %v1332 = vshll.u32 %v1143, 16
        %v1334 = vrot.slane %v1332, 1
        %v1335 = vsel %vm1163, %v1330, %v1334
        %v1336 = vshrl.u32 %v1143, 16
        %v1338 = vor.u32 %v1336, %v1334
        %v1340 = vshll.u32 %v1144, 16
        %v1342 = vrot.slane %v1340, 1
        %v1343 = vsel %vm1163, %v1338, %v1342
        %v1344 = vshrl.u32 %v1144, 16
        %v1346 = vor.u32 %v1344, %v1342
        %v1348 = vshll.u32 %v1145, 16
        %v1350 = vrot.slane %v1348, 1
        %v1351 = vsel %vm1163, %v1346, %v1350
        %v1352 = vshrl.u32 %v1145, 16
        %v1354 = vor.u32 %v1352, %v1350
        %v1356 = vshll.u32 %v1146, 16
        %v1358 = vrot.slane %v1356, 1
        %v1359 = vsel %vm1163, %v1354, %v1358
        %v1360 = vshrl.u32 %v1146, 16
        %v1362 = vor.u32 %v1360, %v1358
        %v1364 = vshll.u32 %v1147, 16
        %v1366 = vrot.slane %v1364, 1
        %v1367 = vsel %vm1163, %v1362, %v1366
        %v1368 = vshrl.u32 %v1147, 16
        %v1370 = vor.u32 %v1368, %v1366
        %v1372 = vshll.u32 %v1148, 16
        %v1374 = vrot.slane %v1372, 1
        %v1375 = vsel %vm1163, %v1370, %v1374
        %v1376 = vshrl.u32 %v1148, 16
        %v1378 = vor.u32 %v1376, %v1374
        %v1380 = vshll.u32 %v1149, 16
        %v1382 = vrot.slane %v1380, 1
        %v1383 = vsel %vm1163, %v1378, %v1382
        %v1384 = vshrl.u32 %v1149, 16
        %v1386 = vor.u32 %v1384, %v1382
        %v1388 = vshll.u32 %v1150, 16
        %v1390 = vrot.slane %v1388, 1
        %v1391 = vsel %vm1163, %v1386, %v1390
        %v1392 = vshrl.u32 %v1150, 16
        %v1394 = vor.u32 %v1392, %v1390
        %v1396 = vshll.u32 %v1151, 16
        %v1398 = vrot.slane %v1396, 1
        %v1399 = vsel %vm1163, %v1394, %v1398
        %v1400 = vshrl.u32 %v1151, 16
        %v1402 = vor.u32 %v1400, %v1398
        %v1404 = vshll.u32 %v1152, 16
        %v1406 = vrot.slane %v1404, 1
        %v1407 = vsel %vm1163, %v1402, %v1406
        %v1408 = vshrl.u32 %v1152, 16
        %v1410 = vor.u32 %v1408, %v1406
        %v1412 = vshll.u32 %v1153, 16
        %v1414 = vrot.slane %v1412, 1
        %v1415 = vsel %vm1163, %v1410, %v1414
        %v1416 = vshrl.u32 %v1153, 16
        %v1418 = vor.u32 %v1416, %v1414
        %1419 = vrot.lane.b32.xlu0 %v1167, 8
        %v1420 = vpop.permute.xlu0 %1419
        %1421 = vrot.lane.b32.xlu0 %v1175, 8
        %v1422 = vpop.permute.xlu0 %1421
        %1423 = vrot.lane.b32.xlu0 %v1183, 8
        %v1424 = vpop.permute.xlu0 %1423
        %1425 = vrot.lane.b32.xlu0 %v1191, 8
        %v1426 = vpop.permute.xlu0 %1425
        %1427 = vrot.lane.b32.xlu0 %v1199, 8
        %v1428 = vpop.permute.xlu0 %1427
        %1429 = vrot.lane.b32.xlu0 %v1207, 8
        %v1430 = vpop.permute.xlu0 %1429
        %1431 = vrot.lane.b32.xlu0 %v1215, 8
        %v1432 = vpop.permute.xlu0 %1431
        %1433 = vrot.lane.b32.xlu0 %v1223, 8
        %v1434 = vpop.permute.xlu0 %1433
        %1435 = vrot.lane.b32.xlu0 %v1231, 8
        %v1436 = vpop.permute.xlu0 %1435
        %1437 = vrot.lane.b32.xlu0 %v1239, 8
        %v1438 = vpop.permute.xlu0 %1437
        %1439 = vrot.lane.b32.xlu0 %v1247, 8
        %v1440 = vpop.permute.xlu0 %1439
        %1441 = vrot.lane.b32.xlu0 %v1255, 8
        %v1442 = vpop.permute.xlu0 %1441
        %1443 = vrot.lane.b32.xlu0 %v1263, 8
        %v1444 = vpop.permute.xlu0 %1443
        %1445 = vrot.lane.b32.xlu0 %v1271, 8
        %v1446 = vpop.permute.xlu0 %1445
        %1447 = vrot.lane.b32.xlu0 %v1279, 8
        %v1448 = vpop.permute.xlu0 %1447
        %1449 = vrot.lane.b32.xlu0 %v1287, 8
        %v1450 = vpop.permute.xlu0 %1449
        %1451 = vrot.lane.b32.xlu0 %v1295, 8
        %v1452 = vpop.permute.xlu0 %1451
        %1453 = vrot.lane.b32.xlu0 %v1303, 8
        %v1454 = vpop.permute.xlu0 %1453
        %1455 = vrot.lane.b32.xlu0 %v1311, 8
        %v1456 = vpop.permute.xlu0 %1455
        %1457 = vrot.lane.b32.xlu0 %v1319, 8
        %v1458 = vpop.permute.xlu0 %1457
        %1459 = vrot.lane.b32.xlu0 %v1327, 8
        %v1460 = vpop.permute.xlu0 %1459
        %1461 = vrot.lane.b32.xlu0 %v1335, 8
        %v1462 = vpop.permute.xlu0 %1461
        %1463 = vrot.lane.b32.xlu0 %v1343, 8
        %v1464 = vpop.permute.xlu0 %1463
        %1465 = vrot.lane.b32.xlu0 %v1351, 8
        %v1466 = vpop.permute.xlu0 %1465
        %1467 = vrot.lane.b32.xlu0 %v1359, 8
        %v1468 = vpop.permute.xlu0 %1467
        %1469 = vrot.lane.b32.xlu0 %v1367, 8
        %v1470 = vpop.permute.xlu0 %1469
        %1471 = vrot.lane.b32.xlu0 %v1375, 8
        %v1472 = vpop.permute.xlu0 %1471
        %1473 = vrot.lane.b32.xlu0 %v1383, 8
        %v1474 = vpop.permute.xlu0 %1473
        %1475 = vrot.lane.b32.xlu0 %v1391, 8
        %v1476 = vpop.permute.xlu0 %1475
        %1477 = vrot.lane.b32.xlu0 %v1399, 8
        %v1478 = vpop.permute.xlu0 %1477
        %1479 = vrot.lane.b32.xlu0 %v1407, 8
        %v1480 = vpop.permute.xlu0 %1479
        %1481 = vrot.lane.b32.xlu0 %v1415, 8
        %v1482 = vpop.permute.xlu0 %1481
        %1483 = vrot.lane.b32.xlu0 %v1418, 8
        %v1484 = vpop.permute.xlu0 %1483
        %vm1518 = vcmask 1046528
        %v1519 = vrot.slane %v1122, 1
        %v1520 = vrot.slane %v1123, 1
        %v1521 = vsel %vm1518, %v1519, %v1520
        %v1522 = vrot.slane %v1124, 1
        %v1523 = vsel %vm1518, %v1520, %v1522
        %v1524 = vrot.slane %v1125, 1
        %v1525 = vsel %vm1518, %v1522, %v1524
        %v1526 = vrot.slane %v1126, 1
        %v1527 = vsel %vm1518, %v1524, %v1526
        %v1528 = vrot.slane %v1127, 1
        %v1529 = vsel %vm1518, %v1526, %v1528
        %v1530 = vrot.slane %v1128, 1
        %v1531 = vsel %vm1518, %v1528, %v1530
        %v1532 = vrot.slane %v1129, 1
        %v1533 = vsel %vm1518, %v1530, %v1532
        %v1534 = vrot.slane %v1130, 1
        %v1535 = vsel %vm1518, %v1532, %v1534
        %v1536 = vrot.slane %v1131, 1
        %v1537 = vsel %vm1518, %v1534, %v1536
        %v1538 = vrot.slane %v1132, 1
        %v1539 = vsel %vm1518, %v1536, %v1538
        %v1540 = vrot.slane %v1133, 1
        %v1541 = vsel %vm1518, %v1538, %v1540
        %v1542 = vrot.slane %v1134, 1
        %v1543 = vsel %vm1518, %v1540, %v1542
        %v1544 = vrot.slane %v1135, 1
        %v1545 = vsel %vm1518, %v1542, %v1544
        %v1546 = vrot.slane %v1136, 1
        %v1547 = vsel %vm1518, %v1544, %v1546
        %v1548 = vrot.slane %v1137, 1
        %v1549 = vsel %vm1518, %v1546, %v1548
        %v1550 = vrot.slane %v1138, 1
        %v1551 = vsel %vm1518, %v1548, %v1550
        %v1552 = vrot.slane %v1139, 1
        %v1553 = vsel %vm1518, %v1550, %v1552
        %v1554 = vrot.slane %v1140, 1
        %v1555 = vsel %vm1518, %v1552, %v1554
        %v1556 = vrot.slane %v1141, 1
        %v1557 = vsel %vm1518, %v1554, %v1556
        %v1558 = vrot.slane %v1142, 1
        %v1559 = vsel %vm1518, %v1556, %v1558
        %v1560 = vrot.slane %v1143, 1
        %v1561 = vsel %vm1518, %v1558, %v1560
        %v1562 = vrot.slane %v1144, 1
        %v1563 = vsel %vm1518, %v1560, %v1562
        %v1564 = vrot.slane %v1145, 1
        %v1565 = vsel %vm1518, %v1562, %v1564
        %v1566 = vrot.slane %v1146, 1
        %v1567 = vsel %vm1518, %v1564, %v1566
        %v1568 = vrot.slane %v1147, 1
        %v1569 = vsel %vm1518, %v1566, %v1568
        %v1570 = vrot.slane %v1148, 1
        %v1571 = vsel %vm1518, %v1568, %v1570
        %v1572 = vrot.slane %v1149, 1
        %v1573 = vsel %vm1518, %v1570, %v1572
        %v1574 = vrot.slane %v1150, 1
        %v1575 = vsel %vm1518, %v1572, %v1574
        %v1576 = vrot.slane %v1151, 1
        %v1577 = vsel %vm1518, %v1574, %v1576
        %v1578 = vrot.slane %v1152, 1
        %v1579 = vsel %vm1518, %v1576, %v1578
        %v1580 = vrot.slane %v1153, 1
        %v1581 = vsel %vm1518, %v1578, %v1580
        %v1582 = vrot.slane %v1154, 1
        %v1583 = vsel %vm1518, %v1580, %v1582
        %1584 = vrot.lane.b32.xlu0 %v1519, 16
        %v1585 = vpop.permute.xlu0 %1584
        %1586 = vrot.lane.b32.xlu0 %v1521, 16
        %v1587 = vpop.permute.xlu0 %1586
        %1588 = vrot.lane.b32.xlu0 %v1523, 16
        %v1589 = vpop.permute.xlu0 %1588
        %1590 = vrot.lane.b32.xlu0 %v1525, 16
        %v1591 = vpop.permute.xlu0 %1590
        %1592 = vrot.lane.b32.xlu0 %v1527, 16
        %v1593 = vpop.permute.xlu0 %1592
        %1594 = vrot.lane.b32.xlu0 %v1529, 16
        %v1595 = vpop.permute.xlu0 %1594
        %1596 = vrot.lane.b32.xlu0 %v1531, 16
        %v1597 = vpop.permute.xlu0 %1596
        %1598 = vrot.lane.b32.xlu0 %v1533, 16
        %v1599 = vpop.permute.xlu0 %1598
        %1600 = vrot.lane.b32.xlu0 %v1535, 16
        %v1601 = vpop.permute.xlu0 %1600
        %1602 = vrot.lane.b32.xlu0 %v1537, 16
        %v1603 = vpop.permute.xlu0 %1602
        %1604 = vrot.lane.b32.xlu0 %v1539, 16
        %v1605 = vpop.permute.xlu0 %1604
        %1606 = vrot.lane.b32.xlu0 %v1541, 16
        %v1607 = vpop.permute.xlu0 %1606
        %1608 = vrot.lane.b32.xlu0 %v1543, 16
        %v1609 = vpop.permute.xlu0 %1608
        %1610 = vrot.lane.b32.xlu0 %v1545, 16
        %v1611 = vpop.permute.xlu0 %1610
        %1612 = vrot.lane.b32.xlu0 %v1547, 16
        %v1613 = vpop.permute.xlu0 %1612
        %1614 = vrot.lane.b32.xlu0 %v1549, 16
        %v1615 = vpop.permute.xlu0 %1614
        %1616 = vrot.lane.b32.xlu0 %v1551, 16
        %v1617 = vpop.permute.xlu0 %1616
        %1618 = vrot.lane.b32.xlu0 %v1553, 16
        %v1619 = vpop.permute.xlu0 %1618
        %1620 = vrot.lane.b32.xlu0 %v1555, 16
        %v1621 = vpop.permute.xlu0 %1620
        %1622 = vrot.lane.b32.xlu0 %v1557, 16
        %v1623 = vpop.permute.xlu0 %1622
        %1624 = vrot.lane.b32.xlu0 %v1559, 16
        %v1625 = vpop.permute.xlu0 %1624
        %1626 = vrot.lane.b32.xlu0 %v1561, 16
        %v1627 = vpop.permute.xlu0 %1626
        %1628 = vrot.lane.b32.xlu0 %v1563, 16
        %v1629 = vpop.permute.xlu0 %1628
        %1630 = vrot.lane.b32.xlu0 %v1565, 16
        %v1631 = vpop.permute.xlu0 %1630
        %1632 = vrot.lane.b32.xlu0 %v1567, 16
        %v1633 = vpop.permute.xlu0 %1632
        %1634 = vrot.lane.b32.xlu0 %v1569, 16
        %v1635 = vpop.permute.xlu0 %1634
        %1636 = vrot.lane.b32.xlu0 %v1571, 16
        %v1637 = vpop.permute.xlu0 %1636
        %1638 = vrot.lane.b32.xlu0 %v1573, 16
        %v1639 = vpop.permute.xlu0 %1638
        %1640 = vrot.lane.b32.xlu0 %v1575, 16
        %v1641 = vpop.permute.xlu0 %1640
        %1642 = vrot.lane.b32.xlu0 %v1577, 16
        %v1643 = vpop.permute.xlu0 %1642
        %1644 = vrot.lane.b32.xlu0 %v1579, 16
        %v1645 = vpop.permute.xlu0 %1644
        %1646 = vrot.lane.b32.xlu0 %v1581, 16
        %v1647 = vpop.permute.xlu0 %1646
        %1648 = vrot.lane.b32.xlu0 %v1583, 16
        %v1649 = vpop.permute.xlu0 %1648
        %1653 = vrot.lane.b32.xlu0 %v1155, 24
        %v1654 = vpop.permute.xlu0 %1653
        %1655 = vrot.lane.b32.xlu0 %v1124, 24
        %v1656 = vpop.permute.xlu0 %1655
        %1657 = vrot.lane.b32.xlu0 %v1125, 24
        %v1658 = vpop.permute.xlu0 %1657
        %1659 = vrot.lane.b32.xlu0 %v1126, 24
        %v1660 = vpop.permute.xlu0 %1659
        %1661 = vrot.lane.b32.xlu0 %v1127, 24
        %v1662 = vpop.permute.xlu0 %1661
        %1663 = vrot.lane.b32.xlu0 %v1128, 24
        %v1664 = vpop.permute.xlu0 %1663
        %1665 = vrot.lane.b32.xlu0 %v1129, 24
        %v1666 = vpop.permute.xlu0 %1665
        %1667 = vrot.lane.b32.xlu0 %v1130, 24
        %v1668 = vpop.permute.xlu0 %1667
        %1669 = vrot.lane.b32.xlu0 %v1131, 24
        %v1670 = vpop.permute.xlu0 %1669
        %1671 = vrot.lane.b32.xlu0 %v1132, 24
        %v1672 = vpop.permute.xlu0 %1671
        %1673 = vrot.lane.b32.xlu0 %v1133, 24
        %v1674 = vpop.permute.xlu0 %1673
        %1675 = vrot.lane.b32.xlu0 %v1134, 24
        %v1676 = vpop.permute.xlu0 %1675
        %1677 = vrot.lane.b32.xlu0 %v1135, 24
        %v1678 = vpop.permute.xlu0 %1677
        %1679 = vrot.lane.b32.xlu0 %v1136, 24
        %v1680 = vpop.permute.xlu0 %1679
        %1681 = vrot.lane.b32.xlu0 %v1137, 24
        %v1682 = vpop.permute.xlu0 %1681
        %1683 = vrot.lane.b32.xlu0 %v1138, 24
        %v1684 = vpop.permute.xlu0 %1683
        %1685 = vrot.lane.b32.xlu0 %v1139, 24
        %v1686 = vpop.permute.xlu0 %1685
        %1687 = vrot.lane.b32.xlu0 %v1140, 24
        %v1688 = vpop.permute.xlu0 %1687
        %1689 = vrot.lane.b32.xlu0 %v1141, 24
        %v1690 = vpop.permute.xlu0 %1689
        %1691 = vrot.lane.b32.xlu0 %v1142, 24
        %v1692 = vpop.permute.xlu0 %1691
        %1693 = vrot.lane.b32.xlu0 %v1143, 24
        %v1694 = vpop.permute.xlu0 %1693
        %1695 = vrot.lane.b32.xlu0 %v1144, 24
        %v1696 = vpop.permute.xlu0 %1695
        %1697 = vrot.lane.b32.xlu0 %v1145, 24
        %v1698 = vpop.permute.xlu0 %1697
        %1699 = vrot.lane.b32.xlu0 %v1146, 24
        %v1700 = vpop.permute.xlu0 %1699
        %1701 = vrot.lane.b32.xlu0 %v1147, 24
        %v1702 = vpop.permute.xlu0 %1701
        %1703 = vrot.lane.b32.xlu0 %v1148, 24
        %v1704 = vpop.permute.xlu0 %1703
        %1705 = vrot.lane.b32.xlu0 %v1149, 24
        %v1706 = vpop.permute.xlu0 %1705
        %1707 = vrot.lane.b32.xlu0 %v1150, 24
        %v1708 = vpop.permute.xlu0 %1707
        %1709 = vrot.lane.b32.xlu0 %v1151, 24
        %v1710 = vpop.permute.xlu0 %1709
        %1711 = vrot.lane.b32.xlu0 %v1152, 24
        %v1712 = vpop.permute.xlu0 %1711
        %1713 = vrot.lane.b32.xlu0 %v1153, 24
        %v1714 = vpop.permute.xlu0 %1713
        %1715 = vrot.lane.b32.xlu0 %v1156, 24
        %v1716 = vpop.permute.xlu0 %1715
        %1717 = vrot.lane.b32.xlu0 %v1157, 24
        %v1718 = vpop.permute.xlu0 %1717
        %v1720 = vshll.u32 %v1156, 16
        %v1722 = vrot.slane %v1720, 1
        %v1723 = vsel %vm1163, %v1418, %v1722
        %v1724 = vshrl.u32 %v1156, 16
        %v1726 = vor.u32 %v1724, %v1722
        %v1728 = vshll.u32 %v1157, 16
        %v1730 = vrot.slane %v1728, 1
        %v1731 = vsel %vm1163, %v1726, %v1730
        %v1732 = vshrl.u32 %v1157, 16
        %v1734 = vor.u32 %v1732, %v1730
        %1735 = vrot.lane.b32.xlu0 %v1182, 32
        %v1736 = vpop.permute.xlu0 %1735
        %1737 = vrot.lane.b32.xlu0 %v1191, 32
        %v1738 = vpop.permute.xlu0 %1737
        %1739 = vrot.lane.b32.xlu0 %v1199, 32
        %v1740 = vpop.permute.xlu0 %1739
        %1741 = vrot.lane.b32.xlu0 %v1207, 32
        %v1742 = vpop.permute.xlu0 %1741
        %1743 = vrot.lane.b32.xlu0 %v1215, 32
        %v1744 = vpop.permute.xlu0 %1743
        %1745 = vrot.lane.b32.xlu0 %v1223, 32
        %v1746 = vpop.permute.xlu0 %1745
        %1747 = vrot.lane.b32.xlu0 %v1231, 32
        %v1748 = vpop.permute.xlu0 %1747
        %1749 = vrot.lane.b32.xlu0 %v1239, 32
        %v1750 = vpop.permute.xlu0 %1749
        %1751 = vrot.lane.b32.xlu0 %v1247, 32
        %v1752 = vpop.permute.xlu0 %1751
        %1753 = vrot.lane.b32.xlu0 %v1255, 32
        %v1754 = vpop.permute.xlu0 %1753
        %1755 = vrot.lane.b32.xlu0 %v1263, 32
        %v1756 = vpop.permute.xlu0 %1755
        %1757 = vrot.lane.b32.xlu0 %v1271, 32
        %v1758 = vpop.permute.xlu0 %1757
        %1759 = vrot.lane.b32.xlu0 %v1279, 32
        %v1760 = vpop.permute.xlu0 %1759
        %1761 = vrot.lane.b32.xlu0 %v1287, 32
        %v1762 = vpop.permute.xlu0 %1761
        %1763 = vrot.lane.b32.xlu0 %v1295, 32
        %v1764 = vpop.permute.xlu0 %1763
        %1765 = vrot.lane.b32.xlu0 %v1303, 32
        %v1766 = vpop.permute.xlu0 %1765
        %1767 = vrot.lane.b32.xlu0 %v1311, 32
        %v1768 = vpop.permute.xlu0 %1767
        %1769 = vrot.lane.b32.xlu0 %v1319, 32
        %v1770 = vpop.permute.xlu0 %1769
        %1771 = vrot.lane.b32.xlu0 %v1327, 32
        %v1772 = vpop.permute.xlu0 %1771
        %1773 = vrot.lane.b32.xlu0 %v1335, 32
        %v1774 = vpop.permute.xlu0 %1773
        %1775 = vrot.lane.b32.xlu0 %v1343, 32
        %v1776 = vpop.permute.xlu0 %1775
        %1777 = vrot.lane.b32.xlu0 %v1351, 32
        %v1778 = vpop.permute.xlu0 %1777
        %1779 = vrot.lane.b32.xlu0 %v1359, 32
        %v1780 = vpop.permute.xlu0 %1779
        %1781 = vrot.lane.b32.xlu0 %v1367, 32
        %v1782 = vpop.permute.xlu0 %1781
        %1783 = vrot.lane.b32.xlu0 %v1375, 32
        %v1784 = vpop.permute.xlu0 %1783
        %1785 = vrot.lane.b32.xlu0 %v1383, 32
        %v1786 = vpop.permute.xlu0 %1785
        %1787 = vrot.lane.b32.xlu0 %v1391, 32
        %v1788 = vpop.permute.xlu0 %1787
        %1789 = vrot.lane.b32.xlu0 %v1399, 32
        %v1790 = vpop.permute.xlu0 %1789
        %1791 = vrot.lane.b32.xlu0 %v1407, 32
        %v1792 = vpop.permute.xlu0 %1791
        %1793 = vrot.lane.b32.xlu0 %v1415, 32
        %v1794 = vpop.permute.xlu0 %1793
        %1795 = vrot.lane.b32.xlu0 %v1723, 32
        %v1796 = vpop.permute.xlu0 %1795
        %1797 = vrot.lane.b32.xlu0 %v1731, 32
        %v1798 = vpop.permute.xlu0 %1797
        %1799 = vrot.lane.b32.xlu0 %v1734, 32
        %v1800 = vpop.permute.xlu0 %1799
        %v1802 = vrot.slane %v1156, 1
        %v1803 = vsel %vm1518, %v1580, %v1802
        %v1804 = vrot.slane %v1157, 1
        %v1805 = vsel %vm1518, %v1802, %v1804
        %v1806 = vrot.slane %v1158, 1
        %v1807 = vsel %vm1518, %v1804, %v1806
        %1808 = vrot.lane.b32.xlu0 %v1522, 40
        %v1809 = vpop.permute.xlu0 %1808
        %1810 = vrot.lane.b32.xlu0 %v1525, 40
        %v1811 = vpop.permute.xlu0 %1810
        %1812 = vrot.lane.b32.xlu0 %v1527, 40
        %v1813 = vpop.permute.xlu0 %1812
        %1814 = vrot.lane.b32.xlu0 %v1529, 40
        %v1815 = vpop.permute.xlu0 %1814
        %1816 = vrot.lane.b32.xlu0 %v1531, 40
        %v1817 = vpop.permute.xlu0 %1816
        %1818 = vrot.lane.b32.xlu0 %v1533, 40
        %v1819 = vpop.permute.xlu0 %1818
        %1820 = vrot.lane.b32.xlu0 %v1535, 40
        %v1821 = vpop.permute.xlu0 %1820
        %1822 = vrot.lane.b32.xlu0 %v1537, 40
        %v1823 = vpop.permute.xlu0 %1822
        %1824 = vrot.lane.b32.xlu0 %v1539, 40
        %v1825 = vpop.permute.xlu0 %1824
        %1826 = vrot.lane.b32.xlu0 %v1541, 40
        %v1827 = vpop.permute.xlu0 %1826
        %1828 = vrot.lane.b32.xlu0 %v1543, 40
        %v1829 = vpop.permute.xlu0 %1828
        %1830 = vrot.lane.b32.xlu0 %v1545, 40
        %v1831 = vpop.permute.xlu0 %1830
        %1832 = vrot.lane.b32.xlu0 %v1547, 40
        %v1833 = vpop.permute.xlu0 %1832
        %1834 = vrot.lane.b32.xlu0 %v1549, 40
        %v1835 = vpop.permute.xlu0 %1834
        %1836 = vrot.lane.b32.xlu0 %v1551, 40
        %v1837 = vpop.permute.xlu0 %1836
        %1838 = vrot.lane.b32.xlu0 %v1553, 40
        %v1839 = vpop.permute.xlu0 %1838
        %1840 = vrot.lane.b32.xlu0 %v1555, 40
        %v1841 = vpop.permute.xlu0 %1840
        %1842 = vrot.lane.b32.xlu0 %v1557, 40
        %v1843 = vpop.permute.xlu0 %1842
        %1844 = vrot.lane.b32.xlu0 %v1559, 40
        %v1845 = vpop.permute.xlu0 %1844
        %1846 = vrot.lane.b32.xlu0 %v1561, 40
        %v1847 = vpop.permute.xlu0 %1846
        %1848 = vrot.lane.b32.xlu0 %v1563, 40
        %v1849 = vpop.permute.xlu0 %1848
        %1850 = vrot.lane.b32.xlu0 %v1565, 40
        %v1851 = vpop.permute.xlu0 %1850
        %1852 = vrot.lane.b32.xlu0 %v1567, 40
        %v1853 = vpop.permute.xlu0 %1852
        %1854 = vrot.lane.b32.xlu0 %v1569, 40
        %v1855 = vpop.permute.xlu0 %1854
        %1856 = vrot.lane.b32.xlu0 %v1571, 40
        %v1857 = vpop.permute.xlu0 %1856
        %1858 = vrot.lane.b32.xlu0 %v1573, 40
        %v1859 = vpop.permute.xlu0 %1858
        %1860 = vrot.lane.b32.xlu0 %v1575, 40
        %v1861 = vpop.permute.xlu0 %1860
        %1862 = vrot.lane.b32.xlu0 %v1577, 40
        %v1863 = vpop.permute.xlu0 %1862
        %1864 = vrot.lane.b32.xlu0 %v1579, 40
        %v1865 = vpop.permute.xlu0 %1864
        %1866 = vrot.lane.b32.xlu0 %v1581, 40
        %v1867 = vpop.permute.xlu0 %1866
        %1868 = vrot.lane.b32.xlu0 %v1803, 40
        %v1869 = vpop.permute.xlu0 %1868
        %1870 = vrot.lane.b32.xlu0 %v1805, 40
        %v1871 = vpop.permute.xlu0 %1870
        %1872 = vrot.lane.b32.xlu0 %v1807, 40
        %v1873 = vpop.permute.xlu0 %1872
        %1877 = vrot.lane.b32.xlu0 %v1159, 48
        %v1878 = vpop.permute.xlu0 %1877
        %1879 = vrot.lane.b32.xlu0 %v1126, 48
        %v1880 = vpop.permute.xlu0 %1879
        %1881 = vrot.lane.b32.xlu0 %v1127, 48
        %v1882 = vpop.permute.xlu0 %1881
        %1883 = vrot.lane.b32.xlu0 %v1128, 48
        %v1884 = vpop.permute.xlu0 %1883
        %1885 = vrot.lane.b32.xlu0 %v1129, 48
        %v1886 = vpop.permute.xlu0 %1885
        %1887 = vrot.lane.b32.xlu0 %v1130, 48
        %v1888 = vpop.permute.xlu0 %1887
        %1889 = vrot.lane.b32.xlu0 %v1131, 48
        %v1890 = vpop.permute.xlu0 %1889
        %1891 = vrot.lane.b32.xlu0 %v1132, 48
        %v1892 = vpop.permute.xlu0 %1891
        %1893 = vrot.lane.b32.xlu0 %v1133, 48
        %v1894 = vpop.permute.xlu0 %1893
        %1895 = vrot.lane.b32.xlu0 %v1134, 48
        %v1896 = vpop.permute.xlu0 %1895
        %1897 = vrot.lane.b32.xlu0 %v1135, 48
        %v1898 = vpop.permute.xlu0 %1897
        %1899 = vrot.lane.b32.xlu0 %v1136, 48
        %v1900 = vpop.permute.xlu0 %1899
        %1901 = vrot.lane.b32.xlu0 %v1137, 48
        %v1902 = vpop.permute.xlu0 %1901
        %1903 = vrot.lane.b32.xlu0 %v1138, 48
        %v1904 = vpop.permute.xlu0 %1903
        %1905 = vrot.lane.b32.xlu0 %v1139, 48
        %v1906 = vpop.permute.xlu0 %1905
        %1907 = vrot.lane.b32.xlu0 %v1140, 48
        %v1908 = vpop.permute.xlu0 %1907
        %1909 = vrot.lane.b32.xlu0 %v1141, 48
        %v1910 = vpop.permute.xlu0 %1909
        %1911 = vrot.lane.b32.xlu0 %v1142, 48
        %v1912 = vpop.permute.xlu0 %1911
        %1913 = vrot.lane.b32.xlu0 %v1143, 48
        %v1914 = vpop.permute.xlu0 %1913
        %1915 = vrot.lane.b32.xlu0 %v1144, 48
        %v1916 = vpop.permute.xlu0 %1915
        %1917 = vrot.lane.b32.xlu0 %v1145, 48
        %v1918 = vpop.permute.xlu0 %1917
        %1919 = vrot.lane.b32.xlu0 %v1146, 48
        %v1920 = vpop.permute.xlu0 %1919
        %1921 = vrot.lane.b32.xlu0 %v1147, 48
        %v1922 = vpop.permute.xlu0 %1921
        %1923 = vrot.lane.b32.xlu0 %v1148, 48
        %v1924 = vpop.permute.xlu0 %1923
        %1925 = vrot.lane.b32.xlu0 %v1149, 48
        %v1926 = vpop.permute.xlu0 %1925
        %1927 = vrot.lane.b32.xlu0 %v1150, 48
        %v1928 = vpop.permute.xlu0 %1927
        %1929 = vrot.lane.b32.xlu0 %v1151, 48
        %v1930 = vpop.permute.xlu0 %1929
        %1931 = vrot.lane.b32.xlu0 %v1152, 48
        %v1932 = vpop.permute.xlu0 %1931
        %1933 = vrot.lane.b32.xlu0 %v1153, 48
        %v1934 = vpop.permute.xlu0 %1933
        %1935 = vrot.lane.b32.xlu0 %v1156, 48
        %v1936 = vpop.permute.xlu0 %1935
        %1937 = vrot.lane.b32.xlu0 %v1157, 48
        %v1938 = vpop.permute.xlu0 %1937
        %1939 = vrot.lane.b32.xlu0 %v1160, 48
        %v1940 = vpop.permute.xlu0 %1939
        %1941 = vrot.lane.b32.xlu0 %v1161, 48
        %v1942 = vpop.permute.xlu0 %1941
        %v1944 = vshll.u32 %v1160, 16
        %v1946 = vrot.slane %v1944, 1
        %v1947 = vsel %vm1163, %v1734, %v1946
        %v1948 = vshrl.u32 %v1160, 16
        %v1950 = vor.u32 %v1948, %v1946
        %v1952 = vshll.u32 %v1161, 16
        %v1954 = vrot.slane %v1952, 1
        %v1955 = vsel %vm1163, %v1950, %v1954
        %v1956 = vshrl.u32 %v1161, 16
        %v1958 = vor.u32 %v1956, %v1954
        %1959 = vrot.lane.b32.xlu0 %v1198, 56
        %v1960 = vpop.permute.xlu0 %1959
        %1961 = vrot.lane.b32.xlu0 %v1207, 56
        %v1962 = vpop.permute.xlu0 %1961
        %1963 = vrot.lane.b32.xlu0 %v1215, 56
        %v1964 = vpop.permute.xlu0 %1963
        %1965 = vrot.lane.b32.xlu0 %v1223, 56
        %v1966 = vpop.permute.xlu0 %1965
        %1967 = vrot.lane.b32.xlu0 %v1231, 56
        %v1968 = vpop.permute.xlu0 %1967
        %1969 = vrot.lane.b32.xlu0 %v1239, 56
        %v1970 = vpop.permute.xlu0 %1969
        %1971 = vrot.lane.b32.xlu0 %v1247, 56
        %v1972 = vpop.permute.xlu0 %1971
        %1973 = vrot.lane.b32.xlu0 %v1255, 56
        %v1974 = vpop.permute.xlu0 %1973
        %1975 = vrot.lane.b32.xlu0 %v1263, 56
        %v1976 = vpop.permute.xlu0 %1975
        %1977 = vrot.lane.b32.xlu0 %v1271, 56
        %v1978 = vpop.permute.xlu0 %1977
        %1979 = vrot.lane.b32.xlu0 %v1279, 56
        %v1980 = vpop.permute.xlu0 %1979
        %1981 = vrot.lane.b32.xlu0 %v1287, 56
        %v1982 = vpop.permute.xlu0 %1981
        %1983 = vrot.lane.b32.xlu0 %v1295, 56
        %v1984 = vpop.permute.xlu0 %1983
        %1985 = vrot.lane.b32.xlu0 %v1303, 56
        %v1986 = vpop.permute.xlu0 %1985
        %1987 = vrot.lane.b32.xlu0 %v1311, 56
        %v1988 = vpop.permute.xlu0 %1987
        %1989 = vrot.lane.b32.xlu0 %v1319, 56
        %v1990 = vpop.permute.xlu0 %1989
        %1991 = vrot.lane.b32.xlu0 %v1327, 56
        %v1992 = vpop.permute.xlu0 %1991
        %1993 = vrot.lane.b32.xlu0 %v1335, 56
        %v1994 = vpop.permute.xlu0 %1993
        %1995 = vrot.lane.b32.xlu0 %v1343, 56
        %v1996 = vpop.permute.xlu0 %1995
        %1997 = vrot.lane.b32.xlu0 %v1351, 56
        %v1998 = vpop.permute.xlu0 %1997
        %1999 = vrot.lane.b32.xlu0 %v1359, 56
        %v2000 = vpop.permute.xlu0 %1999
        %2001 = vrot.lane.b32.xlu0 %v1367, 56
        %v2002 = vpop.permute.xlu0 %2001
        %2003 = vrot.lane.b32.xlu0 %v1375, 56
        %v2004 = vpop.permute.xlu0 %2003
        %2005 = vrot.lane.b32.xlu0 %v1383, 56
        %v2006 = vpop.permute.xlu0 %2005
        %2007 = vrot.lane.b32.xlu0 %v1391, 56
        %v2008 = vpop.permute.xlu0 %2007
        %2009 = vrot.lane.b32.xlu0 %v1399, 56
        %v2010 = vpop.permute.xlu0 %2009
        %2011 = vrot.lane.b32.xlu0 %v1407, 56
        %v2012 = vpop.permute.xlu0 %2011
        %2013 = vrot.lane.b32.xlu0 %v1415, 56
        %v2014 = vpop.permute.xlu0 %2013
        %2015 = vrot.lane.b32.xlu0 %v1723, 56
        %v2016 = vpop.permute.xlu0 %2015
        %2017 = vrot.lane.b32.xlu0 %v1731, 56
        %v2018 = vpop.permute.xlu0 %2017
        %2019 = vrot.lane.b32.xlu0 %v1947, 56
        %v2020 = vpop.permute.xlu0 %2019
        %2021 = vrot.lane.b32.xlu0 %v1955, 56
        %v2022 = vpop.permute.xlu0 %2021
        %2023 = vrot.lane.b32.xlu0 %v1958, 56
        %v2024 = vpop.permute.xlu0 %2023
        %v2026 = vrot.slane %v1160, 1
        %v2027 = vsel %vm1518, %v1804, %v2026
        %v2028 = vrot.slane %v1161, 1
        %v2029 = vsel %vm1518, %v2026, %v2028
        %v2030 = vrot.slane %v1162, 1
        %v2031 = vsel %vm1518, %v2028, %v2030
        %2032 = vrot.lane.b32.xlu0 %v1526, 64
        %v2033 = vpop.permute.xlu0 %2032
        %2034 = vrot.lane.b32.xlu0 %v1529, 64
        %v2035 = vpop.permute.xlu0 %2034
        %2036 = vrot.lane.b32.xlu0 %v1531, 64
        %v2037 = vpop.permute.xlu0 %2036
        %2038 = vrot.lane.b32.xlu0 %v1533, 64
        %v2039 = vpop.permute.xlu0 %2038
        %2040 = vrot.lane.b32.xlu0 %v1535, 64
        %v2041 = vpop.permute.xlu0 %2040
        %2042 = vrot.lane.b32.xlu0 %v1537, 64
        %v2043 = vpop.permute.xlu0 %2042
        %2044 = vrot.lane.b32.xlu0 %v1539, 64
        %v2045 = vpop.permute.xlu0 %2044
        %2046 = vrot.lane.b32.xlu0 %v1541, 64
        %v2047 = vpop.permute.xlu0 %2046
        %2048 = vrot.lane.b32.xlu0 %v1543, 64
        %v2049 = vpop.permute.xlu0 %2048
        %2050 = vrot.lane.b32.xlu0 %v1545, 64
        %v2051 = vpop.permute.xlu0 %2050
        %2052 = vrot.lane.b32.xlu0 %v1547, 64
        %v2053 = vpop.permute.xlu0 %2052
        %2054 = vrot.lane.b32.xlu0 %v1549, 64
        %v2055 = vpop.permute.xlu0 %2054
        %2056 = vrot.lane.b32.xlu0 %v1551, 64
        %v2057 = vpop.permute.xlu0 %2056
        %2058 = vrot.lane.b32.xlu0 %v1553, 64
        %v2059 = vpop.permute.xlu0 %2058
        %2060 = vrot.lane.b32.xlu0 %v1555, 64
        %v2061 = vpop.permute.xlu0 %2060
        %2062 = vrot.lane.b32.xlu0 %v1557, 64
        %v2063 = vpop.permute.xlu0 %2062
        %2064 = vrot.lane.b32.xlu0 %v1559, 64
        %v2065 = vpop.permute.xlu0 %2064
        %2066 = vrot.lane.b32.xlu0 %v1561, 64
        %v2067 = vpop.permute.xlu0 %2066
        %2068 = vrot.lane.b32.xlu0 %v1563, 64
        %v2069 = vpop.permute.xlu0 %2068
        %2070 = vrot.lane.b32.xlu0 %v1565, 64
        %v2071 = vpop.permute.xlu0 %2070
        %2072 = vrot.lane.b32.xlu0 %v1567, 64
        %v2073 = vpop.permute.xlu0 %2072
        %2074 = vrot.lane.b32.xlu0 %v1569, 64
        %v2075 = vpop.permute.xlu0 %2074
        %2076 = vrot.lane.b32.xlu0 %v1571, 64
        %v2077 = vpop.permute.xlu0 %2076
        %2078 = vrot.lane.b32.xlu0 %v1573, 64
        %v2079 = vpop.permute.xlu0 %2078
        %2080 = vrot.lane.b32.xlu0 %v1575, 64
        %v2081 = vpop.permute.xlu0 %2080
        %2082 = vrot.lane.b32.xlu0 %v1577, 64
        %v2083 = vpop.permute.xlu0 %2082
        %2084 = vrot.lane.b32.xlu0 %v1579, 64
        %v2085 = vpop.permute.xlu0 %2084
        %2086 = vrot.lane.b32.xlu0 %v1581, 64
        %v2087 = vpop.permute.xlu0 %2086
        %2088 = vrot.lane.b32.xlu0 %v1803, 64
        %v2089 = vpop.permute.xlu0 %2088
        %2090 = vrot.lane.b32.xlu0 %v1805, 64
        %v2091 = vpop.permute.xlu0 %2090
        %2092 = vrot.lane.b32.xlu0 %v2027, 64
        %v2093 = vpop.permute.xlu0 %2092
        %2094 = vrot.lane.b32.xlu0 %v2029, 64
        %v2095 = vpop.permute.xlu0 %2094
        %2096 = vrot.lane.b32.xlu0 %v2031, 64
        %v2097 = vpop.permute.xlu0 %2096
        %v2100 = vsel %vm1048, %v1121, %v1420
        %v2102 = vsel %vm1048, %v1122, %v1422
        %v2104 = vsel %vm1048, %v1123, %v1424
        %v2106 = vsel %vm1048, %v1124, %v1426
        %v2108 = vsel %vm1048, %v1125, %v1428
        %v2110 = vsel %vm1048, %v1126, %v1430
        %v2112 = vsel %vm1048, %v1127, %v1432
        %v2114 = vsel %vm1048, %v1128, %v1434
        %v2116 = vsel %vm1048, %v1129, %v1436
        %v2118 = vsel %vm1048, %v1130, %v1438
        %v2120 = vsel %vm1048, %v1131, %v1440
        %v2122 = vsel %vm1048, %v1132, %v1442
        %v2124 = vsel %vm1048, %v1133, %v1444
        %v2126 = vsel %vm1048, %v1134, %v1446
        %v2128 = vsel %vm1048, %v1135, %v1448
        %v2130 = vsel %vm1048, %v1136, %v1450
        %v2132 = vsel %vm1048, %v1137, %v1452
        %v2134 = vsel %vm1048, %v1138, %v1454
        %v2136 = vsel %vm1048, %v1139, %v1456
        %v2138 = vsel %vm1048, %v1140, %v1458
        %v2140 = vsel %vm1048, %v1141, %v1460
        %v2142 = vsel %vm1048, %v1142, %v1462
        %v2144 = vsel %vm1048, %v1143, %v1464
        %v2146 = vsel %vm1048, %v1144, %v1466
        %v2148 = vsel %vm1048, %v1145, %v1468
        %v2150 = vsel %vm1048, %v1146, %v1470
        %v2152 = vsel %vm1048, %v1147, %v1472
        %v2154 = vsel %vm1048, %v1148, %v1474
        %v2156 = vsel %vm1048, %v1149, %v1476
        %v2158 = vsel %vm1048, %v1150, %v1478
        %v2160 = vsel %vm1048, %v1151, %v1480
        %v2162 = vsel %vm1048, %v1152, %v1482
        %v2164 = vsel %vm1048, %v1153, %v1484
        %v2166 = vsel %vm517, %v2100, %v1585
        %v2168 = vsel %vm517, %v2102, %v1587
        %v2170 = vsel %vm517, %v2104, %v1589
        %v2172 = vsel %vm517, %v2106, %v1591
        %v2174 = vsel %vm517, %v2108, %v1593
        %v2176 = vsel %vm517, %v2110, %v1595
        %v2178 = vsel %vm517, %v2112, %v1597
        %v2180 = vsel %vm517, %v2114, %v1599
        %v2182 = vsel %vm517, %v2116, %v1601
        %v2184 = vsel %vm517, %v2118, %v1603
        %v2186 = vsel %vm517, %v2120, %v1605
        %v2188 = vsel %vm517, %v2122, %v1607
        %v2190 = vsel %vm517, %v2124, %v1609
        %v2192 = vsel %vm517, %v2126, %v1611
        %v2194 = vsel %vm517, %v2128, %v1613
        %v2196 = vsel %vm517, %v2130, %v1615
        %v2198 = vsel %vm517, %v2132, %v1617
        %v2200 = vsel %vm517, %v2134, %v1619
        %v2202 = vsel %vm517, %v2136, %v1621
        %v2204 = vsel %vm517, %v2138, %v1623
        %v2206 = vsel %vm517, %v2140, %v1625
        %v2208 = vsel %vm517, %v2142, %v1627
        %v2210 = vsel %vm517, %v2144, %v1629
        %v2212 = vsel %vm517, %v2146, %v1631
        %v2214 = vsel %vm517, %v2148, %v1633
        %v2216 = vsel %vm517, %v2150, %v1635
        %v2218 = vsel %vm517, %v2152, %v1637
        %v2220 = vsel %vm517, %v2154, %v1639
        %v2222 = vsel %vm517, %v2156, %v1641
        %v2224 = vsel %vm517, %v2158, %v1643
        %v2226 = vsel %vm517, %v2160, %v1645
        %v2228 = vsel %vm517, %v2162, %v1647
        %v2230 = vsel %vm517, %v2164, %v1649
        %vm2231 = vcmask 195584
        %v2233 = vsel %vm2231, %v2166, %v1654
        %v2235 = vsel %vm2231, %v2168, %v1656
        %v2237 = vsel %vm2231, %v2170, %v1658
        %v2239 = vsel %vm2231, %v2172, %v1660
        %v2241 = vsel %vm2231, %v2174, %v1662
        %v2243 = vsel %vm2231, %v2176, %v1664
        %v2245 = vsel %vm2231, %v2178, %v1666
        %v2247 = vsel %vm2231, %v2180, %v1668
        %v2249 = vsel %vm2231, %v2182, %v1670
        %v2251 = vsel %vm2231, %v2184, %v1672
        %v2253 = vsel %vm2231, %v2186, %v1674
        %v2255 = vsel %vm2231, %v2188, %v1676
        %v2257 = vsel %vm2231, %v2190, %v1678
        %v2259 = vsel %vm2231, %v2192, %v1680
        %v2261 = vsel %vm2231, %v2194, %v1682
        %v2263 = vsel %vm2231, %v2196, %v1684
        %v2265 = vsel %vm2231, %v2198, %v1686
        %v2267 = vsel %vm2231, %v2200, %v1688
        %v2269 = vsel %vm2231, %v2202, %v1690
        %v2271 = vsel %vm2231, %v2204, %v1692
        %v2273 = vsel %vm2231, %v2206, %v1694
        %v2275 = vsel %vm2231, %v2208, %v1696
        %v2277 = vsel %vm2231, %v2210, %v1698
        %v2279 = vsel %vm2231, %v2212, %v1700
        %v2281 = vsel %vm2231, %v2214, %v1702
        %v2283 = vsel %vm2231, %v2216, %v1704
        %v2285 = vsel %vm2231, %v2218, %v1706
        %v2287 = vsel %vm2231, %v2220, %v1708
        %v2289 = vsel %vm2231, %v2222, %v1710
        %v2291 = vsel %vm2231, %v2224, %v1712
        %v2293 = vsel %vm2231, %v2226, %v1714
        %v2295 = vsel %vm2231, %v2228, %v1716
        %v2297 = vsel %vm2231, %v2230, %v1718
        %vm2298 = vcmask 261120
        %v2300 = vsel %vm2298, %v2233, %v1736
        %v2302 = vsel %vm2298, %v2235, %v1738
        %v2304 = vsel %vm2298, %v2237, %v1740
        %v2306 = vsel %vm2298, %v2239, %v1742
        %v2308 = vsel %vm2298, %v2241, %v1744
        %v2310 = vsel %vm2298, %v2243, %v1746
        %v2312 = vsel %vm2298, %v2245, %v1748
        %v2314 = vsel %vm2298, %v2247, %v1750
        %v2316 = vsel %vm2298, %v2249, %v1752
        %v2318 = vsel %vm2298, %v2251, %v1754
        %v2320 = vsel %vm2298, %v2253, %v1756
        %v2322 = vsel %vm2298, %v2255, %v1758
        %v2324 = vsel %vm2298, %v2257, %v1760
        %v2326 = vsel %vm2298, %v2259, %v1762
        %v2328 = vsel %vm2298, %v2261, %v1764
        %v2330 = vsel %vm2298, %v2263, %v1766
        %v2332 = vsel %vm2298, %v2265, %v1768
        %v2334 = vsel %vm2298, %v2267, %v1770
        %v2336 = vsel %vm2298, %v2269, %v1772
        %v2338 = vsel %vm2298, %v2271, %v1774
        %v2340 = vsel %vm2298, %v2273, %v1776
        %v2342 = vsel %vm2298, %v2275, %v1778
        %v2344 = vsel %vm2298, %v2277, %v1780
        %v2346 = vsel %vm2298, %v2279, %v1782
        %v2348 = vsel %vm2298, %v2281, %v1784
        %v2350 = vsel %vm2298, %v2283, %v1786
        %v2352 = vsel %vm2298, %v2285, %v1788
        %v2354 = vsel %vm2298, %v2287, %v1790
        %v2356 = vsel %vm2298, %v2289, %v1792
        %v2358 = vsel %vm2298, %v2291, %v1794
        %v2360 = vsel %vm2298, %v2293, %v1796
        %v2362 = vsel %vm2298, %v2295, %v1798
        %v2364 = vsel %vm2298, %v2297, %v1800
        %vm2365 = vcmask 326656
        %v2367 = vsel %vm2365, %v2300, %v1809
        %v2369 = vsel %vm2365, %v2302, %v1811
        %v2371 = vsel %vm2365, %v2304, %v1813
        %v2373 = vsel %vm2365, %v2306, %v1815
        %v2375 = vsel %vm2365, %v2308, %v1817
        %v2377 = vsel %vm2365, %v2310, %v1819
        %v2379 = vsel %vm2365, %v2312, %v1821
        %v2381 = vsel %vm2365, %v2314, %v1823
        %v2383 = vsel %vm2365, %v2316, %v1825
        %v2385 = vsel %vm2365, %v2318, %v1827
        %v2387 = vsel %vm2365, %v2320, %v1829
        %v2389 = vsel %vm2365, %v2322, %v1831
        %v2391 = vsel %vm2365, %v2324, %v1833
        %v2393 = vsel %vm2365, %v2326, %v1835
        %v2395 = vsel %vm2365, %v2328, %v1837
        %v2397 = vsel %vm2365, %v2330, %v1839
        %v2399 = vsel %vm2365, %v2332, %v1841
        %v2401 = vsel %vm2365, %v2334, %v1843
        %v2403 = vsel %vm2365, %v2336, %v1845
        %v2405 = vsel %vm2365, %v2338, %v1847
        %v2407 = vsel %vm2365, %v2340, %v1849
        %v2409 = vsel %vm2365, %v2342, %v1851
        %v2411 = vsel %vm2365, %v2344, %v1853
        %v2413 = vsel %vm2365, %v2346, %v1855
        %v2415 = vsel %vm2365, %v2348, %v1857
        %v2417 = vsel %vm2365, %v2350, %v1859
        %v2419 = vsel %vm2365, %v2352, %v1861
        %v2421 = vsel %vm2365, %v2354, %v1863
        %v2423 = vsel %vm2365, %v2356, %v1865
        %v2425 = vsel %vm2365, %v2358, %v1867
        %v2427 = vsel %vm2365, %v2360, %v1869
        %v2429 = vsel %vm2365, %v2362, %v1871
        %v2431 = vsel %vm2365, %v2364, %v1873
        %vm2432 = vcmask 392192
        %v2434 = vsel %vm2432, %v2367, %v1878
        %v2436 = vsel %vm2432, %v2369, %v1880
        %v2438 = vsel %vm2432, %v2371, %v1882
        %v2440 = vsel %vm2432, %v2373, %v1884
        %v2442 = vsel %vm2432, %v2375, %v1886
        %v2444 = vsel %vm2432, %v2377, %v1888
        %v2446 = vsel %vm2432, %v2379, %v1890
        %v2448 = vsel %vm2432, %v2381, %v1892
        %v2450 = vsel %vm2432, %v2383, %v1894
        %v2452 = vsel %vm2432, %v2385, %v1896
        %v2454 = vsel %vm2432, %v2387, %v1898
        %v2456 = vsel %vm2432, %v2389, %v1900
        %v2458 = vsel %vm2432, %v2391, %v1902
        %v2460 = vsel %vm2432, %v2393, %v1904
        %v2462 = vsel %vm2432, %v2395, %v1906
        %v2464 = vsel %vm2432, %v2397, %v1908
        %v2466 = vsel %vm2432, %v2399, %v1910
        %v2468 = vsel %vm2432, %v2401, %v1912
        %v2470 = vsel %vm2432, %v2403, %v1914
        %v2472 = vsel %vm2432, %v2405, %v1916
        %v2474 = vsel %vm2432, %v2407, %v1918
        %v2476 = vsel %vm2432, %v2409, %v1920
        %v2478 = vsel %vm2432, %v2411, %v1922
        %v2480 = vsel %vm2432, %v2413, %v1924
        %v2482 = vsel %vm2432, %v2415, %v1926
        %v2484 = vsel %vm2432, %v2417, %v1928
        %v2486 = vsel %vm2432, %v2419, %v1930
        %v2488 = vsel %vm2432, %v2421, %v1932
        %v2490 = vsel %vm2432, %v2423, %v1934
        %v2492 = vsel %vm2432, %v2425, %v1936
        %v2494 = vsel %vm2432, %v2427, %v1938
        %v2496 = vsel %vm2432, %v2429, %v1940
        %v2498 = vsel %vm2432, %v2431, %v1942
        %vm2499 = vcmask 457728
        %v2501 = vsel %vm2499, %v2434, %v1960
        %v2503 = vsel %vm2499, %v2436, %v1962
        %v2505 = vsel %vm2499, %v2438, %v1964
        %v2507 = vsel %vm2499, %v2440, %v1966
        %v2509 = vsel %vm2499, %v2442, %v1968
        %v2511 = vsel %vm2499, %v2444, %v1970
        %v2513 = vsel %vm2499, %v2446, %v1972
        %v2515 = vsel %vm2499, %v2448, %v1974
        %v2517 = vsel %vm2499, %v2450, %v1976
        %v2519 = vsel %vm2499, %v2452, %v1978
        %v2521 = vsel %vm2499, %v2454, %v1980
        %v2523 = vsel %vm2499, %v2456, %v1982
        %v2525 = vsel %vm2499, %v2458, %v1984
        %v2527 = vsel %vm2499, %v2460, %v1986
        %v2529 = vsel %vm2499, %v2462, %v1988
        %v2531 = vsel %vm2499, %v2464, %v1990
        %v2533 = vsel %vm2499, %v2466, %v1992
        %v2535 = vsel %vm2499, %v2468, %v1994
        %v2537 = vsel %vm2499, %v2470, %v1996
        %v2539 = vsel %vm2499, %v2472, %v1998
        %v2541 = vsel %vm2499, %v2474, %v2000
        %v2543 = vsel %vm2499, %v2476, %v2002
        %v2545 = vsel %vm2499, %v2478, %v2004
        %v2547 = vsel %vm2499, %v2480, %v2006
        %v2549 = vsel %vm2499, %v2482, %v2008
        %v2551 = vsel %vm2499, %v2484, %v2010
        %v2553 = vsel %vm2499, %v2486, %v2012
        %v2555 = vsel %vm2499, %v2488, %v2014
        %v2557 = vsel %vm2499, %v2490, %v2016
        %v2559 = vsel %vm2499, %v2492, %v2018
        %v2561 = vsel %vm2499, %v2494, %v2020
        %v2563 = vsel %vm2499, %v2496, %v2022
        %v2565 = vsel %vm2499, %v2498, %v2024
        %vm2566 = vcmask 523264
        %v2568 = vsel %vm2566, %v2501, %v2033
        %v2570 = vsel %vm2566, %v2503, %v2035
        %v2572 = vsel %vm2566, %v2505, %v2037
        %v2574 = vsel %vm2566, %v2507, %v2039
        %v2576 = vsel %vm2566, %v2509, %v2041
        %v2578 = vsel %vm2566, %v2511, %v2043
        %v2580 = vsel %vm2566, %v2513, %v2045
        %v2582 = vsel %vm2566, %v2515, %v2047
        %v2584 = vsel %vm2566, %v2517, %v2049
        %v2586 = vsel %vm2566, %v2519, %v2051
        %v2588 = vsel %vm2566, %v2521, %v2053
        %v2590 = vsel %vm2566, %v2523, %v2055
        %v2592 = vsel %vm2566, %v2525, %v2057
        %v2594 = vsel %vm2566, %v2527, %v2059
        %v2596 = vsel %vm2566, %v2529, %v2061
        %v2598 = vsel %vm2566, %v2531, %v2063
        %v2600 = vsel %vm2566, %v2533, %v2065
        %v2602 = vsel %vm2566, %v2535, %v2067
        %v2604 = vsel %vm2566, %v2537, %v2069
        %v2606 = vsel %vm2566, %v2539, %v2071
        %v2608 = vsel %vm2566, %v2541, %v2073
        %v2610 = vsel %vm2566, %v2543, %v2075
        %v2612 = vsel %vm2566, %v2545, %v2077
        %v2614 = vsel %vm2566, %v2547, %v2079
        %v2616 = vsel %vm2566, %v2549, %v2081
        %v2618 = vsel %vm2566, %v2551, %v2083
        %v2620 = vsel %vm2566, %v2553, %v2085
        %v2622 = vsel %vm2566, %v2555, %v2087
        %v2624 = vsel %vm2566, %v2557, %v2089
        %v2626 = vsel %vm2566, %v2559, %v2091
        %v2628 = vsel %vm2566, %v2561, %v2093
        %v2630 = vsel %vm2566, %v2563, %v2095
        %v2632 = vsel %vm2566, %v2565, %v2097
        %v2633 = vld [vmem:[%s3] sm:$0xf]
        %v2634 = vld [vmem:[%s3 + $0x4] sm:$0xf]
        %v2635 = vld [vmem:[%s3 + $0x8] sm:$0xf]
        %v2636 = vld [vmem:[%s3 + $0xc] sm:$0xf]
        %v2637 = vld [vmem:[%s3 + $0x10] sm:$0xf]
        %v2638 = vld [vmem:[%s3 + $0x14] sm:$0xf]
        %v2639 = vld [vmem:[%s3 + $0x18] sm:$0xf]
        %v2640 = vld [vmem:[%s3 + $0x1c] sm:$0xf]
        %v2641 = vld [vmem:[%s3 + $0x20] sm:$0xf]
        %v2642 = vld [vmem:[%s4] sm:$0x1]
        %v2644 = vlaneseq
        %v2645 = vshrl.u32 %v2644, 7
        %v2646 = vsub.s32 0, %v2645
        %v2647 = vrot.slane %v2642, %v2646
        %vm2649 = vsmask.f32 256
        %v2650 = vshrl.u32 %v2568, 16
        %v2652 = vrot.slane %v2650, 7
        %v2653 = vshrl.u32 %v2570, 16
        %v2655 = vrot.slane %v2653, 7
        %v2656 = vshll.u32 %v2570, 16
        %v2658 = vor.u32 %v2655, %v2656
        %v2659 = vsel %vm2649, %v2652, %v2658
        %v2660 = vshrl.u32 %v2572, 16
        %v2662 = vrot.slane %v2660, 7
        %v2663 = vshll.u32 %v2572, 16
        %v2665 = vor.u32 %v2662, %v2663
        %v2666 = vsel %vm2649, %v2655, %v2665
        %v2667 = vshrl.u32 %v2574, 16
        %v2669 = vrot.slane %v2667, 7
        %v2670 = vshll.u32 %v2574, 16
        %v2672 = vor.u32 %v2669, %v2670
        %v2673 = vsel %vm2649, %v2662, %v2672
        %v2674 = vshrl.u32 %v2576, 16
        %v2676 = vrot.slane %v2674, 7
        %v2677 = vshll.u32 %v2576, 16
        %v2679 = vor.u32 %v2676, %v2677
        %v2680 = vsel %vm2649, %v2669, %v2679
        %v2681 = vshrl.u32 %v2578, 16
        %v2683 = vrot.slane %v2681, 7
        %v2684 = vshll.u32 %v2578, 16
        %v2686 = vor.u32 %v2683, %v2684
        %v2687 = vsel %vm2649, %v2676, %v2686
        %v2688 = vshrl.u32 %v2580, 16
        %v2690 = vrot.slane %v2688, 7
        %v2691 = vshll.u32 %v2580, 16
        %v2693 = vor.u32 %v2690, %v2691
        %v2694 = vsel %vm2649, %v2683, %v2693
        %v2695 = vshrl.u32 %v2582, 16
        %v2697 = vrot.slane %v2695, 7
        %v2698 = vshll.u32 %v2582, 16
        %v2700 = vor.u32 %v2697, %v2698
        %v2701 = vsel %vm2649, %v2690, %v2700
        %v2702 = vshrl.u32 %v2584, 16
        %v2704 = vrot.slane %v2702, 7
        %v2705 = vshll.u32 %v2584, 16
        %v2707 = vor.u32 %v2704, %v2705
        %v2708 = vsel %vm2649, %v2697, %v2707
        %v2709 = vshrl.u32 %v2586, 16
        %v2711 = vrot.slane %v2709, 7
        %v2712 = vshll.u32 %v2586, 16
        %v2714 = vor.u32 %v2711, %v2712
        %v2715 = vsel %vm2649, %v2704, %v2714
        %v2716 = vshrl.u32 %v2588, 16
        %v2718 = vrot.slane %v2716, 7
        %v2719 = vshll.u32 %v2588, 16
        %v2721 = vor.u32 %v2718, %v2719
        %v2722 = vsel %vm2649, %v2711, %v2721
        %v2723 = vshrl.u32 %v2590, 16
        %v2725 = vrot.slane %v2723, 7
        %v2726 = vshll.u32 %v2590, 16
        %v2728 = vor.u32 %v2725, %v2726
        %v2729 = vsel %vm2649, %v2718, %v2728
        %v2730 = vshrl.u32 %v2592, 16
        %v2732 = vrot.slane %v2730, 7
        %v2733 = vshll.u32 %v2592, 16
        %v2735 = vor.u32 %v2732, %v2733
        %v2736 = vsel %vm2649, %v2725, %v2735
        %v2737 = vshrl.u32 %v2594, 16
        %v2739 = vrot.slane %v2737, 7
        %v2740 = vshll.u32 %v2594, 16
        %v2742 = vor.u32 %v2739, %v2740
        %v2743 = vsel %vm2649, %v2732, %v2742
        %v2744 = vshrl.u32 %v2596, 16
        %v2746 = vrot.slane %v2744, 7
        %v2747 = vshll.u32 %v2596, 16
        %v2749 = vor.u32 %v2746, %v2747
        %v2750 = vsel %vm2649, %v2739, %v2749
        %v2751 = vshrl.u32 %v2598, 16
        %v2753 = vrot.slane %v2751, 7
        %v2754 = vshll.u32 %v2598, 16
        %v2756 = vor.u32 %v2753, %v2754
        %v2757 = vsel %vm2649, %v2746, %v2756
        %v2758 = vshrl.u32 %v2600, 16
        %v2760 = vrot.slane %v2758, 7
        %v2761 = vshll.u32 %v2600, 16
        %v2763 = vor.u32 %v2760, %v2761
        %v2764 = vsel %vm2649, %v2753, %v2763
        %v2765 = vshrl.u32 %v2602, 16
        %v2767 = vrot.slane %v2765, 7
        %v2768 = vshll.u32 %v2602, 16
        %v2770 = vor.u32 %v2767, %v2768
        %v2771 = vsel %vm2649, %v2760, %v2770
        %v2772 = vshrl.u32 %v2604, 16
        %v2774 = vrot.slane %v2772, 7
        %v2775 = vshll.u32 %v2604, 16
        %v2777 = vor.u32 %v2774, %v2775
        %v2778 = vsel %vm2649, %v2767, %v2777
        %v2779 = vshrl.u32 %v2606, 16
        %v2781 = vrot.slane %v2779, 7
        %v2782 = vshll.u32 %v2606, 16
        %v2784 = vor.u32 %v2781, %v2782
        %v2785 = vsel %vm2649, %v2774, %v2784
        %v2786 = vshrl.u32 %v2608, 16
        %v2788 = vrot.slane %v2786, 7
        %v2789 = vshll.u32 %v2608, 16
        %v2791 = vor.u32 %v2788, %v2789
        %v2792 = vsel %vm2649, %v2781, %v2791
        %v2793 = vshrl.u32 %v2610, 16
        %v2795 = vrot.slane %v2793, 7
        %v2796 = vshll.u32 %v2610, 16
        %v2798 = vor.u32 %v2795, %v2796
        %v2799 = vsel %vm2649, %v2788, %v2798
        %v2800 = vshrl.u32 %v2612, 16
        %v2802 = vrot.slane %v2800, 7
        %v2803 = vshll.u32 %v2612, 16
        %v2805 = vor.u32 %v2802, %v2803
        %v2806 = vsel %vm2649, %v2795, %v2805
        %v2807 = vshrl.u32 %v2614, 16
        %v2809 = vrot.slane %v2807, 7
        %v2810 = vshll.u32 %v2614, 16
        %v2812 = vor.u32 %v2809, %v2810
        %v2813 = vsel %vm2649, %v2802, %v2812
        %v2814 = vshrl.u32 %v2616, 16
        %v2816 = vrot.slane %v2814, 7
        %v2817 = vshll.u32 %v2616, 16
        %v2819 = vor.u32 %v2816, %v2817
        %v2820 = vsel %vm2649, %v2809, %v2819
        %v2821 = vshrl.u32 %v2618, 16
        %v2823 = vrot.slane %v2821, 7
        %v2824 = vshll.u32 %v2618, 16
        %v2826 = vor.u32 %v2823, %v2824
        %v2827 = vsel %vm2649, %v2816, %v2826
        %v2828 = vshrl.u32 %v2620, 16
        %v2830 = vrot.slane %v2828, 7
        %v2831 = vshll.u32 %v2620, 16
        %v2833 = vor.u32 %v2830, %v2831
        %v2834 = vsel %vm2649, %v2823, %v2833
        %v2835 = vshrl.u32 %v2622, 16
        %v2837 = vrot.slane %v2835, 7
        %v2838 = vshll.u32 %v2622, 16
        %v2840 = vor.u32 %v2837, %v2838
        %v2841 = vsel %vm2649, %v2830, %v2840
        %v2842 = vshrl.u32 %v2624, 16
        %v2844 = vrot.slane %v2842, 7
        %v2845 = vshll.u32 %v2624, 16
        %v2847 = vor.u32 %v2844, %v2845
        %v2848 = vsel %vm2649, %v2837, %v2847
        %v2849 = vshrl.u32 %v2626, 16
        %v2851 = vrot.slane %v2849, 7
        %v2852 = vshll.u32 %v2626, 16
        %v2854 = vor.u32 %v2851, %v2852
        %v2855 = vsel %vm2649, %v2844, %v2854
        %v2856 = vshrl.u32 %v2628, 16
        %v2858 = vrot.slane %v2856, 7
        %v2859 = vshll.u32 %v2628, 16
        %v2861 = vor.u32 %v2858, %v2859
        %v2862 = vsel %vm2649, %v2851, %v2861
        %v2863 = vshrl.u32 %v2630, 16
        %v2865 = vrot.slane %v2863, 7
        %v2866 = vshll.u32 %v2630, 16
        %v2868 = vor.u32 %v2865, %v2866
        %v2869 = vsel %vm2649, %v2858, %v2868
        %v2870 = vshrl.u32 %v2632, 16
        %v2872 = vrot.slane %v2870, 7
        %v2873 = vshll.u32 %v2632, 16
        %v2875 = vor.u32 %v2872, %v2873
        %v2876 = vsel %vm2649, %v2865, %v2875
        %v2886 = vunpack.c.l.b16 %v2633
        %v2887 = vunpack.c.l.b16 %v2634
        %v2888 = vunpack.c.l.b16 %v2635
        %v2889 = vunpack.c.l.b16 %v2636
        %v2890 = vunpack.c.l.b16 %v2637
        %v2891 = vunpack.c.l.b16 %v2638
        %v2892 = vunpack.c.l.b16 %v2639
        %v2893 = vunpack.c.l.b16 %v2640
        %v2894 = vunpack.c.l.b16 %v2641
        %v2895 = vpack.c.b16 %v2887, %v2886
        %v2896 = vpack.c.b16 %v2889, %v2888
        %v2897 = vpack.c.b16 %v2891, %v2890
        %v2898 = vpack.c.b16 %v2893, %v2892
        %v2899 = vpack.c.b16 %v2894, %v2894
        %vm2904 = vcmask 588800
        %v2906 = vsel %vm2904, %v2659, 0
        %v2909 = vsel %vm2904, %v2666, 0
        %v2912 = vsel %vm2904, %v2673, 0
        %v2915 = vsel %vm2904, %v2680, 0
        %v2918 = vsel %vm2904, %v2687, 0
        %v2921 = vsel %vm2904, %v2694, 0
        %v2924 = vsel %vm2904, %v2701, 0
        %v2927 = vsel %vm2904, %v2708, 0
        %v2930 = vsel %vm2904, %v2715, 0
        %v2933 = vsel %vm2904, %v2722, 0
        %v2936 = vsel %vm2904, %v2729, 0
        %v2939 = vsel %vm2904, %v2736, 0
        %v2942 = vsel %vm2904, %v2743, 0
        %v2945 = vsel %vm2904, %v2750, 0
        %v2948 = vsel %vm2904, %v2757, 0
        %v2951 = vsel %vm2904, %v2764, 0
        %v2954 = vsel %vm2904, %v2771, 0
        %v2957 = vsel %vm2904, %v2778, 0
        %v2960 = vsel %vm2904, %v2785, 0
        %v2963 = vsel %vm2904, %v2792, 0
        %v2966 = vsel %vm2904, %v2799, 0
        %v2969 = vsel %vm2904, %v2806, 0
        %v2972 = vsel %vm2904, %v2813, 0
        %v2975 = vsel %vm2904, %v2820, 0
        %v2978 = vsel %vm2904, %v2827, 0
        %v2981 = vsel %vm2904, %v2834, 0
        %v2984 = vsel %vm2904, %v2841, 0
        %v2987 = vsel %vm2904, %v2848, 0
        %v2990 = vsel %vm2904, %v2855, 0
        %v2993 = vsel %vm2904, %v2862, 0
        %v2996 = vsel %vm2904, %v2869, 0
        %v2999 = vsel %vm2904, %v2876, 0
        %vm3001 = vcmask 1043456
        %v3003 = vsel %vm3001, %v2899, 0
        %3005 = vmatprep.subr.bf16.mxu0 0
        %3006 = vmatpush1.bf16.msra.mxu0 %v2895
        %3007 = vmatprep.subr.bf16.mxu0 0
        %3008 = vmatpush1.bf16.msra.mxu0 %v2896
        %3009 = vmatprep.subr.bf16.mxu0 0
        %3010 = vmatpush1.bf16.msra.mxu0 %v2897
        %3011 = vmatprep.subr.bf16.mxu0 0
        %3012 = vmatpush1.bf16.msra.mxu0 %v2898
        %3013 = vmatprep.subr.bf16.mxu0 0
        %3014 = vmatpush1.bf16.msra.mxu0 %v3003
        %3015 = vmatprep.subr.bf16.mxu0 0
        %3016 = vmatpush1.bf16.msra.mxu0 0
        %3017 = vmatprep.subr.bf16.mxu0 0
        %3018 = vmatpush1.bf16.msra.mxu0 0
        %3019 = vmatprep.subr.bf16.mxu0 0
        %3020 = vmatpush1.bf16.msra.mxu0 0
        %3021 = vmatprep.subr.bf16.mxu0 0
        %3022 = vmatpush1.bf16.msra.mxu0 0
        %3023 = vmatprep.subr.bf16.mxu0 0
        %3024 = vmatpush1.bf16.msra.mxu0 0
        %3025 = vmatprep.subr.bf16.mxu0 0
        %3026 = vmatpush1.bf16.msra.mxu0 0
        %3027 = vmatprep.subr.bf16.mxu0 0
        %3028 = vmatpush1.bf16.msra.mxu0 0
        %3029 = vmatprep.subr.bf16.mxu0 0
        %3030 = vmatpush1.bf16.msra.mxu0 0
        %3031 = vmatprep.subr.bf16.mxu0 0
        %3032 = vmatpush1.bf16.msra.mxu0 0
        %3033 = vmatprep.subr.bf16.mxu0 0
        %3034 = vmatpush1.bf16.msra.mxu0 0
        %3035 = vmatprep.subr.bf16.mxu0 0
        %3036 = vmatpush1.bf16.msra.mxu0 0
        %3037 = vmatprep.mubr.bf16.mxu0 0
        %3038 = vmatmul.mubr.bf16.gmra.mrb[0].mxu0 %v2906
        %v3039 = vpop.f32.mrb[0].mxu0
        %v3040 = vadd.f32 %v2647, %v3039
        %v3041 = vpop.f32.mrb[0].mxu0
        %v3042 = vpop.f32.mrb[0].mxu0
        %v3043 = vadd.f32 %v2647, %v3042
        %v3044 = vpop.f32.mrb[0].mxu0
        %3045 = vmatprep.mubr.bf16.mxu0 0
        %3046 = vmatmul.mubr.bf16.gmra.mrb[0].mxu0 %v2909
        %v3047 = vpop.f32.mrb[0].mxu0
        %v3048 = vadd.f32 %v2647, %v3047
        %v3049 = vpop.f32.mrb[0].mxu0
        %v3050 = vpop.f32.mrb[0].mxu0
        %v3051 = vadd.f32 %v2647, %v3050
        %v3052 = vpop.f32.mrb[0].mxu0
        %3053 = vmatprep.mubr.bf16.mxu0 0
        %3054 = vmatmul.mubr.bf16.gmra.mrb[0].mxu0 %v2912
        %v3055 = vpop.f32.mrb[0].mxu0
        %v3056 = vadd.f32 %v2647, %v3055
        %v3057 = vpop.f32.mrb[0].mxu0
        %v3058 = vpop.f32.mrb[0].mxu0
        %v3059 = vadd.f32 %v2647, %v3058
        %v3060 = vpop.f32.mrb[0].mxu0
        %3061 = vmatprep.mubr.bf16.mxu0 0
        %3062 = vmatmul.mubr.bf16.gmra.mrb[0].mxu0 %v2915
        %v3063 = vpop.f32.mrb[0].mxu0
        %v3064 = vadd.f32 %v2647, %v3063
        %v3065 = vpop.f32.mrb[0].mxu0
        %v3066 = vpop.f32.mrb[0].mxu0
        %v3067 = vadd.f32 %v2647, %v3066
        %v3068 = vpop.f32.mrb[0].mxu0
        %3069 = vmatprep.mubr.bf16.mxu0 0
        %3070 = vmatmul.mubr.bf16.gmra.mrb[0].mxu0 %v2918
        %v3071 = vpop.f32.mrb[0].mxu0
        %v3072 = vadd.f32 %v2647, %v3071
        %v3073 = vpop.f32.mrb[0].mxu0
        %v3074 = vpop.f32.mrb[0].mxu0
        %v3075 = vadd.f32 %v2647, %v3074
        %v3076 = vpop.f32.mrb[0].mxu0
        %3077 = vmatprep.mubr.bf16.mxu0 0
        %3078 = vmatmul.mubr.bf16.gmra.mrb[0].mxu0 %v2921
        %v3079 = vpop.f32.mrb[0].mxu0
        %v3080 = vadd.f32 %v2647, %v3079
        %v3081 = vpop.f32.mrb[0].mxu0
        %v3082 = vpop.f32.mrb[0].mxu0
        %v3083 = vadd.f32 %v2647, %v3082
        %v3084 = vpop.f32.mrb[0].mxu0
        %3085 = vmatprep.mubr.bf16.mxu0 0
        %3086 = vmatmul.mubr.bf16.gmra.mrb[0].mxu0 %v2924
        %v3087 = vpop.f32.mrb[0].mxu0
        %v3088 = vadd.f32 %v2647, %v3087
        %v3089 = vpop.f32.mrb[0].mxu0
        %v3090 = vpop.f32.mrb[0].mxu0
        %v3091 = vadd.f32 %v2647, %v3090
        %v3092 = vpop.f32.mrb[0].mxu0
        %3093 = vmatprep.mubr.bf16.mxu0 0
        %3094 = vmatmul.mubr.bf16.gmra.mrb[0].mxu0 %v2927
        %v3095 = vpop.f32.mrb[0].mxu0
        %v3096 = vadd.f32 %v2647, %v3095
        %v3097 = vpop.f32.mrb[0].mxu0
        %v3098 = vpop.f32.mrb[0].mxu0
        %v3099 = vadd.f32 %v2647, %v3098
        %v3100 = vpop.f32.mrb[0].mxu0
        %3101 = vmatprep.mubr.bf16.mxu0 0
        %3102 = vmatmul.mubr.bf16.gmra.mrb[0].mxu0 %v2930
        %v3103 = vpop.f32.mrb[0].mxu0
        %v3104 = vadd.f32 %v2647, %v3103
        %v3105 = vpop.f32.mrb[0].mxu0
        %v3106 = vpop.f32.mrb[0].mxu0
        %v3107 = vadd.f32 %v2647, %v3106
        %v3108 = vpop.f32.mrb[0].mxu0
        %3109 = vmatprep.mubr.bf16.mxu0 0
        %3110 = vmatmul.mubr.bf16.gmra.mrb[0].mxu0 %v2933
        %v3111 = vpop.f32.mrb[0].mxu0
        %v3112 = vadd.f32 %v2647, %v3111
        %v3113 = vpop.f32.mrb[0].mxu0
        %v3114 = vpop.f32.mrb[0].mxu0
        %v3115 = vadd.f32 %v2647, %v3114
        %v3116 = vpop.f32.mrb[0].mxu0
        %3117 = vmatprep.mubr.bf16.mxu0 0
        %3118 = vmatmul.mubr.bf16.gmra.mrb[0].mxu0 %v2936
        %v3119 = vpop.f32.mrb[0].mxu0
        %v3120 = vadd.f32 %v2647, %v3119
        %v3121 = vpop.f32.mrb[0].mxu0
        %v3122 = vpop.f32.mrb[0].mxu0
        %v3123 = vadd.f32 %v2647, %v3122
        %v3124 = vpop.f32.mrb[0].mxu0
        %3125 = vmatprep.mubr.bf16.mxu0 0
        %3126 = vmatmul.mubr.bf16.gmra.mrb[0].mxu0 %v2939
        %v3127 = vpop.f32.mrb[0].mxu0
        %v3128 = vadd.f32 %v2647, %v3127
        %v3129 = vpop.f32.mrb[0].mxu0
        %v3130 = vpop.f32.mrb[0].mxu0
        %v3131 = vadd.f32 %v2647, %v3130
        %v3132 = vpop.f32.mrb[0].mxu0
        %3133 = vmatprep.mubr.bf16.mxu0 0
        %3134 = vmatmul.mubr.bf16.gmra.mrb[0].mxu0 %v2942
        %v3135 = vpop.f32.mrb[0].mxu0
        %v3136 = vadd.f32 %v2647, %v3135
        %v3137 = vpop.f32.mrb[0].mxu0
        %v3138 = vpop.f32.mrb[0].mxu0
        %v3139 = vadd.f32 %v2647, %v3138
        %v3140 = vpop.f32.mrb[0].mxu0
        %3141 = vmatprep.mubr.bf16.mxu0 0
        %3142 = vmatmul.mubr.bf16.gmra.mrb[0].mxu0 %v2945
        %v3143 = vpop.f32.mrb[0].mxu0
        %v3144 = vadd.f32 %v2647, %v3143
        %v3145 = vpop.f32.mrb[0].mxu0
        %v3146 = vpop.f32.mrb[0].mxu0
        %v3147 = vadd.f32 %v2647, %v3146
        %v3148 = vpop.f32.mrb[0].mxu0
        %3149 = vmatprep.mubr.bf16.mxu0 0
        %3150 = vmatmul.mubr.bf16.gmra.mrb[0].mxu0 %v2948
        %v3151 = vpop.f32.mrb[0].mxu0
        %v3152 = vadd.f32 %v2647, %v3151
        %v3153 = vpop.f32.mrb[0].mxu0
        %v3154 = vpop.f32.mrb[0].mxu0
        %v3155 = vadd.f32 %v2647, %v3154
        %v3156 = vpop.f32.mrb[0].mxu0
        %3157 = vmatprep.mubr.bf16.mxu0 0
        %3158 = vmatmul.mubr.bf16.gmra.mrb[0].mxu0 %v2951
        %v3159 = vpop.f32.mrb[0].mxu0
        %v3160 = vadd.f32 %v2647, %v3159
        %v3161 = vpop.f32.mrb[0].mxu0
        %v3162 = vpop.f32.mrb[0].mxu0
        %v3163 = vadd.f32 %v2647, %v3162
        %v3164 = vpop.f32.mrb[0].mxu0
        %3165 = vmatprep.mubr.bf16.mxu0 0
        %3166 = vmatmul.mubr.bf16.gmra.mrb[0].mxu0 %v2954
        %v3167 = vpop.f32.mrb[0].mxu0
        %v3168 = vadd.f32 %v2647, %v3167
        %v3169 = vpop.f32.mrb[0].mxu0
        %v3170 = vpop.f32.mrb[0].mxu0
        %v3171 = vadd.f32 %v2647, %v3170
        %v3172 = vpop.f32.mrb[0].mxu0
        %3173 = vmatprep.mubr.bf16.mxu0 0
        %3174 = vmatmul.mubr.bf16.gmra.mrb[0].mxu0 %v2957
        %v3175 = vpop.f32.mrb[0].mxu0
        %v3176 = vadd.f32 %v2647, %v3175
        %v3177 = vpop.f32.mrb[0].mxu0
        %v3178 = vpop.f32.mrb[0].mxu0
        %v3179 = vadd.f32 %v2647, %v3178
        %v3180 = vpop.f32.mrb[0].mxu0
        %3181 = vmatprep.mubr.bf16.mxu0 0
        %3182 = vmatmul.mubr.bf16.gmra.mrb[0].mxu0 %v2960
        %v3183 = vpop.f32.mrb[0].mxu0
        %v3184 = vadd.f32 %v2647, %v3183
        %v3185 = vpop.f32.mrb[0].mxu0
        %v3186 = vpop.f32.mrb[0].mxu0
        %v3187 = vadd.f32 %v2647, %v3186
        %v3188 = vpop.f32.mrb[0].mxu0
        %3189 = vmatprep.mubr.bf16.mxu0 0
        %3190 = vmatmul.mubr.bf16.gmra.mrb[0].mxu0 %v2963
        %v3191 = vpop.f32.mrb[0].mxu0
        %v3192 = vadd.f32 %v2647, %v3191
        %v3193 = vpop.f32.mrb[0].mxu0
        %v3194 = vpop.f32.mrb[0].mxu0
        %v3195 = vadd.f32 %v2647, %v3194
        %v3196 = vpop.f32.mrb[0].mxu0
        %3197 = vmatprep.mubr.bf16.mxu0 0
        %3198 = vmatmul.mubr.bf16.gmra.mrb[0].mxu0 %v2966
        %v3199 = vpop.f32.mrb[0].mxu0
        %v3200 = vadd.f32 %v2647, %v3199
        %v3201 = vpop.f32.mrb[0].mxu0
        %v3202 = vpop.f32.mrb[0].mxu0
        %v3203 = vadd.f32 %v2647, %v3202
        %v3204 = vpop.f32.mrb[0].mxu0
        %3205 = vmatprep.mubr.bf16.mxu0 0
        %3206 = vmatmul.mubr.bf16.gmra.mrb[0].mxu0 %v2969
        %v3207 = vpop.f32.mrb[0].mxu0
        %v3208 = vadd.f32 %v2647, %v3207
        %v3209 = vpop.f32.mrb[0].mxu0
        %v3210 = vpop.f32.mrb[0].mxu0
        %v3211 = vadd.f32 %v2647, %v3210
        %v3212 = vpop.f32.mrb[0].mxu0
        %3213 = vmatprep.mubr.bf16.mxu0 0
        %3214 = vmatmul.mubr.bf16.gmra.mrb[0].mxu0 %v2972
        %v3215 = vpop.f32.mrb[0].mxu0
        %v3216 = vadd.f32 %v2647, %v3215
        %v3217 = vpop.f32.mrb[0].mxu0
        %v3218 = vpop.f32.mrb[0].mxu0
        %v3219 = vadd.f32 %v2647, %v3218
        %v3220 = vpop.f32.mrb[0].mxu0
        %3221 = vmatprep.mubr.bf16.mxu0 0
        %3222 = vmatmul.mubr.bf16.gmra.mrb[0].mxu0 %v2975
        %v3223 = vpop.f32.mrb[0].mxu0
        %v3224 = vadd.f32 %v2647, %v3223
        %v3225 = vpop.f32.mrb[0].mxu0
        %v3226 = vpop.f32.mrb[0].mxu0
        %v3227 = vadd.f32 %v2647, %v3226
        %v3228 = vpop.f32.mrb[0].mxu0
        %3229 = vmatprep.mubr.bf16.mxu0 0
        %3230 = vmatmul.mubr.bf16.gmra.mrb[0].mxu0 %v2978
        %v3231 = vpop.f32.mrb[0].mxu0
        %v3232 = vadd.f32 %v2647, %v3231
        %v3233 = vpop.f32.mrb[0].mxu0
        %v3234 = vpop.f32.mrb[0].mxu0
        %v3235 = vadd.f32 %v2647, %v3234
        %v3236 = vpop.f32.mrb[0].mxu0
        %3237 = vmatprep.mubr.bf16.mxu0 0
        %3238 = vmatmul.mubr.bf16.gmra.mrb[0].mxu0 %v2981
        %v3239 = vpop.f32.mrb[0].mxu0
        %v3240 = vadd.f32 %v2647, %v3239
        %v3241 = vpop.f32.mrb[0].mxu0
        %v3242 = vpop.f32.mrb[0].mxu0
        %v3243 = vadd.f32 %v2647, %v3242
        %v3244 = vpop.f32.mrb[0].mxu0
        %3245 = vmatprep.mubr.bf16.mxu0 0
        %3246 = vmatmul.mubr.bf16.gmra.mrb[0].mxu0 %v2984
        %v3247 = vpop.f32.mrb[0].mxu0
        %v3248 = vadd.f32 %v2647, %v3247
        %v3249 = vpop.f32.mrb[0].mxu0
        %v3250 = vpop.f32.mrb[0].mxu0
        %v3251 = vadd.f32 %v2647, %v3250
        %v3252 = vpop.f32.mrb[0].mxu0
        %3253 = vmatprep.mubr.bf16.mxu0 0
        %3254 = vmatmul.mubr.bf16.gmra.mrb[0].mxu0 %v2987
        %v3255 = vpop.f32.mrb[0].mxu0
        %v3256 = vadd.f32 %v2647, %v3255
        %v3257 = vpop.f32.mrb[0].mxu0
        %v3258 = vpop.f32.mrb[0].mxu0
        %v3259 = vadd.f32 %v2647, %v3258
        %v3260 = vpop.f32.mrb[0].mxu0
        %3261 = vmatprep.mubr.bf16.mxu0 0
        %3262 = vmatmul.mubr.bf16.gmra.mrb[0].mxu0 %v2990
        %v3263 = vpop.f32.mrb[0].mxu0
        %v3264 = vadd.f32 %v2647, %v3263
        %v3265 = vpop.f32.mrb[0].mxu0
        %v3266 = vpop.f32.mrb[0].mxu0
        %v3267 = vadd.f32 %v2647, %v3266
        %v3268 = vpop.f32.mrb[0].mxu0
        %3269 = vmatprep.mubr.bf16.mxu0 0
        %3270 = vmatmul.mubr.bf16.gmra.mrb[0].mxu0 %v2993
        %v3271 = vpop.f32.mrb[0].mxu0
        %v3272 = vadd.f32 %v2647, %v3271
        %v3273 = vpop.f32.mrb[0].mxu0
        %v3274 = vpop.f32.mrb[0].mxu0
        %v3275 = vadd.f32 %v2647, %v3274
        %v3276 = vpop.f32.mrb[0].mxu0
        %3277 = vmatprep.mubr.bf16.mxu0 0
        %3278 = vmatmul.mubr.bf16.gmra.mrb[0].mxu0 %v2996
        %v3279 = vpop.f32.mrb[0].mxu0
        %v3280 = vadd.f32 %v2647, %v3279
        %v3281 = vpop.f32.mrb[0].mxu0
        %v3282 = vpop.f32.mrb[0].mxu0
        %v3283 = vadd.f32 %v2647, %v3282
        %v3284 = vpop.f32.mrb[0].mxu0
        %3285 = vmatprep.mubr.bf16.mxu0 0
        %3286 = vmatmul.mubr.bf16.gmra.mrb[0].mxu0 %v2999
        %v3287 = vpop.f32.mrb[0].mxu0
        %v3288 = vadd.f32 %v2647, %v3287
        %v3289 = vpop.f32.mrb[0].mxu0
        %v3290 = vpop.f32.mrb[0].mxu0
        %v3291 = vadd.f32 %v2647, %v3290
        %v3292 = vpop.f32.mrb[0].mxu0
        %3293 = vdwg.mxu0
        %v3294 = vmax.f32 %v3040, 0.0
        %v3295 = vmax.f32 %v3043, 0.0
        %v3296 = vmax.f32 %v3048, 0.0
        %v3297 = vmax.f32 %v3051, 0.0
        %v3298 = vmax.f32 %v3056, 0.0
        %v3299 = vmax.f32 %v3059, 0.0
        %v3300 = vmax.f32 %v3064, 0.0
        %v3301 = vmax.f32 %v3067, 0.0
        %v3302 = vmax.f32 %v3072, 0.0
        %v3303 = vmax.f32 %v3075, 0.0
        %v3304 = vmax.f32 %v3080, 0.0
        %v3305 = vmax.f32 %v3083, 0.0
        %v3306 = vmax.f32 %v3088, 0.0
        %v3307 = vmax.f32 %v3091, 0.0
        %v3308 = vmax.f32 %v3096, 0.0
        %v3309 = vmax.f32 %v3099, 0.0
        %v3310 = vmax.f32 %v3104, 0.0
        %v3311 = vmax.f32 %v3107, 0.0
        %v3312 = vmax.f32 %v3112, 0.0
        %v3313 = vmax.f32 %v3115, 0.0
        %v3314 = vmax.f32 %v3120, 0.0
        %v3315 = vmax.f32 %v3123, 0.0
        %v3316 = vmax.f32 %v3128, 0.0
        %v3317 = vmax.f32 %v3131, 0.0
        %v3318 = vmax.f32 %v3136, 0.0
        %v3319 = vmax.f32 %v3139, 0.0
        %v3320 = vmax.f32 %v3144, 0.0
        %v3321 = vmax.f32 %v3147, 0.0
        %v3322 = vmax.f32 %v3152, 0.0
        %v3323 = vmax.f32 %v3155, 0.0
        %v3324 = vmax.f32 %v3160, 0.0
        %v3325 = vmax.f32 %v3163, 0.0
        %v3326 = vmax.f32 %v3168, 0.0
        %v3327 = vmax.f32 %v3171, 0.0
        %v3328 = vmax.f32 %v3176, 0.0
        %v3329 = vmax.f32 %v3179, 0.0
        %v3330 = vmax.f32 %v3184, 0.0
        %v3331 = vmax.f32 %v3187, 0.0
        %v3332 = vmax.f32 %v3192, 0.0
        %v3333 = vmax.f32 %v3195, 0.0
        %v3334 = vmax.f32 %v3200, 0.0
        %v3335 = vmax.f32 %v3203, 0.0
        %v3336 = vmax.f32 %v3208, 0.0
        %v3337 = vmax.f32 %v3211, 0.0
        %v3338 = vmax.f32 %v3216, 0.0
        %v3339 = vmax.f32 %v3219, 0.0
        %v3340 = vmax.f32 %v3224, 0.0
        %v3341 = vmax.f32 %v3227, 0.0
        %v3342 = vmax.f32 %v3232, 0.0
        %v3343 = vmax.f32 %v3235, 0.0
        %v3344 = vmax.f32 %v3240, 0.0
        %v3345 = vmax.f32 %v3243, 0.0
        %v3346 = vmax.f32 %v3248, 0.0
        %v3347 = vmax.f32 %v3251, 0.0
        %v3348 = vmax.f32 %v3256, 0.0
        %v3349 = vmax.f32 %v3259, 0.0
        %v3350 = vmax.f32 %v3264, 0.0
        %v3351 = vmax.f32 %v3267, 0.0
        %v3352 = vmax.f32 %v3272, 0.0
        %v3353 = vmax.f32 %v3275, 0.0
        %v3354 = vmax.f32 %v3280, 0.0
        %v3355 = vmax.f32 %v3283, 0.0
        %v3356 = vmax.f32 %v3288, 0.0
        %v3357 = vmax.f32 %v3291, 0.0
        %v3358 = vunpack.c.l.bf16 %v278
        %v3359 = vunpack.c.l.bf16 %v279
        %v3360 = vunpack.c.l.bf16 %v280
        %v3361 = vunpack.c.l.bf16 %v281
        %v3362 = vunpack.c.l.bf16 %v282
        %v3363 = vunpack.c.l.bf16 %v283
        %v3364 = vunpack.c.l.bf16 %v284
        %v3365 = vunpack.c.l.bf16 %v285
        %v3366 = vunpack.c.l.bf16 %v286
        %v3367 = vunpack.c.l.bf16 %v287
        %v3368 = vunpack.c.l.bf16 %v288
        %v3369 = vunpack.c.l.bf16 %v289
        %v3370 = vunpack.c.l.bf16 %v290
        %v3371 = vunpack.c.l.bf16 %v291
        %v3372 = vunpack.c.l.bf16 %v292
        %v3373 = vunpack.c.l.bf16 %v293
        %v3374 = vunpack.c.l.bf16 %v294
        %v3375 = vunpack.c.l.bf16 %v295
        %v3376 = vunpack.c.l.bf16 %v296
        %v3377 = vunpack.c.l.bf16 %v297
        %v3378 = vunpack.c.l.bf16 %v298
        %v3379 = vunpack.c.l.bf16 %v299
        %v3380 = vunpack.c.l.bf16 %v300
        %v3381 = vunpack.c.l.bf16 %v301
        %v3382 = vunpack.c.l.bf16 %v302
        %v3383 = vunpack.c.l.bf16 %v303
        %v3384 = vunpack.c.l.bf16 %v304
        %v3385 = vunpack.c.l.bf16 %v305
        %v3386 = vunpack.c.l.bf16 %v306
        %v3387 = vunpack.c.l.bf16 %v307
        %v3388 = vunpack.c.l.bf16 %v308
        %v3389 = vunpack.c.l.bf16 %v309
        %v3390 = vunpack.c.l.bf16 %v310
        %v3391 = vunpack.c.l.bf16 %v311
        %v3392 = vunpack.c.l.bf16 %v312
        %v3393 = vunpack.c.l.bf16 %v313
        %v3394 = vunpack.c.l.bf16 %v314
        %v3395 = vunpack.c.l.bf16 %v315
        %v3396 = vunpack.c.l.bf16 %v316
        %v3397 = vunpack.c.l.bf16 %v317
        %v3398 = vunpack.c.l.bf16 %v318
        %v3399 = vunpack.c.l.bf16 %v319
        %v3400 = vunpack.c.l.bf16 %v320
        %v3401 = vunpack.c.l.bf16 %v321
        %v3402 = vunpack.c.l.bf16 %v322
        %v3403 = vunpack.c.l.bf16 %v323
        %v3404 = vunpack.c.l.bf16 %v324
        %v3405 = vunpack.c.l.bf16 %v325
        %v3406 = vunpack.c.l.bf16 %v326
        %v3407 = vunpack.c.l.bf16 %v327
        %v3408 = vunpack.c.l.bf16 %v328
        %v3409 = vunpack.c.l.bf16 %v329
        %v3410 = vunpack.c.l.bf16 %v330
        %v3411 = vunpack.c.l.bf16 %v331
        %v3412 = vunpack.c.l.bf16 %v332
        %v3413 = vunpack.c.l.bf16 %v333
        %v3414 = vunpack.c.l.bf16 %v334
        %v3415 = vunpack.c.l.bf16 %v335
        %v3416 = vunpack.c.l.bf16 %v336
        %v3417 = vunpack.c.l.bf16 %v337
        %v3418 = vunpack.c.l.bf16 %v338
        %v3419 = vunpack.c.l.bf16 %v339
        %v3420 = vunpack.c.l.bf16 %v340
        %v3421 = vunpack.c.l.bf16 %v341
        %3486 = vrot.lane.b32.xlu0 %v3358, 8
        %v3487 = vpop.permute.xlu0 %3486
        %3488 = vrot.lane.b32.xlu0 %v3359, 8
        %v3489 = vpop.permute.xlu0 %3488
        %3490 = vrot.lane.b32.xlu0 %v3360, 8
        %v3491 = vpop.permute.xlu0 %3490
        %3492 = vrot.lane.b32.xlu0 %v3361, 8
        %v3493 = vpop.permute.xlu0 %3492
        %3494 = vrot.lane.b32.xlu0 %v3362, 8
        %v3495 = vpop.permute.xlu0 %3494
        %3496 = vrot.lane.b32.xlu0 %v3363, 8
        %v3497 = vpop.permute.xlu0 %3496
        %3498 = vrot.lane.b32.xlu0 %v3364, 8
        %v3499 = vpop.permute.xlu0 %3498
        %3500 = vrot.lane.b32.xlu0 %v3365, 8
        %v3501 = vpop.permute.xlu0 %3500
        %3502 = vrot.lane.b32.xlu0 %v3366, 8
        %v3503 = vpop.permute.xlu0 %3502
        %3504 = vrot.lane.b32.xlu0 %v3367, 8
        %v3505 = vpop.permute.xlu0 %3504
        %3506 = vrot.lane.b32.xlu0 %v3368, 8
        %v3507 = vpop.permute.xlu0 %3506
        %3508 = vrot.lane.b32.xlu0 %v3369, 8
        %v3509 = vpop.permute.xlu0 %3508
        %3510 = vrot.lane.b32.xlu0 %v3370, 8
        %v3511 = vpop.permute.xlu0 %3510
        %3512 = vrot.lane.b32.xlu0 %v3371, 8
        %v3513 = vpop.permute.xlu0 %3512
        %3514 = vrot.lane.b32.xlu0 %v3372, 8
        %v3515 = vpop.permute.xlu0 %3514
        %3516 = vrot.lane.b32.xlu0 %v3373, 8
        %v3517 = vpop.permute.xlu0 %3516
        %3518 = vrot.lane.b32.xlu0 %v3374, 8
        %v3519 = vpop.permute.xlu0 %3518
        %3520 = vrot.lane.b32.xlu0 %v3375, 8
        %v3521 = vpop.permute.xlu0 %3520
        %3522 = vrot.lane.b32.xlu0 %v3376, 8
        %v3523 = vpop.permute.xlu0 %3522
        %3524 = vrot.lane.b32.xlu0 %v3377, 8
        %v3525 = vpop.permute.xlu0 %3524
        %3526 = vrot.lane.b32.xlu0 %v3378, 8
        %v3527 = vpop.permute.xlu0 %3526
        %3528 = vrot.lane.b32.xlu0 %v3379, 8
        %v3529 = vpop.permute.xlu0 %3528
        %3530 = vrot.lane.b32.xlu0 %v3380, 8
        %v3531 = vpop.permute.xlu0 %3530
        %3532 = vrot.lane.b32.xlu0 %v3381, 8
        %v3533 = vpop.permute.xlu0 %3532
        %3534 = vrot.lane.b32.xlu0 %v3382, 8
        %v3535 = vpop.permute.xlu0 %3534
        %3536 = vrot.lane.b32.xlu0 %v3383, 8
        %v3537 = vpop.permute.xlu0 %3536
        %3538 = vrot.lane.b32.xlu0 %v3384, 8
        %v3539 = vpop.permute.xlu0 %3538
        %3540 = vrot.lane.b32.xlu0 %v3385, 8
        %v3541 = vpop.permute.xlu0 %3540
        %3542 = vrot.lane.b32.xlu0 %v3386, 8
        %v3543 = vpop.permute.xlu0 %3542
        %3544 = vrot.lane.b32.xlu0 %v3387, 8
        %v3545 = vpop.permute.xlu0 %3544
        %3546 = vrot.lane.b32.xlu0 %v3388, 8
        %v3547 = vpop.permute.xlu0 %3546
        %3548 = vrot.lane.b32.xlu0 %v3389, 8
        %v3549 = vpop.permute.xlu0 %3548
        %3550 = vrot.lane.b32.xlu0 %v3390, 8
        %v3551 = vpop.permute.xlu0 %3550
        %3552 = vrot.lane.b32.xlu0 %v3391, 8
        %v3553 = vpop.permute.xlu0 %3552
        %3554 = vrot.lane.b32.xlu0 %v3392, 8
        %v3555 = vpop.permute.xlu0 %3554
        %3556 = vrot.lane.b32.xlu0 %v3393, 8
        %v3557 = vpop.permute.xlu0 %3556
        %3558 = vrot.lane.b32.xlu0 %v3394, 8
        %v3559 = vpop.permute.xlu0 %3558
        %3560 = vrot.lane.b32.xlu0 %v3395, 8
        %v3561 = vpop.permute.xlu0 %3560
        %3562 = vrot.lane.b32.xlu0 %v3396, 8
        %v3563 = vpop.permute.xlu0 %3562
        %3564 = vrot.lane.b32.xlu0 %v3397, 8
        %v3565 = vpop.permute.xlu0 %3564
        %3566 = vrot.lane.b32.xlu0 %v3398, 8
        %v3567 = vpop.permute.xlu0 %3566
        %3568 = vrot.lane.b32.xlu0 %v3399, 8
        %v3569 = vpop.permute.xlu0 %3568
        %3570 = vrot.lane.b32.xlu0 %v3400, 8
        %v3571 = vpop.permute.xlu0 %3570
        %3572 = vrot.lane.b32.xlu0 %v3401, 8
        %v3573 = vpop.permute.xlu0 %3572
        %3574 = vrot.lane.b32.xlu0 %v3402, 8
        %v3575 = vpop.permute.xlu0 %3574
        %3576 = vrot.lane.b32.xlu0 %v3403, 8
        %v3577 = vpop.permute.xlu0 %3576
        %3578 = vrot.lane.b32.xlu0 %v3404, 8
        %v3579 = vpop.permute.xlu0 %3578
        %3580 = vrot.lane.b32.xlu0 %v3405, 8
        %v3581 = vpop.permute.xlu0 %3580
        %3582 = vrot.lane.b32.xlu0 %v3406, 8
        %v3583 = vpop.permute.xlu0 %3582
        %3584 = vrot.lane.b32.xlu0 %v3407, 8
        %v3585 = vpop.permute.xlu0 %3584
        %3586 = vrot.lane.b32.xlu0 %v3408, 8
        %v3587 = vpop.permute.xlu0 %3586
        %3588 = vrot.lane.b32.xlu0 %v3409, 8
        %v3589 = vpop.permute.xlu0 %3588
        %3590 = vrot.lane.b32.xlu0 %v3410, 8
        %v3591 = vpop.permute.xlu0 %3590
        %3592 = vrot.lane.b32.xlu0 %v3411, 8
        %v3593 = vpop.permute.xlu0 %3592
        %3594 = vrot.lane.b32.xlu0 %v3412, 8
        %v3595 = vpop.permute.xlu0 %3594
        %3596 = vrot.lane.b32.xlu0 %v3413, 8
        %v3597 = vpop.permute.xlu0 %3596
        %3598 = vrot.lane.b32.xlu0 %v3414, 8
        %v3599 = vpop.permute.xlu0 %3598
        %3600 = vrot.lane.b32.xlu0 %v3415, 8
        %v3601 = vpop.permute.xlu0 %3600
        %3602 = vrot.lane.b32.xlu0 %v3416, 8
        %v3603 = vpop.permute.xlu0 %3602
        %3604 = vrot.lane.b32.xlu0 %v3417, 8
        %v3605 = vpop.permute.xlu0 %3604
        %3606 = vrot.lane.b32.xlu0 %v3418, 8
        %v3607 = vpop.permute.xlu0 %3606
        %3608 = vrot.lane.b32.xlu0 %v3419, 8
        %v3609 = vpop.permute.xlu0 %3608
        %3610 = vrot.lane.b32.xlu0 %v3420, 8
        %v3611 = vpop.permute.xlu0 %3610
        %3612 = vrot.lane.b32.xlu0 %v3421, 8
        %v3613 = vpop.permute.xlu0 %3612
        %v3678 = vsel %vm1048, %v3294, %v3487
        %v3679 = vsel %vm1048, %v3295, %v3489
        %v3680 = vsel %vm1048, %v3296, %v3491
        %v3681 = vsel %vm1048, %v3297, %v3493
        %v3682 = vsel %vm1048, %v3298, %v3495
        %v3683 = vsel %vm1048, %v3299, %v3497
        %v3684 = vsel %vm1048, %v3300, %v3499
        %v3685 = vsel %vm1048, %v3301, %v3501
        %v3686 = vsel %vm1048, %v3302, %v3503
        %v3687 = vsel %vm1048, %v3303, %v3505
        %v3688 = vsel %vm1048, %v3304, %v3507
        %v3689 = vsel %vm1048, %v3305, %v3509
        %v3690 = vsel %vm1048, %v3306, %v3511
        %v3691 = vsel %vm1048, %v3307, %v3513
        %v3692 = vsel %vm1048, %v3308, %v3515
        %v3693 = vsel %vm1048, %v3309, %v3517
        %v3694 = vsel %vm1048, %v3310, %v3519
        %v3695 = vsel %vm1048, %v3311, %v3521
        %v3696 = vsel %vm1048, %v3312, %v3523
        %v3697 = vsel %vm1048, %v3313, %v3525
        %v3698 = vsel %vm1048, %v3314, %v3527
        %v3699 = vsel %vm1048, %v3315, %v3529
        %v3700 = vsel %vm1048, %v3316, %v3531
        %v3701 = vsel %vm1048, %v3317, %v3533
        %v3702 = vsel %vm1048, %v3318, %v3535
        %v3703 = vsel %vm1048, %v3319, %v3537
        %v3704 = vsel %vm1048, %v3320, %v3539
        %v3705 = vsel %vm1048, %v3321, %v3541
        %v3706 = vsel %vm1048, %v3322, %v3543
        %v3707 = vsel %vm1048, %v3323, %v3545
        %v3708 = vsel %vm1048, %v3324, %v3547
        %v3709 = vsel %vm1048, %v3325, %v3549
        %v3710 = vsel %vm1048, %v3326, %v3551
        %v3711 = vsel %vm1048, %v3327, %v3553
        %v3712 = vsel %vm1048, %v3328, %v3555
        %v3713 = vsel %vm1048, %v3329, %v3557
        %v3714 = vsel %vm1048, %v3330, %v3559
        %v3715 = vsel %vm1048, %v3331, %v3561
        %v3716 = vsel %vm1048, %v3332, %v3563
        %v3717 = vsel %vm1048, %v3333, %v3565
        %v3718 = vsel %vm1048, %v3334, %v3567
        %v3719 = vsel %vm1048, %v3335, %v3569
        %v3720 = vsel %vm1048, %v3336, %v3571
        %v3721 = vsel %vm1048, %v3337, %v3573
        %v3722 = vsel %vm1048, %v3338, %v3575
        %v3723 = vsel %vm1048, %v3339, %v3577
        %v3724 = vsel %vm1048, %v3340, %v3579
        %v3725 = vsel %vm1048, %v3341, %v3581
        %v3726 = vsel %vm1048, %v3342, %v3583
        %v3727 = vsel %vm1048, %v3343, %v3585
        %v3728 = vsel %vm1048, %v3344, %v3587
        %v3729 = vsel %vm1048, %v3345, %v3589
        %v3730 = vsel %vm1048, %v3346, %v3591
        %v3731 = vsel %vm1048, %v3347, %v3593
        %v3732 = vsel %vm1048, %v3348, %v3595
        %v3733 = vsel %vm1048, %v3349, %v3597
        %v3734 = vsel %vm1048, %v3350, %v3599
        %v3735 = vsel %vm1048, %v3351, %v3601
        %v3736 = vsel %vm1048, %v3352, %v3603
        %v3737 = vsel %vm1048, %v3353, %v3605
        %v3738 = vsel %vm1048, %v3354, %v3607
        %v3739 = vsel %vm1048, %v3355, %v3609
        %v3740 = vsel %vm1048, %v3356, %v3611
        %v3741 = vsel %vm1048, %v3357, %v3613
        %v3742 = vsel %vm2231, %v3678, 0.0
        %v3743 = vsel %vm2231, %v3682, 0.0
        %v3744 = vadd.f32 %v3742, %v3743
        %v3745 = vsel %vm2231, %v3679, 0.0
        %v3746 = vsel %vm2231, %v3683, 0.0
        %v3747 = vadd.f32 %v3745, %v3746
        %v3748 = vsel %vm2231, %v3680, 0.0
        %v3749 = vsel %vm2231, %v3684, 0.0
        %v3750 = vadd.f32 %v3748, %v3749
        %v3751 = vsel %vm2231, %v3681, 0.0
        %v3752 = vsel %vm2231, %v3685, 0.0
        %v3753 = vadd.f32 %v3751, %v3752
        %v3754 = vsel %vm2231, %v3686, 0.0
        %v3755 = vsel %vm2231, %v3690, 0.0
        %v3756 = vadd.f32 %v3754, %v3755
        %v3757 = vsel %vm2231, %v3687, 0.0
        %v3758 = vsel %vm2231, %v3691, 0.0
        %v3759 = vadd.f32 %v3757, %v3758
        %v3760 = vsel %vm2231, %v3688, 0.0
        %v3761 = vsel %vm2231, %v3692, 0.0
        %v3762 = vadd.f32 %v3760, %v3761
        %v3763 = vsel %vm2231, %v3689, 0.0
        %v3764 = vsel %vm2231, %v3693, 0.0
        %v3765 = vadd.f32 %v3763, %v3764
        %v3766 = vsel %vm2231, %v3694, 0.0
        %v3767 = vsel %vm2231, %v3698, 0.0
        %v3768 = vadd.f32 %v3766, %v3767
        %v3769 = vsel %vm2231, %v3695, 0.0
        %v3770 = vsel %vm2231, %v3699, 0.0
        %v3771 = vadd.f32 %v3769, %v3770
        %v3772 = vsel %vm2231, %v3696, 0.0
        %v3773 = vsel %vm2231, %v3700, 0.0
        %v3774 = vadd.f32 %v3772, %v3773
        %v3775 = vsel %vm2231, %v3697, 0.0
        %v3776 = vsel %vm2231, %v3701, 0.0
        %v3777 = vadd.f32 %v3775, %v3776
        %v3778 = vsel %vm2231, %v3702, 0.0
        %v3779 = vsel %vm2231, %v3706, 0.0
        %v3780 = vadd.f32 %v3778, %v3779
        %v3781 = vsel %vm2231, %v3703, 0.0
        %v3782 = vsel %vm2231, %v3707, 0.0
        %v3783 = vadd.f32 %v3781, %v3782
        %v3784 = vsel %vm2231, %v3704, 0.0
        %v3785 = vsel %vm2231, %v3708, 0.0
        %v3786 = vadd.f32 %v3784, %v3785
        %v3787 = vsel %vm2231, %v3705, 0.0
        %v3788 = vsel %vm2231, %v3709, 0.0
        %v3789 = vadd.f32 %v3787, %v3788
        %v3790 = vsel %vm2231, %v3710, 0.0
        %v3791 = vsel %vm2231, %v3714, 0.0
        %v3792 = vadd.f32 %v3790, %v3791
        %v3793 = vsel %vm2231, %v3711, 0.0
        %v3794 = vsel %vm2231, %v3715, 0.0
        %v3795 = vadd.f32 %v3793, %v3794
        %v3796 = vsel %vm2231, %v3712, 0.0
        %v3797 = vsel %vm2231, %v3716, 0.0
        %v3798 = vadd.f32 %v3796, %v3797
        %v3799 = vsel %vm2231, %v3713, 0.0
        %v3800 = vsel %vm2231, %v3717, 0.0
        %v3801 = vadd.f32 %v3799, %v3800
        %v3802 = vsel %vm2231, %v3718, 0.0
        %v3803 = vsel %vm2231, %v3722, 0.0
        %v3804 = vadd.f32 %v3802, %v3803
        %v3805 = vsel %vm2231, %v3719, 0.0
        %v3806 = vsel %vm2231, %v3723, 0.0
        %v3807 = vadd.f32 %v3805, %v3806
        %v3808 = vsel %vm2231, %v3720, 0.0
        %v3809 = vsel %vm2231, %v3724, 0.0
        %v3810 = vadd.f32 %v3808, %v3809
        %v3811 = vsel %vm2231, %v3721, 0.0
        %v3812 = vsel %vm2231, %v3725, 0.0
        %v3813 = vadd.f32 %v3811, %v3812
        %v3814 = vsel %vm2231, %v3726, 0.0
        %v3815 = vsel %vm2231, %v3730, 0.0
        %v3816 = vadd.f32 %v3814, %v3815
        %v3817 = vsel %vm2231, %v3727, 0.0
        %v3818 = vsel %vm2231, %v3731, 0.0
        %v3819 = vadd.f32 %v3817, %v3818
        %v3820 = vsel %vm2231, %v3728, 0.0
        %v3821 = vsel %vm2231, %v3732, 0.0
        %v3822 = vadd.f32 %v3820, %v3821
        %v3823 = vsel %vm2231, %v3729, 0.0
        %v3824 = vsel %vm2231, %v3733, 0.0
        %v3825 = vadd.f32 %v3823, %v3824
        %v3826 = vsel %vm2231, %v3734, 0.0
        %v3827 = vsel %vm2231, %v3738, 0.0
        %v3828 = vadd.f32 %v3826, %v3827
        %v3829 = vsel %vm2231, %v3735, 0.0
        %v3830 = vsel %vm2231, %v3739, 0.0
        %v3831 = vadd.f32 %v3829, %v3830
        %v3832 = vsel %vm2231, %v3736, 0.0
        %v3833 = vsel %vm2231, %v3740, 0.0
        %v3834 = vadd.f32 %v3832, %v3833
        %v3835 = vsel %vm2231, %v3737, 0.0
        %v3836 = vsel %vm2231, %v3741, 0.0
        %v3837 = vadd.f32 %v3835, %v3836
        %3838 = vst.msk [vmem:[#allocation3] sm:$0xff] %vm2231, %v3744
        %3839 = vst.msk [vmem:[#allocation3 + $0x8] sm:$0xff] %vm2231, %v3747
        %3840 = vst.msk [vmem:[#allocation3 + $0x10] sm:$0xff] %vm2231, %v3750
        %3841 = vst.msk [vmem:[#allocation3 + $0x18] sm:$0xff] %vm2231, %v3753
        %3842 = vst.msk [vmem:[#allocation3 + $0x20] sm:$0xff] %vm2231, %v3756
        %3843 = vst.msk [vmem:[#allocation3 + $0x28] sm:$0xff] %vm2231, %v3759
        %3844 = vst.msk [vmem:[#allocation3 + $0x30] sm:$0xff] %vm2231, %v3762
        %3845 = vst.msk [vmem:[#allocation3 + $0x38] sm:$0xff] %vm2231, %v3765
        %3846 = vst.msk [vmem:[#allocation3 + $0x40] sm:$0xff] %vm2231, %v3768
        %3847 = vst.msk [vmem:[#allocation3 + $0x48] sm:$0xff] %vm2231, %v3771
        %3848 = vst.msk [vmem:[#allocation3 + $0x50] sm:$0xff] %vm2231, %v3774
        %3849 = vst.msk [vmem:[#allocation3 + $0x58] sm:$0xff] %vm2231, %v3777
        %3850 = vst.msk [vmem:[#allocation3 + $0x60] sm:$0xff] %vm2231, %v3780
        %3851 = vst.msk [vmem:[#allocation3 + $0x68] sm:$0xff] %vm2231, %v3783
        %3852 = vst.msk [vmem:[#allocation3 + $0x70] sm:$0xff] %vm2231, %v3786
        %3853 = vst.msk [vmem:[#allocation3 + $0x78] sm:$0xff] %vm2231, %v3789
        %3854 = vst.msk [vmem:[#allocation3 + $0x80] sm:$0xff] %vm2231, %v3792
        %3855 = vst.msk [vmem:[#allocation3 + $0x88] sm:$0xff] %vm2231, %v3795
        %3856 = vst.msk [vmem:[#allocation3 + $0x90] sm:$0xff] %vm2231, %v3798
        %3857 = vst.msk [vmem:[#allocation3 + $0x98] sm:$0xff] %vm2231, %v3801
        %3858 = vst.msk [vmem:[#allocation3 + $0xa0] sm:$0xff] %vm2231, %v3804
        %3859 = vst.msk [vmem:[#allocation3 + $0xa8] sm:$0xff] %vm2231, %v3807
        %3860 = vst.msk [vmem:[#allocation3 + $0xb0] sm:$0xff] %vm2231, %v3810
        %3861 = vst.msk [vmem:[#allocation3 + $0xb8] sm:$0xff] %vm2231, %v3813
        %3862 = vst.msk [vmem:[#allocation3 + $0xc0] sm:$0xff] %vm2231, %v3816
        %3863 = vst.msk [vmem:[#allocation3 + $0xc8] sm:$0xff] %vm2231, %v3819
        %3864 = vst.msk [vmem:[#allocation3 + $0xd0] sm:$0xff] %vm2231, %v3822
        %3865 = vst.msk [vmem:[#allocation3 + $0xd8] sm:$0xff] %vm2231, %v3825
        %3866 = vst.msk [vmem:[#allocation3 + $0xe0] sm:$0xff] %vm2231, %v3828
        %3867 = vst.msk [vmem:[#allocation3 + $0xe8] sm:$0xff] %vm2231, %v3831
        %3868 = vst.msk [vmem:[#allocation3 + $0xf0] sm:$0xff] %vm2231, %v3834
        %3869 = vst.msk [vmem:[#allocation3 + $0xf8] sm:$0xff] %vm2231, %v3837
        %v3870 = vld [vmem:[#allocation3] ss:$2 sm:$0xff]
        %s3871 = scalar_lea.vmem [#allocation3], 16
        %v3872 = vld [vmem:[%s3871] ss:$2 sm:$0xff]
        %s3873 = scalar_lea.vmem [#allocation3], 32
        %v3874 = vld [vmem:[%s3873] ss:$2 sm:$0xff]
        %s3875 = scalar_lea.vmem [#allocation3], 48
        %v3876 = vld [vmem:[%s3875] ss:$2 sm:$0xff]
        %s3877 = scalar_lea.vmem [#allocation3], 64
        %v3878 = vld [vmem:[%s3877] ss:$2 sm:$0xff]
        %s3879 = scalar_lea.vmem [#allocation3], 80
        %v3880 = vld [vmem:[%s3879] ss:$2 sm:$0xff]
        %s3881 = scalar_lea.vmem [#allocation3], 96
        %v3882 = vld [vmem:[%s3881] ss:$2 sm:$0xff]
        %s3883 = scalar_lea.vmem [#allocation3], 112
        %v3884 = vld [vmem:[%s3883] ss:$2 sm:$0xff]
        %s3885 = scalar_lea.vmem [#allocation3], 128
        %v3886 = vld [vmem:[%s3885] ss:$2 sm:$0xff]
        %s3887 = scalar_lea.vmem [#allocation3], 144
        %v3888 = vld [vmem:[%s3887] ss:$2 sm:$0xff]
        %s3889 = scalar_lea.vmem [#allocation3], 160
        %v3890 = vld [vmem:[%s3889] ss:$2 sm:$0xff]
        %s3891 = scalar_lea.vmem [#allocation3], 176
        %v3892 = vld [vmem:[%s3891] ss:$2 sm:$0xff]
        %s3893 = scalar_lea.vmem [#allocation3], 192
        %v3894 = vld [vmem:[%s3893] ss:$2 sm:$0xff]
        %s3895 = scalar_lea.vmem [#allocation3], 208
        %v3896 = vld [vmem:[%s3895] ss:$2 sm:$0xff]
        %s3897 = scalar_lea.vmem [#allocation3], 224
        %v3898 = vld [vmem:[%s3897] ss:$2 sm:$0xff]
        %s3899 = scalar_lea.vmem [#allocation3], 240
        %v3900 = vld [vmem:[%s3899] ss:$2 sm:$0xff]
        %s3901 = scalar_lea.vmem [#allocation3], 1
        %v3902 = vld [vmem:[%s3901] ss:$2 sm:$0xff]
        %s3903 = scalar_lea.vmem [#allocation3], 17
        %v3904 = vld [vmem:[%s3903] ss:$2 sm:$0xff]
        %s3905 = scalar_lea.vmem [#allocation3], 33
        %v3906 = vld [vmem:[%s3905] ss:$2 sm:$0xff]
        %s3907 = scalar_lea.vmem [#allocation3], 49
        %v3908 = vld [vmem:[%s3907] ss:$2 sm:$0xff]
        %s3909 = scalar_lea.vmem [#allocation3], 65
        %v3910 = vld [vmem:[%s3909] ss:$2 sm:$0xff]
        %s3911 = scalar_lea.vmem [#allocation3], 81
        %v3912 = vld [vmem:[%s3911] ss:$2 sm:$0xff]
        %s3913 = scalar_lea.vmem [#allocation3], 97
        %v3914 = vld [vmem:[%s3913] ss:$2 sm:$0xff]
        %s3915 = scalar_lea.vmem [#allocation3], 113
        %v3916 = vld [vmem:[%s3915] ss:$2 sm:$0xff]
        %s3917 = scalar_lea.vmem [#allocation3], 129
        %v3918 = vld [vmem:[%s3917] ss:$2 sm:$0xff]
        %s3919 = scalar_lea.vmem [#allocation3], 145
        %v3920 = vld [vmem:[%s3919] ss:$2 sm:$0xff]
        %s3921 = scalar_lea.vmem [#allocation3], 161
        %v3922 = vld [vmem:[%s3921] ss:$2 sm:$0xff]
        %s3923 = scalar_lea.vmem [#allocation3], 177
        %v3924 = vld [vmem:[%s3923] ss:$2 sm:$0xff]
        %s3925 = scalar_lea.vmem [#allocation3], 193
        %v3926 = vld [vmem:[%s3925] ss:$2 sm:$0xff]
        %s3927 = scalar_lea.vmem [#allocation3], 209
        %v3928 = vld [vmem:[%s3927] ss:$2 sm:$0xff]
        %s3929 = scalar_lea.vmem [#allocation3], 225
        %v3930 = vld [vmem:[%s3929] ss:$2 sm:$0xff]
        %s3931 = scalar_lea.vmem [#allocation3], 241
        %v3932 = vld [vmem:[%s3931] ss:$2 sm:$0xff]
        %v3933 = vadd.f32 %v3870, %v3902
        %v3934 = vadd.f32 %v3872, %v3904
        %v3935 = vadd.f32 %v3874, %v3906
        %v3936 = vadd.f32 %v3876, %v3908
        %v3937 = vadd.f32 %v3878, %v3910
        %v3938 = vadd.f32 %v3880, %v3912
        %v3939 = vadd.f32 %v3882, %v3914
        %v3940 = vadd.f32 %v3884, %v3916
        %v3941 = vadd.f32 %v3886, %v3918
        %v3942 = vadd.f32 %v3888, %v3920
        %v3943 = vadd.f32 %v3890, %v3922
        %v3944 = vadd.f32 %v3892, %v3924
        %v3945 = vadd.f32 %v3894, %v3926
        %v3946 = vadd.f32 %v3896, %v3928
        %v3947 = vadd.f32 %v3898, %v3930
        %v3948 = vadd.f32 %v3900, %v3932
        %v3949 = vpack.c.bf16 %v3934, %v3933
        %v3950 = vpack.c.bf16 %v3936, %v3935
        %v3951 = vpack.c.bf16 %v3938, %v3937
        %v3952 = vpack.c.bf16 %v3940, %v3939
        %v3953 = vpack.c.bf16 %v3942, %v3941
        %v3954 = vpack.c.bf16 %v3944, %v3943
        %v3955 = vpack.c.bf16 %v3946, %v3945
        %v3956 = vpack.c.bf16 %v3948, %v3947
        %v3957 = vld [vmem:[%s5] sm:$0xf]
        %v3958 = vld [vmem:[%s5 + $0x4] sm:$0xf]
        %v3959 = vld [vmem:[%s5 + $0x8] sm:$0xf]
        %v3960 = vld [vmem:[%s6] sm:$0x1]
        %v3962 = vlaneseq
        %v3963 = vshrl.u32 %v3962, 7
        %v3964 = vsub.s32 0, %v3963
        %v3965 = vrot.slane %v3960, %v3964
        %v3970 = vunpack.c.l.b16 %v3957
        %v3971 = vunpack.c.l.b16 %v3958
        %v3972 = vunpack.c.l.b16 %v3959
        %v3973 = vpack.c.b16 %v3971, %v3970
        %v3974 = vpack.c.b16 %v3972, %v3972
        %v3977 = vsel %vm2231, %v3949, 0
        %v3980 = vsel %vm2231, %v3950, 0
        %v3983 = vsel %vm2231, %v3951, 0
        %v3986 = vsel %vm2231, %v3952, 0
        %v3989 = vsel %vm2231, %v3953, 0
        %v3992 = vsel %vm2231, %v3954, 0
        %v3995 = vsel %vm2231, %v3955, 0
        %v3998 = vsel %vm2231, %v3956, 0
        %v4001 = vsel %vm3001, %v3974, 0
        %4003 = vmatprep.subr.bf16.mxu0 0
        %4004 = vmatpush1.bf16.msra.mxu0 %v3973
        %4005 = vmatprep.subr.bf16.mxu0 0
        %4006 = vmatpush1.bf16.msra.mxu0 %v4001
        %4007 = vmatprep.subr.bf16.mxu0 0
        %4008 = vmatpush1.bf16.msra.mxu0 0
        %4009 = vmatprep.subr.bf16.mxu0 0
        %4010 = vmatpush1.bf16.msra.mxu0 0
        %4011 = vmatprep.subr.bf16.mxu0 0
        %4012 = vmatpush1.bf16.msra.mxu0 0
        %4013 = vmatprep.subr.bf16.mxu0 0
        %4014 = vmatpush1.bf16.msra.mxu0 0
        %4015 = vmatprep.subr.bf16.mxu0 0
        %4016 = vmatpush1.bf16.msra.mxu0 0
        %4017 = vmatprep.subr.bf16.mxu0 0
        %4018 = vmatpush1.bf16.msra.mxu0 0
        %4019 = vmatprep.subr.bf16.mxu0 0
        %4020 = vmatpush1.bf16.msra.mxu0 0
        %4021 = vmatprep.subr.bf16.mxu0 0
        %4022 = vmatpush1.bf16.msra.mxu0 0
        %4023 = vmatprep.subr.bf16.mxu0 0
        %4024 = vmatpush1.bf16.msra.mxu0 0
        %4025 = vmatprep.subr.bf16.mxu0 0
        %4026 = vmatpush1.bf16.msra.mxu0 0
        %4027 = vmatprep.subr.bf16.mxu0 0
        %4028 = vmatpush1.bf16.msra.mxu0 0
        %4029 = vmatprep.subr.bf16.mxu0 0
        %4030 = vmatpush1.bf16.msra.mxu0 0
        %4031 = vmatprep.subr.bf16.mxu0 0
        %4032 = vmatpush1.bf16.msra.mxu0 0
        %4033 = vmatprep.subr.bf16.mxu0 0
        %4034 = vmatpush1.bf16.msra.mxu0 0
        %4035 = vmatprep.mubr.bf16.mxu0 0
        %4036 = vmatmul.mubr.bf16.gmra.mrb[0].mxu0 %v3977
        %v4037 = vpop.f32.mrb[0].mxu0
        %v4038 = vadd.f32 %v3965, %v4037
        %v4039 = vpop.f32.mrb[0].mxu0
        %v4040 = vpop.f32.mrb[0].mxu0
        %v4041 = vpop.f32.mrb[0].mxu0
        %4042 = vmatprep.mubr.bf16.mxu0 0
        %4043 = vmatmul.mubr.bf16.gmra.mrb[0].mxu0 %v3980
        %v4044 = vpop.f32.mrb[0].mxu0
        %v4045 = vadd.f32 %v3965, %v4044
        %v4046 = vpop.f32.mrb[0].mxu0
        %v4047 = vpop.f32.mrb[0].mxu0
        %v4048 = vpop.f32.mrb[0].mxu0
        %4049 = vmatprep.mubr.bf16.mxu0 0
        %4050 = vmatmul.mubr.bf16.gmra.mrb[0].mxu0 %v3983
        %v4051 = vpop.f32.mrb[0].mxu0
        %v4052 = vadd.f32 %v3965, %v4051
        %v4053 = vpop.f32.mrb[0].mxu0
        %v4054 = vpop.f32.mrb[0].mxu0
        %v4055 = vpop.f32.mrb[0].mxu0
        %4056 = vmatprep.mubr.bf16.mxu0 0
        %4057 = vmatmul.mubr.bf16.gmra.mrb[0].mxu0 %v3986
        %v4058 = vpop.f32.mrb[0].mxu0
        %v4059 = vadd.f32 %v3965, %v4058
        %v4060 = vpop.f32.mrb[0].mxu0
        %v4061 = vpop.f32.mrb[0].mxu0
        %v4062 = vpop.f32.mrb[0].mxu0
        %4063 = vmatprep.mubr.bf16.mxu0 0
        %4064 = vmatmul.mubr.bf16.gmra.mrb[0].mxu0 %v3989
        %v4065 = vpop.f32.mrb[0].mxu0
        %v4066 = vadd.f32 %v3965, %v4065
        %v4067 = vpop.f32.mrb[0].mxu0
        %v4068 = vpop.f32.mrb[0].mxu0
        %v4069 = vpop.f32.mrb[0].mxu0
        %4070 = vmatprep.mubr.bf16.mxu0 0
        %4071 = vmatmul.mubr.bf16.gmra.mrb[0].mxu0 %v3992
        %v4072 = vpop.f32.mrb[0].mxu0
        %v4073 = vadd.f32 %v3965, %v4072
        %v4074 = vpop.f32.mrb[0].mxu0
        %v4075 = vpop.f32.mrb[0].mxu0
        %v4076 = vpop.f32.mrb[0].mxu0
        %4077 = vmatprep.mubr.bf16.mxu0 0
        %4078 = vmatmul.mubr.bf16.gmra.mrb[0].mxu0 %v3995
        %v4079 = vpop.f32.mrb[0].mxu0
        %v4080 = vadd.f32 %v3965, %v4079
        %v4081 = vpop.f32.mrb[0].mxu0
        %v4082 = vpop.f32.mrb[0].mxu0
        %v4083 = vpop.f32.mrb[0].mxu0
        %4084 = vmatprep.mubr.bf16.mxu0 0
        %4085 = vmatmul.mubr.bf16.gmra.mrb[0].mxu0 %v3998
        %v4086 = vpop.f32.mrb[0].mxu0
        %v4087 = vadd.f32 %v3965, %v4086
        %v4088 = vpop.f32.mrb[0].mxu0
        %v4089 = vpop.f32.mrb[0].mxu0
        %v4090 = vpop.f32.mrb[0].mxu0
        %4091 = vdwg.mxu0
        %v4092 = vmax.f32 %v4038, 0.0
        %v4093 = vmax.f32 %v4045, 0.0
        %v4094 = vmax.f32 %v4052, 0.0
        %v4095 = vmax.f32 %v4059, 0.0
        %v4096 = vmax.f32 %v4066, 0.0
        %v4097 = vmax.f32 %v4073, 0.0
        %v4098 = vmax.f32 %v4080, 0.0
        %v4099 = vmax.f32 %v4087, 0.0
        %4100 = vst.msk [vmem:[%s271] sm:$0xff] %vm2298, %v4092
        %4101 = vst.msk [vmem:[%s271 + $0x8] sm:$0xff] %vm2298, %v4093
        %4102 = vst.msk [vmem:[%s271 + $0x10] sm:$0xff] %vm2298, %v4094
        %4103 = vst.msk [vmem:[%s271 + $0x18] sm:$0xff] %vm2298, %v4095
        %4104 = vst.msk [vmem:[%s271 + $0x20] sm:$0xff] %vm2298, %v4096
        %4105 = vst.msk [vmem:[%s271 + $0x28] sm:$0xff] %vm2298, %v4097
        %4106 = vst.msk [vmem:[%s271 + $0x30] sm:$0xff] %vm2298, %v4098
        %4107 = vst.msk [vmem:[%s271 + $0x38] sm:$0xff] %vm2298, %v4099
        %s4108 = sand.u32 %s181, 1
        %s4109 = scalar_lea.sflag [#allocation5], %s4108
        %s4110 = sand.u32 %s181, 1
        %s4111 = smul.addr %s4110, 64
        %s4112 = scalar_lea.vmem [#allocation4], %s4111
        // Predicated region
        $region49: #{tpu_custom_call.1} parent=47 // pred_check
          %p4113 = pneg %p191
        $region50: #{tpu_custom_call.1} parent=47 // pred_check_branch
          %4115 = sbr.rel (%p4113) target = $region52
        $region51: #{tpu_custom_call.1} parent=47 // pred_region
          %s4117 = ssub.s32 1024, 1024
          %4118 = vsyncadd %s4109, %s4117
          %s4119 = smul.addr %s21, 8
          %s4120 = smul.addr %s4119, 128
          %s4121 = scalar_lea.hbm %s7, %s4120
          %s4122 = sshll.u32 %s4112, 4
          %s4123 = int_to_ptr.vmem [resolvable:$true] %s4122
          %4128 = dma.vmem_to_hbm [thread:$0]  %s4123, 1024, %s4121, %s4109, 128, 128, 8
        $region52: #{tpu_custom_call.1} parent=47 // pred_fallthru
          _
      $region48: #{tpu_custom_call.1} parent=5 // pred_fallthru
        _
      %p4129 = scmp.le.s32.totalorder 2, %s16
      // Predicated region
      $region53: #{tpu_custom_call.1} parent=5 // pred_check
        %p4130 = pneg %p4129
      $region54: #{tpu_custom_call.1} parent=5 // pred_check_branch
        %4132 = sbr.rel (%p4130) target = $region56
      $region55: #{tpu_custom_call.1} parent=5 // pred_region
        %s4133 = ssub.s32 %s16, 2
        // Predicated region
        $region57: #{tpu_custom_call.1} parent=55 // pred_check
          %p4134 = pneg %p197
        $region58: #{tpu_custom_call.1} parent=55 // pred_check_branch
          %4136 = sbr.rel (%p4134) target = $region60
        $region59: #{tpu_custom_call.1} parent=55 // pred_region
          %s4137 = sand.u32 %s182, 1
          %s4138 = scalar_lea.sflag [#allocation5], %s4137
          %s4139 = sand.u32 %s182, 1
          %s4140 = smul.addr %s4139, 64
          %s4141 = scalar_lea.vmem [#allocation4], %s4140
          %4142 = dma.done %s4138, 1024
        $region60: #{tpu_custom_call.1} parent=55 // pred_fallthru
          _
      $region56: #{tpu_custom_call.1} parent=5 // pred_fallthru
        _
    $region6: #{tpu_custom_call.1} parent=1 // loop_footer
      %s20 = sadd.s32 1, %s16
    $region7: #{tpu_custom_call.1} parent=1 // loop_footer_branch
      %15 = sbr.rel target = $region3
    $region8: #{tpu_custom_call.1} parent=1 // loop_exit
      _
    %4143 = vsyncpa [#allocation5], 1
    %s4144 = scalar_lea.sflag [#allocation5], 1
    %4145 = vsyncpa %s4144, 1

</llo_original>
